<compile_context>
chip_gen: v6e
topology: v6e:2x2x1
jax: 0.10.0
libtpu: 0.0.40
codegen_flags: <defaults>
</compile_context>

<pallas_src>
import jax
import jax.numpy as jnp
from jax import lax
from jax.experimental import pallas as pl
from jax.experimental.pallas import tpu as pltpu


# ----------------------------------------------------------------------------
# Fixed architecture geometry (stride-2 convs, MaxPool1d(8,8) after conv1/2).
# ----------------------------------------------------------------------------

def _geom(lin, k, pool):
    """Geometry of conv(kernel=k, stride=2) [+ MaxPool1d(pool, pool)]."""
    lconv = (lin - k) // 2 + 1             # conv output length
    lout = (lconv - pool) // pool + 1      # pooled output length (pool=1 -> lconv)
    v = 2 * pool                           # "superstride" = conv stride * pool
    ns = -(-(2 * (pool - 1) + k) // v)     # shifted copies of the phase-split input
    mph = lout + ns - 1                    # required phase-split length
    return lconv, lout, v, ns, mph


_L_IN = 15390                               # length implied by nn.Linear(128*8, 128)
_, _L1, _V1, _NS1, _M1 = _geom(_L_IN, 64, 8)   # 958, 16, 5, 962
_, _L2, _V2, _NS2, _M2 = _geom(_L1, 32, 8)     # 58, 16, 3, 60
_, _L3, _V3, _NS3, _M3 = _geom(_L2, 16, 1)     # 22, 2, 8, 29
_, _L4, _V4, _NS4, _M4 = _geom(_L3, 8, 1)      # 8, 2, 4, 11


# ----------------------------------------------------------------------------
# Wrapper-side (XLA) layout prep: 1x-traffic phase split + weight stacking.
# ----------------------------------------------------------------------------

def _phase_split(x, v, mph, out_dtype):
    """(B, C, L) -> (B, V*C, Mph) with out[b, u*C + c, m] = x[b, c, V*m + u]."""
    b, c, l = x.shape
    xp = jnp.pad(x, ((0, 0), (0, 0), (0, v * mph - l)))
    xp = xp.reshape(b, c, mph, v)
    xp = jnp.transpose(xp, (0, 3, 1, 2))            # (B, V, C, Mph)
    return xp.reshape(b, v * c, mph).astype(out_dtype)


def _stack_weights(w, pool, rpad, out_dtype):
    """(Co, Ci, K) -> (pool*Co, rpad*Ci), row t*Co+co / col (2t+k)*Ci+ci = w[co,ci,k]."""
    co, ci, k = w.shape
    wm = jnp.transpose(w, (0, 2, 1)).reshape(co, k * ci)     # [co, k*Ci + ci]
    blocks = []
    for t in range(pool):
        left = 2 * t * ci
        right = rpad * ci - left - k * ci
        blocks.append(jnp.pad(wm, ((0, 0), (left, right))))
    return jnp.concatenate(blocks, axis=0).astype(out_dtype)


# ----------------------------------------------------------------------------
# In-kernel building blocks.
# ----------------------------------------------------------------------------

def _conv_block(xph, wstk, bias, *, pool, ns, lout, co):
    """Fused conv(stride=2)+maxpool(pool,pool) on phase-split input.

    xph:  (V*Ci, Mph)  phase-split activations (V = 2*pool)
    wstk: (pool*Co, ns*V*Ci) bf16 stacked weights
    bias: (Co, 1) f32
    Returns (Co, lout) f32 with the length axis lane-dense.
    """
    # Patch matrix R[(s*V + v)*Ci + ci, p] = X[ci, V*p + (s*V + v)]
    r = jnp.concatenate([xph[:, s:s + lout] for s in range(ns)], axis=0)
    pm = jnp.dot(wstk, r.astype(wstk.dtype), preferred_element_type=jnp.float32)
    out = pm[0:co, :]
    for t in range(1, pool):                       # maxpool = max over aligned row blocks
        out = jnp.maximum(out, pm[t * co:(t + 1) * co, :])
    return out + bias


def _even_odd_split(x):
    """(C, L) -> (2*C, L//2): rows [0:C] = x[:, 0::2], rows [C:2C] = x[:, 1::2].

    Implemented with two tiny selection matmuls (robust lowering, no strided
    lane access / lane-dim reshape needed)."""
    c, l = x.shape
    m = l // 2
    row = lax.broadcasted_iota(jnp.int32, (l, m), 0)
    col = lax.broadcasted_iota(jnp.int32, (l, m), 1)
    sel_e = (row == 2 * col).astype(x.dtype)
    sel_o = (row == 2 * col + 1).astype(x.dtype)
    xe = jnp.dot(x, sel_e, preferred_element_type=jnp.float32)
    xo = jnp.dot(x, sel_o, preferred_element_type=jnp.float32)
    return jnp.concatenate([xe, xo], axis=0)


# ----------------------------------------------------------------------------
# Pallas kernels.
# ----------------------------------------------------------------------------

def _stage1_kernel(xph_ref, w_ref, b_ref, o_ref):
    # conv1 (1->16, K=64, s=2) fused with MaxPool1d(8, 8); one MXU matmul.
    o_ref[0] = _conv_block(xph_ref[0], w_ref[...], b_ref[...],
                           pool=8, ns=_NS1, lout=_L1, co=16)


def _stage2_kernel(xph_ref, w2_ref, b2_ref, w3_ref, b3_ref, w4_ref, b4_ref,
                   fc1w_ref, fc1b_ref, fc2w_ref, fc2b_ref, o_ref):
    # conv2 (16->32, K=32, s=2) + MaxPool1d(8, 8)
    p2 = _conv_block(xph_ref[0], w2_ref[...], b2_ref[...],
                     pool=8, ns=_NS2, lout=_L2, co=32)          # (32, 58)
    # conv3 (32->64, K=16, s=2)
    c3 = _conv_block(_even_odd_split(p2), w3_ref[...], b3_ref[...],
                     pool=1, ns=_NS3, lout=_L3, co=64)          # (64, 22)
    # conv4 (64->128, K=8, s=2)
    c4 = _conv_block(_even_odd_split(c3), w4_ref[...], b4_ref[...],
                     pool=1, ns=_NS4, lout=_L4, co=128)         # (128, 8)
    # fc1: channel-major flatten of (128, 8) contracted with Linear(1024, 128)
    c4b = c4.astype(jnp.bfloat16)
    acc = fc1b_ref[...]                                         # (128, 1) f32
    for pos in range(_L4):
        acc = acc + jnp.dot(fc1w_ref[pos], c4b[:, pos:pos + 1],
                            preferred_element_type=jnp.float32)
    # fc2 + softmax over the 64 classes (class axis = rows)
    logits = jnp.dot(fc2w_ref[...], acc.astype(jnp.bfloat16),
                     preferred_element_type=jnp.float32) + fc2b_ref[...]
    mx = jnp.max(logits, axis=0, keepdims=True)
    e = jnp.exp(logits - mx)
    o_ref[0] = e / jnp.sum(e, axis=0, keepdims=True)


# ----------------------------------------------------------------------------
# Forward pass (2 pallas_calls, gridded over batch).
# ----------------------------------------------------------------------------

@jax.jit
def cnn1d_forward(params, x):
    b = x.shape[0]
    f32, bf16 = jnp.float32, jnp.bfloat16

    # ---- stage 1: conv1 + maxpool1 ----
    xph1 = _phase_split(x, _V1, _M1, bf16)                           # (B, 16, 962)
    w1s = _stack_weights(params["conv1_w"], 8, _NS1 * _V1, bf16)     # (128, 80)
    b1 = params["conv1_b"].reshape(16, 1).astype(f32)

    pooled1 = pl.pallas_call(
        _stage1_kernel,
        out_shape=jax.ShapeDtypeStruct((b, 16, _L1), f32),
        grid=(b,),
        in_specs=[
            pl.BlockSpec((1, 16, _M1), lambda i: (i, 0, 0)),
            pl.BlockSpec((8 * 16, _NS1 * _V1), lambda i: (0, 0)),
            pl.BlockSpec((16, 1), lambda i: (0, 0)),
        ],
        out_specs=pl.BlockSpec((1, 16, _L1), lambda i: (i, 0, 0)),
        compiler_params=pltpu.CompilerParams(
            dimension_semantics=("parallel",)),
    )(xph1, w1s, b1)                                                 # (B, 16, 958)

    # ---- stage 2: conv2+pool2, conv3, conv4, fc1, fc2, softmax ----
    xph2 = _phase_split(pooled1, _V2, _M2, bf16)                     # (B, 256, 60)
    w2s = _stack_weights(params["conv2_w"], 8, _NS2 * _V2, bf16)     # (256, 768)
    w3s = _stack_weights(params["conv3_w"], 1, _NS3 * _V3, bf16)     # (64, 512)
    w4s = _stack_weights(params["conv4_w"], 1, _NS4 * _V4, bf16)     # (128, 512)
    b2 = params["conv2_b"].reshape(32, 1).astype(f32)
    b3 = params["conv3_b"].reshape(64, 1).astype(f32)
    b4 = params["conv4_b"].reshape(128, 1).astype(f32)
    # fc1 weight regrouped per conv4 output position: [pos, out, channel]
    fc1w = jnp.transpose(params["fc1_w"].reshape(128, 128, _L4), (2, 0, 1)).astype(bf16)
    fc1b = params["fc1_b"].reshape(128, 1).astype(f32)
    fc2w = params["fc2_w"].astype(bf16)                              # (64, 128)
    fc2b = params["fc2_b"].reshape(64, 1).astype(f32)

    probs = pl.pallas_call(
        _stage2_kernel,
        out_shape=jax.ShapeDtypeStruct((b, 64, 1), f32),
        grid=(b,),
        in_specs=[
            pl.BlockSpec((1, _V2 * 16, _M2), lambda i: (i, 0, 0)),
            pl.BlockSpec((8 * 32, _NS2 * _V2 * 16), lambda i: (0, 0)),
            pl.BlockSpec((32, 1), lambda i: (0, 0)),
            pl.BlockSpec((64, _NS3 * _V3 * 32), lambda i: (0, 0)),
            pl.BlockSpec((64, 1), lambda i: (0, 0)),
            pl.BlockSpec((128, _NS4 * _V4 * 64), lambda i: (0, 0)),
            pl.BlockSpec((128, 1), lambda i: (0, 0)),
            pl.BlockSpec((_L4, 128, 128), lambda i: (0, 0, 0)),
            pl.BlockSpec((128, 1), lambda i: (0, 0)),
            pl.BlockSpec((64, 128), lambda i: (0, 0)),
            pl.BlockSpec((64, 1), lambda i: (0, 0)),
        ],
        out_specs=pl.BlockSpec((1, 64, 1), lambda i: (i, 0, 0)),
        compiler_params=pltpu.CompilerParams(
            dimension_semantics=("parallel",)),
    )(xph2, w2s, b2, w3s, b3, w4s, b4, fc1w, fc1b, fc2w, fc2b)

    return probs.reshape(b, 64)


# ----------------------------------------------------------------------------
# Parameter init (PyTorch default U(-1/sqrt(fan_in), 1/sqrt(fan_in))).
# ----------------------------------------------------------------------------

def _uniform(key, shape, fan_in):
    bound = 1.0 / jnp.sqrt(jnp.float32(fan_in))
    return jax.random.uniform(key, shape, jnp.float32, -bound, bound)


def init_params(key):
    keys = jax.random.split(key, 12)
    p = {}
    conv_defs = [("conv1", 1, 16, 64), ("conv2", 16, 32, 32),
                 ("conv3", 32, 64, 16), ("conv4", 64, 128, 8)]
    for i, (name, ci, co, k) in enumerate(conv_defs):
        p[name + "_w"] = _uniform(keys[2 * i], (co, ci, k), ci * k)
        p[name + "_b"] = _uniform(keys[2 * i + 1], (co,), ci * k)
    p["fc1_w"] = _uniform(keys[8], (128, 128 * 8), 128 * 8)
    p["fc1_b"] = _uniform(keys[9], (128,), 128 * 8)
    p["fc2_w"] = _uniform(keys[10], (64, 128), 128)
    p["fc2_b"] = _uniform(keys[11], (64,), 128)
    return p


# ----------------------------------------------------------------------------
# Pure-XLA reference (for a numerical self-check against the Pallas path).
# ----------------------------------------------------------------------------

def _reference_forward(params, x):
    def conv(x, w, b, stride):
        y = lax.conv_general_dilated(
            x, w, window_strides=(stride,), padding="VALID",
            dimension_numbers=("NCW", "OIW", "NCW"))
        return y + b[None, :, None]

    def pool(x, k, s):
        return lax.reduce_window(x, -jnp.inf, lax.max, (1, 1, k), (1, 1, s), "VALID")

    x = conv(x, params["conv1_w"], params["conv1_b"], 2)
    x = pool(x, 8, 8)
    x = conv(x, params["conv2_w"], params["conv2_b"], 2)
    x = pool(x, 8, 8)
    x = conv(x, params["conv3_w"], params["conv3_b"], 2)
    x = conv(x, params["conv4_w"], params["conv4_b"], 2)
    x = x.reshape(x.shape[0], -1)
    x = x @ params["fc1_w"].T + params["fc1_b"]
    x = x @ params["fc2_w"].T + params["fc2_b"]
    return jax.nn.softmax(x, axis=-1)


if __name__ == "__main__":
    key = jax.random.PRNGKey(0)
    pkey, xkey = jax.random.split(key)
    params = init_params(pkey)
    # Input length 15390 is the length implied by Linear(128*8, .):
    # 15390 -conv(64,s2)-> 7664 -pool(8,8)-> 958 -conv(32,s2)-> 464
    #       -pool(8,8)->  58  -conv(16,s2)-> 22 -conv(8,s2)-> 8 ; 128*8 = 1024
    x = jax.random.normal(xkey, (2, 1, _L_IN), dtype=jnp.float32)

    out = jax.block_until_ready(cnn1d_forward(params, x))
    assert out.shape == (2, 64), out.shape
    row_sums = jnp.sum(out, axis=-1)
    assert bool(jnp.all(jnp.abs(row_sums - 1.0) < 1e-4)), row_sums

    ref = jax.block_until_ready(jax.jit(_reference_forward)(params, x))
    max_err = float(jnp.max(jnp.abs(out - ref)))
    assert max_err < 3e-3, f"max |pallas - reference| = {max_err}"

    print("KERNEL_OK")
</pallas_src>

<mosaic_0001>
module attributes {stable_mosaic.version = 11 : i64} {
  func.func @_stage1_kernel(%arg0: i32, %arg1: memref<1x16x962xbf16, #tpu.memory_space<vmem>>, %arg2: memref<128x80xbf16, #tpu.memory_space<vmem>>, %arg3: memref<16x1xf32, #tpu.memory_space<vmem>>, %arg4: memref<1x16x958xf32, #tpu.memory_space<vmem>>) attributes {dimension_semantics = [#tpu.dimension_semantics<parallel>], iteration_bounds = array<i64: 2>, scalar_prefetch = 0 : i64, scratch_operands = 0 : i64, tpu.core_type = #tpu.core_type<tc>, window_params = [{transform_indices = @transform_0, window_bounds = array<i64: 1, 16, 962>}, {pipeline_mode = #tpu.pipeline_mode<synchronous>, transform_indices = @transform_1, window_bounds = array<i64: 128, 80>}, {pipeline_mode = #tpu.pipeline_mode<synchronous>, transform_indices = @transform_2, window_bounds = array<i64: 16, 1>}, {transform_indices = @transform_3, window_bounds = array<i64: 1, 16, 958>}]} {
    %c0 = arith.constant 0 : index
    %c0_0 = arith.constant 0 : index
    %c0_1 = arith.constant 0 : index
    %0 = vector.load %arg1[%c0, %c0_0, %c0_1] : memref<1x16x962xbf16, #tpu.memory_space<vmem>>, vector<1x16x962xbf16>
    %1 = vector.shape_cast %0 : vector<1x16x962xbf16> to vector<16x962xbf16>
    %c0_2 = arith.constant 0 : index
    %c0_3 = arith.constant 0 : index
    %2 = vector.load %arg2[%c0_2, %c0_3] : memref<128x80xbf16, #tpu.memory_space<vmem>>, vector<128x80xbf16>
    %c0_4 = arith.constant 0 : index
    %c0_5 = arith.constant 0 : index
    %3 = vector.load %arg3[%c0_4, %c0_5] : memref<16x1xf32, #tpu.memory_space<vmem>>, vector<16x1xf32>
    %4 = vector.extract_strided_slice %1 {offsets = [0, 0], sizes = [16, 958], strides = [1, 1]} : vector<16x962xbf16> to vector<16x958xbf16>
    %5 = vector.extract_strided_slice %1 {offsets = [0, 1], sizes = [16, 958], strides = [1, 1]} : vector<16x962xbf16> to vector<16x958xbf16>
    %6 = vector.extract_strided_slice %1 {offsets = [0, 2], sizes = [16, 958], strides = [1, 1]} : vector<16x962xbf16> to vector<16x958xbf16>
    %7 = vector.extract_strided_slice %1 {offsets = [0, 3], sizes = [16, 958], strides = [1, 1]} : vector<16x962xbf16> to vector<16x958xbf16>
    %8 = vector.extract_strided_slice %1 {offsets = [0, 4], sizes = [16, 958], strides = [1, 1]} : vector<16x962xbf16> to vector<16x958xbf16>
    %9 = tpu.concatenate %4, %5, %6, %7, %8 in 0 : vector<16x958xbf16>, vector<16x958xbf16>, vector<16x958xbf16>, vector<16x958xbf16>, vector<16x958xbf16> -> vector<80x958xbf16>
    %cst = arith.constant dense<0.000000e+00> : vector<128x958xf32>
    %10 = tpu.matmul %2, %9, %cst {dimension_numbers = #tpu.dot_dimension_numbers<[1], [0], [0], [1], [0, 0, 1, 1], [], []>} : vector<128x80xbf16>, vector<80x958xbf16>, vector<128x958xf32> -> vector<128x958xf32>
    %11 = vector.extract_strided_slice %10 {offsets = [0, 0], sizes = [16, 958], strides = [1, 1]} : vector<128x958xf32> to vector<16x958xf32>
    %12 = vector.extract_strided_slice %10 {offsets = [16, 0], sizes = [16, 958], strides = [1, 1]} : vector<128x958xf32> to vector<16x958xf32>
    %13 = arith.maximumf %11, %12 : vector<16x958xf32>
    %14 = vector.extract_strided_slice %10 {offsets = [32, 0], sizes = [16, 958], strides = [1, 1]} : vector<128x958xf32> to vector<16x958xf32>
    %15 = arith.maximumf %13, %14 : vector<16x958xf32>
    %16 = vector.extract_strided_slice %10 {offsets = [48, 0], sizes = [16, 958], strides = [1, 1]} : vector<128x958xf32> to vector<16x958xf32>
    %17 = arith.maximumf %15, %16 : vector<16x958xf32>
    %18 = vector.extract_strided_slice %10 {offsets = [64, 0], sizes = [16, 958], strides = [1, 1]} : vector<128x958xf32> to vector<16x958xf32>
    %19 = arith.maximumf %17, %18 : vector<16x958xf32>
    %20 = vector.extract_strided_slice %10 {offsets = [80, 0], sizes = [16, 958], strides = [1, 1]} : vector<128x958xf32> to vector<16x958xf32>
    %21 = arith.maximumf %19, %20 : vector<16x958xf32>
    %22 = vector.extract_strided_slice %10 {offsets = [96, 0], sizes = [16, 958], strides = [1, 1]} : vector<128x958xf32> to vector<16x958xf32>
    %23 = arith.maximumf %21, %22 : vector<16x958xf32>
    %24 = vector.extract_strided_slice %10 {offsets = [112, 0], sizes = [16, 958], strides = [1, 1]} : vector<128x958xf32> to vector<16x958xf32>
    %25 = arith.maximumf %23, %24 : vector<16x958xf32>
    %26 = vector.broadcast %3 : vector<16x1xf32> to vector<16x958xf32>
    %27 = arith.addf %25, %26 : vector<16x958xf32>
    %c0_6 = arith.constant 0 : index
    %c0_7 = arith.constant 0 : index
    %c0_8 = arith.constant 0 : index
    %28 = vector.load %arg4[%c0_6, %c0_7, %c0_8] : memref<1x16x958xf32, #tpu.memory_space<vmem>>, vector<1x16x958xf32>
    %29 = vector.shape_cast %28 : vector<1x16x958xf32> to vector<16x958xf32>
    %30 = vector.shape_cast %27 : vector<16x958xf32> to vector<1x16x958xf32>
    tpu.vector_store %arg4[%c0_6, %c0_7, %c0_8], %30 {strides = array<i32>} : memref<1x16x958xf32, #tpu.memory_space<vmem>>, vector<1x16x958xf32>,
    return
  }
  func.func @transform_0(%arg0: i32) -> (i32, i32, i32) {
    %c0_i32 = arith.constant 0 : i32
    %c0_i32_0 = arith.constant 0 : i32
    %c0_i32_1 = arith.constant 0 : i32
    return %arg0, %c0_i32, %c0_i32_0 : i32, i32, i32
  }
  func.func @transform_1(%arg0: i32) -> (i32, i32) {
    %c0_i32 = arith.constant 0 : i32
    %c0_i32_0 = arith.constant 0 : i32
    %c0_i32_1 = arith.constant 0 : i32
    return %c0_i32, %c0_i32_0 : i32, i32
  }
  func.func @transform_2(%arg0: i32) -> (i32, i32) {
    %c0_i32 = arith.constant 0 : i32
    %c0_i32_0 = arith.constant 0 : i32
    %c0_i32_1 = arith.constant 0 : i32
    return %c0_i32, %c0_i32_0 : i32, i32
  }
  func.func @transform_3(%arg0: i32) -> (i32, i32, i32) {
    %c0_i32 = arith.constant 0 : i32
    %c0_i32_0 = arith.constant 0 : i32
    %c0_i32_1 = arith.constant 0 : i32
    return %arg0, %c0_i32, %c0_i32_0 : i32, i32, i32
  }
}

module attributes {stable_mosaic.version = 11 : i64} {
  func.func @_stage2_kernel(%arg0: i32, %arg1: memref<1x256x60xbf16, #tpu.memory_space<vmem>>, %arg2: memref<256x768xbf16, #tpu.memory_space<vmem>>, %arg3: memref<32x1xf32, #tpu.memory_space<vmem>>, %arg4: memref<64x512xbf16, #tpu.memory_space<vmem>>, %arg5: memref<64x1xf32, #tpu.memory_space<vmem>>, %arg6: memref<128x512xbf16, #tpu.memory_space<vmem>>, %arg7: memref<128x1xf32, #tpu.memory_space<vmem>>, %arg8: memref<8x128x128xbf16, #tpu.memory_space<vmem>>, %arg9: memref<128x1xf32, #tpu.memory_space<vmem>>, %arg10: memref<64x128xbf16, #tpu.memory_space<vmem>>, %arg11: memref<64x1xf32, #tpu.memory_space<vmem>>, %arg12: memref<1x64x1xf32, #tpu.memory_space<vmem>>) attributes {dimension_semantics = [#tpu.dimension_semantics<parallel>], iteration_bounds = array<i64: 2>, scalar_prefetch = 0 : i64, scratch_operands = 0 : i64, tpu.core_type = #tpu.core_type<tc>, window_params = [{transform_indices = @transform_0, window_bounds = array<i64: 1, 256, 60>}, {pipeline_mode = #tpu.pipeline_mode<synchronous>, transform_indices = @transform_1, window_bounds = array<i64: 256, 768>}, {pipeline_mode = #tpu.pipeline_mode<synchronous>, transform_indices = @transform_2, window_bounds = array<i64: 32, 1>}, {pipeline_mode = #tpu.pipeline_mode<synchronous>, transform_indices = @transform_3, window_bounds = array<i64: 64, 512>}, {pipeline_mode = #tpu.pipeline_mode<synchronous>, transform_indices = @transform_4, window_bounds = array<i64: 64, 1>}, {pipeline_mode = #tpu.pipeline_mode<synchronous>, transform_indices = @transform_5, window_bounds = array<i64: 128, 512>}, {pipeline_mode = #tpu.pipeline_mode<synchronous>, transform_indices = @transform_6, window_bounds = array<i64: 128, 1>}, {pipeline_mode = #tpu.pipeline_mode<synchronous>, transform_indices = @transform_7, window_bounds = array<i64: 8, 128, 128>}, {pipeline_mode = #tpu.pipeline_mode<synchronous>, transform_indices = @transform_8, window_bounds = array<i64: 128, 1>}, {pipeline_mode = #tpu.pipeline_mode<synchronous>, transform_indices = @transform_9, window_bounds = array<i64: 64, 128>}, {pipeline_mode = #tpu.pipeline_mode<synchronous>, transform_indices = @transform_10, window_bounds = array<i64: 64, 1>}, {transform_indices = @transform_11, window_bounds = array<i64: 1, 64, 1>}]} {
    %c0 = arith.constant 0 : index
    %c0_0 = arith.constant 0 : index
    %c0_1 = arith.constant 0 : index
    %0 = vector.load %arg1[%c0, %c0_0, %c0_1] : memref<1x256x60xbf16, #tpu.memory_space<vmem>>, vector<1x256x60xbf16>
    %1 = vector.shape_cast %0 : vector<1x256x60xbf16> to vector<256x60xbf16>
    %c0_2 = arith.constant 0 : index
    %c0_3 = arith.constant 0 : index
    %2 = vector.load %arg2[%c0_2, %c0_3] : memref<256x768xbf16, #tpu.memory_space<vmem>>, vector<256x768xbf16>
    %c0_4 = arith.constant 0 : index
    %c0_5 = arith.constant 0 : index
    %3 = vector.load %arg3[%c0_4, %c0_5] : memref<32x1xf32, #tpu.memory_space<vmem>>, vector<32x1xf32>
    %4 = vector.extract_strided_slice %1 {offsets = [0, 0], sizes = [256, 58], strides = [1, 1]} : vector<256x60xbf16> to vector<256x58xbf16>
    %5 = vector.extract_strided_slice %1 {offsets = [0, 1], sizes = [256, 58], strides = [1, 1]} : vector<256x60xbf16> to vector<256x58xbf16>
    %6 = vector.extract_strided_slice %1 {offsets = [0, 2], sizes = [256, 58], strides = [1, 1]} : vector<256x60xbf16> to vector<256x58xbf16>
    %7 = tpu.concatenate %4, %5, %6 in 0 : vector<256x58xbf16>, vector<256x58xbf16>, vector<256x58xbf16> -> vector<768x58xbf16>
    %cst = arith.constant dense<0.000000e+00> : vector<256x58xf32>
    %8 = tpu.matmul %2, %7, %cst {dimension_numbers = #tpu.dot_dimension_numbers<[1], [0], [0], [1], [0, 0, 1, 1], [], []>} : vector<256x768xbf16>, vector<768x58xbf16>, vector<256x58xf32> -> vector<256x58xf32>
    %9 = vector.extract_strided_slice %8 {offsets = [0, 0], sizes = [32, 58], strides = [1, 1]} : vector<256x58xf32> to vector<32x58xf32>
    %10 = vector.extract_strided_slice %8 {offsets = [32, 0], sizes = [32, 58], strides = [1, 1]} : vector<256x58xf32> to vector<32x58xf32>
    %11 = arith.maximumf %9, %10 : vector<32x58xf32>
    %12 = vector.extract_strided_slice %8 {offsets = [64, 0], sizes = [32, 58], strides = [1, 1]} : vector<256x58xf32> to vector<32x58xf32>
    %13 = arith.maximumf %11, %12 : vector<32x58xf32>
    %14 = vector.extract_strided_slice %8 {offsets = [96, 0], sizes = [32, 58], strides = [1, 1]} : vector<256x58xf32> to vector<32x58xf32>
    %15 = arith.maximumf %13, %14 : vector<32x58xf32>
    %16 = vector.extract_strided_slice %8 {offsets = [128, 0], sizes = [32, 58], strides = [1, 1]} : vector<256x58xf32> to vector<32x58xf32>
    %17 = arith.maximumf %15, %16 : vector<32x58xf32>
    %18 = vector.extract_strided_slice %8 {offsets = [160, 0], sizes = [32, 58], strides = [1, 1]} : vector<256x58xf32> to vector<32x58xf32>
    %19 = arith.maximumf %17, %18 : vector<32x58xf32>
    %20 = vector.extract_strided_slice %8 {offsets = [192, 0], sizes = [32, 58], strides = [1, 1]} : vector<256x58xf32> to vector<32x58xf32>
    %21 = arith.maximumf %19, %20 : vector<32x58xf32>
    %22 = vector.extract_strided_slice %8 {offsets = [224, 0], sizes = [32, 58], strides = [1, 1]} : vector<256x58xf32> to vector<32x58xf32>
    %23 = arith.maximumf %21, %22 : vector<32x58xf32>
    %24 = vector.broadcast %3 : vector<32x1xf32> to vector<32x58xf32>
    %25 = arith.addf %23, %24 : vector<32x58xf32>
    %26 = tpu.iota {dimensions = array<i32: 0>} : vector<58x29xi32>
    %27 = tpu.iota {dimensions = array<i32: 1>} : vector<58x29xi32>
    %c2_i32 = arith.constant 2 : i32
    %28 = vector.broadcast %c2_i32 : i32 to vector<58x29xi32>
    %29 = arith.muli %28, %27 : vector<58x29xi32>
    %30 = arith.cmpi eq, %26, %29 : vector<58x29xi32>
    %31 = arith.extui %30 : vector<58x29xi1> to vector<58x29xi32>
    %32 = arith.sitofp %31 : vector<58x29xi32> to vector<58x29xf32>
    %c2_i32_6 = arith.constant 2 : i32
    %33 = vector.broadcast %c2_i32_6 : i32 to vector<58x29xi32>
    %34 = arith.muli %33, %27 : vector<58x29xi32>
    %c1_i32 = arith.constant 1 : i32
    %35 = vector.broadcast %c1_i32 : i32 to vector<58x29xi32>
    %36 = arith.addi %34, %35 : vector<58x29xi32>
    %37 = arith.cmpi eq, %26, %36 : vector<58x29xi32>
    %38 = arith.extui %37 : vector<58x29xi1> to vector<58x29xi32>
    %39 = arith.sitofp %38 : vector<58x29xi32> to vector<58x29xf32>
    %cst_7 = arith.constant dense<0.000000e+00> : vector<32x29xf32>
    %40 = tpu.matmul %25, %32, %cst_7 {dimension_numbers = #tpu.dot_dimension_numbers<[1], [0], [0], [1], [0, 0, 1, 1], [], []>} : vector<32x58xf32>, vector<58x29xf32>, vector<32x29xf32> -> vector<32x29xf32>
    %cst_8 = arith.constant dense<0.000000e+00> : vector<32x29xf32>
    %41 = tpu.matmul %25, %39, %cst_8 {dimension_numbers = #tpu.dot_dimension_numbers<[1], [0], [0], [1], [0, 0, 1, 1], [], []>} : vector<32x58xf32>, vector<58x29xf32>, vector<32x29xf32> -> vector<32x29xf32>
    %42 = tpu.concatenate %40, %41 in 0 : vector<32x29xf32>, vector<32x29xf32> -> vector<64x29xf32>
    %c0_9 = arith.constant 0 : index
    %c0_10 = arith.constant 0 : index
    %43 = vector.load %arg4[%c0_9, %c0_10] : memref<64x512xbf16, #tpu.memory_space<vmem>>, vector<64x512xbf16>
    %c0_11 = arith.constant 0 : index
    %c0_12 = arith.constant 0 : index
    %44 = vector.load %arg5[%c0_11, %c0_12] : memref<64x1xf32, #tpu.memory_space<vmem>>, vector<64x1xf32>
    %45 = vector.extract_strided_slice %42 {offsets = [0, 0], sizes = [64, 22], strides = [1, 1]} : vector<64x29xf32> to vector<64x22xf32>
    %46 = vector.extract_strided_slice %42 {offsets = [0, 1], sizes = [64, 22], strides = [1, 1]} : vector<64x29xf32> to vector<64x22xf32>
    %47 = vector.extract_strided_slice %42 {offsets = [0, 2], sizes = [64, 22], strides = [1, 1]} : vector<64x29xf32> to vector<64x22xf32>
    %48 = vector.extract_strided_slice %42 {offsets = [0, 3], sizes = [64, 22], strides = [1, 1]} : vector<64x29xf32> to vector<64x22xf32>
    %49 = vector.extract_strided_slice %42 {offsets = [0, 4], sizes = [64, 22], strides = [1, 1]} : vector<64x29xf32> to vector<64x22xf32>
    %50 = vector.extract_strided_slice %42 {offsets = [0, 5], sizes = [64, 22], strides = [1, 1]} : vector<64x29xf32> to vector<64x22xf32>
    %51 = vector.extract_strided_slice %42 {offsets = [0, 6], sizes = [64, 22], strides = [1, 1]} : vector<64x29xf32> to vector<64x22xf32>
    %52 = vector.extract_strided_slice %42 {offsets = [0, 7], sizes = [64, 22], strides = [1, 1]} : vector<64x29xf32> to vector<64x22xf32>
    %53 = tpu.concatenate %45, %46, %47, %48, %49, %50, %51, %52 in 0 : vector<64x22xf32>, vector<64x22xf32>, vector<64x22xf32>, vector<64x22xf32>, vector<64x22xf32>, vector<64x22xf32>, vector<64x22xf32>, vector<64x22xf32> -> vector<512x22xf32>
    %54 = arith.truncf %53 : vector<512x22xf32> to vector<512x22xbf16>
    %cst_13 = arith.constant dense<0.000000e+00> : vector<64x22xf32>
    %55 = tpu.matmul %43, %54, %cst_13 {dimension_numbers = #tpu.dot_dimension_numbers<[1], [0], [0], [1], [0, 0, 1, 1], [], []>} : vector<64x512xbf16>, vector<512x22xbf16>, vector<64x22xf32> -> vector<64x22xf32>
    %56 = vector.broadcast %44 : vector<64x1xf32> to vector<64x22xf32>
    %57 = arith.addf %55, %56 : vector<64x22xf32>
    %58 = tpu.iota {dimensions = array<i32: 0>} : vector<22x11xi32>
    %59 = tpu.iota {dimensions = array<i32: 1>} : vector<22x11xi32>
    %c2_i32_14 = arith.constant 2 : i32
    %60 = vector.broadcast %c2_i32_14 : i32 to vector<22x11xi32>
    %61 = arith.muli %60, %59 : vector<22x11xi32>
    %62 = arith.cmpi eq, %58, %61 : vector<22x11xi32>
    %63 = arith.extui %62 : vector<22x11xi1> to vector<22x11xi32>
    %64 = arith.sitofp %63 : vector<22x11xi32> to vector<22x11xf32>
    %c2_i32_15 = arith.constant 2 : i32
    %65 = vector.broadcast %c2_i32_15 : i32 to vector<22x11xi32>
    %66 = arith.muli %65, %59 : vector<22x11xi32>
    %c1_i32_16 = arith.constant 1 : i32
    %67 = vector.broadcast %c1_i32_16 : i32 to vector<22x11xi32>
    %68 = arith.addi %66, %67 : vector<22x11xi32>
    %69 = arith.cmpi eq, %58, %68 : vector<22x11xi32>
    %70 = arith.extui %69 : vector<22x11xi1> to vector<22x11xi32>
    %71 = arith.sitofp %70 : vector<22x11xi32> to vector<22x11xf32>
    %cst_17 = arith.constant dense<0.000000e+00> : vector<64x11xf32>
    %72 = tpu.matmul %57, %64, %cst_17 {dimension_numbers = #tpu.dot_dimension_numbers<[1], [0], [0], [1], [0, 0, 1, 1], [], []>} : vector<64x22xf32>, vector<22x11xf32>, vector<64x11xf32> -> vector<64x11xf32>
    %cst_18 = arith.constant dense<0.000000e+00> : vector<64x11xf32>
    %73 = tpu.matmul %57, %71, %cst_18 {dimension_numbers = #tpu.dot_dimension_numbers<[1], [0], [0], [1], [0, 0, 1, 1], [], []>} : vector<64x22xf32>, vector<22x11xf32>, vector<64x11xf32> -> vector<64x11xf32>
    %74 = tpu.concatenate %72, %73 in 0 : vector<64x11xf32>, vector<64x11xf32> -> vector<128x11xf32>
    %c0_19 = arith.constant 0 : index
    %c0_20 = arith.constant 0 : index
    %75 = vector.load %arg6[%c0_19, %c0_20] : memref<128x512xbf16, #tpu.memory_space<vmem>>, vector<128x512xbf16>
    %c0_21 = arith.constant 0 : index
    %c0_22 = arith.constant 0 : index
    %76 = vector.load %arg7[%c0_21, %c0_22] : memref<128x1xf32, #tpu.memory_space<vmem>>, vector<128x1xf32>
    %77 = vector.extract_strided_slice %74 {offsets = [0, 0], sizes = [128, 8], strides = [1, 1]} : vector<128x11xf32> to vector<128x8xf32>
    %78 = vector.extract_strided_slice %74 {offsets = [0, 1], sizes = [128, 8], strides = [1, 1]} : vector<128x11xf32> to vector<128x8xf32>
    %79 = vector.extract_strided_slice %74 {offsets = [0, 2], sizes = [128, 8], strides = [1, 1]} : vector<128x11xf32> to vector<128x8xf32>
    %80 = vector.extract_strided_slice %74 {offsets = [0, 3], sizes = [128, 8], strides = [1, 1]} : vector<128x11xf32> to vector<128x8xf32>
    %81 = tpu.concatenate %77, %78, %79, %80 in 0 : vector<128x8xf32>, vector<128x8xf32>, vector<128x8xf32>, vector<128x8xf32> -> vector<512x8xf32>
    %82 = arith.truncf %81 : vector<512x8xf32> to vector<512x8xbf16>
    %cst_23 = arith.constant dense<0.000000e+00> : vector<128x8xf32>
    %83 = tpu.matmul %75, %82, %cst_23 {dimension_numbers = #tpu.dot_dimension_numbers<[1], [0], [0], [1], [0, 0, 1, 1], [], []>} : vector<128x512xbf16>, vector<512x8xbf16>, vector<128x8xf32> -> vector<128x8xf32>
    %84 = vector.broadcast %76 : vector<128x1xf32> to vector<128x8xf32>
    %85 = arith.addf %83, %84 : vector<128x8xf32>
    %86 = arith.truncf %85 : vector<128x8xf32> to vector<128x8xbf16>
    %c0_24 = arith.constant 0 : index
    %c0_25 = arith.constant 0 : index
    %87 = vector.load %arg9[%c0_24, %c0_25] : memref<128x1xf32, #tpu.memory_space<vmem>>, vector<128x1xf32>
    %c0_26 = arith.constant 0 : index
    %c0_27 = arith.constant 0 : index
    %c0_28 = arith.constant 0 : index
    %88 = vector.load %arg8[%c0_26, %c0_27, %c0_28] : memref<8x128x128xbf16, #tpu.memory_space<vmem>>, vector<1x128x128xbf16>
    %89 = vector.shape_cast %88 : vector<1x128x128xbf16> to vector<128x128xbf16>
    %90 = vector.extract_strided_slice %86 {offsets = [0, 0], sizes = [128, 1], strides = [1, 1]} : vector<128x8xbf16> to vector<128x1xbf16>
    %cst_29 = arith.constant dense<0.000000e+00> : vector<128x1xf32>
    %91 = tpu.matmul %89, %90, %cst_29 {dimension_numbers = #tpu.dot_dimension_numbers<[1], [0], [0], [1], [0, 0, 1, 1], [], []>} : vector<128x128xbf16>, vector<128x1xbf16>, vector<128x1xf32> -> vector<128x1xf32>
    %92 = arith.addf %87, %91 : vector<128x1xf32>
    %c1 = arith.constant 1 : index
    %c0_30 = arith.constant 0 : index
    %c0_31 = arith.constant 0 : index
    %93 = vector.load %arg8[%c1, %c0_30, %c0_31] : memref<8x128x128xbf16, #tpu.memory_space<vmem>>, vector<1x128x128xbf16>
    %94 = vector.shape_cast %93 : vector<1x128x128xbf16> to vector<128x128xbf16>
    %95 = vector.extract_strided_slice %86 {offsets = [0, 1], sizes = [128, 1], strides = [1, 1]} : vector<128x8xbf16> to vector<128x1xbf16>
    %cst_32 = arith.constant dense<0.000000e+00> : vector<128x1xf32>
    %96 = tpu.matmul %94, %95, %cst_32 {dimension_numbers = #tpu.dot_dimension_numbers<[1], [0], [0], [1], [0, 0, 1, 1], [], []>} : vector<128x128xbf16>, vector<128x1xbf16>, vector<128x1xf32> -> vector<128x1xf32>
    %97 = arith.addf %92, %96 : vector<128x1xf32>
    %c2 = arith.constant 2 : index
    %c0_33 = arith.constant 0 : index
    %c0_34 = arith.constant 0 : index
    %98 = vector.load %arg8[%c2, %c0_33, %c0_34] : memref<8x128x128xbf16, #tpu.memory_space<vmem>>, vector<1x128x128xbf16>
    %99 = vector.shape_cast %98 : vector<1x128x128xbf16> to vector<128x128xbf16>
    %100 = vector.extract_strided_slice %86 {offsets = [0, 2], sizes = [128, 1], strides = [1, 1]} : vector<128x8xbf16> to vector<128x1xbf16>
    %cst_35 = arith.constant dense<0.000000e+00> : vector<128x1xf32>
    %101 = tpu.matmul %99, %100, %cst_35 {dimension_numbers = #tpu.dot_dimension_numbers<[1], [0], [0], [1], [0, 0, 1, 1], [], []>} : vector<128x128xbf16>, vector<128x1xbf16>, vector<128x1xf32> -> vector<128x1xf32>
    %102 = arith.addf %97, %101 : vector<128x1xf32>
    %c3 = arith.constant 3 : index
    %c0_36 = arith.constant 0 : index
    %c0_37 = arith.constant 0 : index
    %103 = vector.load %arg8[%c3, %c0_36, %c0_37] : memref<8x128x128xbf16, #tpu.memory_space<vmem>>, vector<1x128x128xbf16>
    %104 = vector.shape_cast %103 : vector<1x128x128xbf16> to vector<128x128xbf16>
    %105 = vector.extract_strided_slice %86 {offsets = [0, 3], sizes = [128, 1], strides = [1, 1]} : vector<128x8xbf16> to vector<128x1xbf16>
    %cst_38 = arith.constant dense<0.000000e+00> : vector<128x1xf32>
    %106 = tpu.matmul %104, %105, %cst_38 {dimension_numbers = #tpu.dot_dimension_numbers<[1], [0], [0], [1], [0, 0, 1, 1], [], []>} : vector<128x128xbf16>, vector<128x1xbf16>, vector<128x1xf32> -> vector<128x1xf32>
    %107 = arith.addf %102, %106 : vector<128x1xf32>
    %c4 = arith.constant 4 : index
    %c0_39 = arith.constant 0 : index
    %c0_40 = arith.constant 0 : index
    %108 = vector.load %arg8[%c4, %c0_39, %c0_40] : memref<8x128x128xbf16, #tpu.memory_space<vmem>>, vector<1x128x128xbf16>
    %109 = vector.shape_cast %108 : vector<1x128x128xbf16> to vector<128x128xbf16>
    %110 = vector.extract_strided_slice %86 {offsets = [0, 4], sizes = [128, 1], strides = [1, 1]} : vector<128x8xbf16> to vector<128x1xbf16>
    %cst_41 = arith.constant dense<0.000000e+00> : vector<128x1xf32>
    %111 = tpu.matmul %109, %110, %cst_41 {dimension_numbers = #tpu.dot_dimension_numbers<[1], [0], [0], [1], [0, 0, 1, 1], [], []>} : vector<128x128xbf16>, vector<128x1xbf16>, vector<128x1xf32> -> vector<128x1xf32>
    %112 = arith.addf %107, %111 : vector<128x1xf32>
    %c5 = arith.constant 5 : index
    %c0_42 = arith.constant 0 : index
    %c0_43 = arith.constant 0 : index
    %113 = vector.load %arg8[%c5, %c0_42, %c0_43] : memref<8x128x128xbf16, #tpu.memory_space<vmem>>, vector<1x128x128xbf16>
    %114 = vector.shape_cast %113 : vector<1x128x128xbf16> to vector<128x128xbf16>
    %115 = vector.extract_strided_slice %86 {offsets = [0, 5], sizes = [128, 1], strides = [1, 1]} : vector<128x8xbf16> to vector<128x1xbf16>
    %cst_44 = arith.constant dense<0.000000e+00> : vector<128x1xf32>
    %116 = tpu.matmul %114, %115, %cst_44 {dimension_numbers = #tpu.dot_dimension_numbers<[1], [0], [0], [1], [0, 0, 1, 1], [], []>} : vector<128x128xbf16>, vector<128x1xbf16>, vector<128x1xf32> -> vector<128x1xf32>
    %117 = arith.addf %112, %116 : vector<128x1xf32>
    %c6 = arith.constant 6 : index
    %c0_45 = arith.constant 0 : index
    %c0_46 = arith.constant 0 : index
    %118 = vector.load %arg8[%c6, %c0_45, %c0_46] : memref<8x128x128xbf16, #tpu.memory_space<vmem>>, vector<1x128x128xbf16>
    %119 = vector.shape_cast %118 : vector<1x128x128xbf16> to vector<128x128xbf16>
    %120 = vector.extract_strided_slice %86 {offsets = [0, 6], sizes = [128, 1], strides = [1, 1]} : vector<128x8xbf16> to vector<128x1xbf16>
    %cst_47 = arith.constant dense<0.000000e+00> : vector<128x1xf32>
    %121 = tpu.matmul %119, %120, %cst_47 {dimension_numbers = #tpu.dot_dimension_numbers<[1], [0], [0], [1], [0, 0, 1, 1], [], []>} : vector<128x128xbf16>, vector<128x1xbf16>, vector<128x1xf32> -> vector<128x1xf32>
    %122 = arith.addf %117, %121 : vector<128x1xf32>
    %c7 = arith.constant 7 : index
    %c0_48 = arith.constant 0 : index
    %c0_49 = arith.constant 0 : index
    %123 = vector.load %arg8[%c7, %c0_48, %c0_49] : memref<8x128x128xbf16, #tpu.memory_space<vmem>>, vector<1x128x128xbf16>
    %124 = vector.shape_cast %123 : vector<1x128x128xbf16> to vector<128x128xbf16>
    %125 = vector.extract_strided_slice %86 {offsets = [0, 7], sizes = [128, 1], strides = [1, 1]} : vector<128x8xbf16> to vector<128x1xbf16>
    %cst_50 = arith.constant dense<0.000000e+00> : vector<128x1xf32>
    %126 = tpu.matmul %124, %125, %cst_50 {dimension_numbers = #tpu.dot_dimension_numbers<[1], [0], [0], [1], [0, 0, 1, 1], [], []>} : vector<128x128xbf16>, vector<128x1xbf16>, vector<128x1xf32> -> vector<128x1xf32>
    %127 = arith.addf %122, %126 : vector<128x1xf32>
    %c0_51 = arith.constant 0 : index
    %c0_52 = arith.constant 0 : index
    %128 = vector.load %arg10[%c0_51, %c0_52] : memref<64x128xbf16, #tpu.memory_space<vmem>>, vector<64x128xbf16>
    %129 = arith.truncf %127 : vector<128x1xf32> to vector<128x1xbf16>
    %cst_53 = arith.constant dense<0.000000e+00> : vector<64x1xf32>
    %130 = tpu.matmul %128, %129, %cst_53 {dimension_numbers = #tpu.dot_dimension_numbers<[1], [0], [0], [1], [0, 0, 1, 1], [], []>} : vector<64x128xbf16>, vector<128x1xbf16>, vector<64x1xf32> -> vector<64x1xf32>
    %c0_54 = arith.constant 0 : index
    %c0_55 = arith.constant 0 : index
    %131 = vector.load %arg11[%c0_54, %c0_55] : memref<64x1xf32, #tpu.memory_space<vmem>>, vector<64x1xf32>
    %132 = arith.addf %130, %131 : vector<64x1xf32>
    %cst_56 = arith.constant dense<0xFF800000> : vector<1xf32>
    %133 = vector.multi_reduction <maximumf>, %132, %cst_56 [0] : vector<64x1xf32> to vector<1xf32>
    %134 = vector.shape_cast %133 : vector<1xf32> to vector<1x1xf32>
    %135 = vector.broadcast %134 : vector<1x1xf32> to vector<64x1xf32>
    %136 = arith.subf %132, %135 : vector<64x1xf32>
    %137 = math.exp %136 : vector<64x1xf32>
    %cst_57 = arith.constant dense<0.000000e+00> : vector<1xf32>
    %138 = vector.multi_reduction <add>, %137, %cst_57 [0] : vector<64x1xf32> to vector<1xf32>
    %139 = vector.shape_cast %138 : vector<1xf32> to vector<1x1xf32>
    %140 = vector.broadcast %139 : vector<1x1xf32> to vector<64x1xf32>
    %141 = arith.divf %137, %140 : vector<64x1xf32>
    %c0_58 = arith.constant 0 : index
    %c0_59 = arith.constant 0 : index
    %c0_60 = arith.constant 0 : index
    %142 = vector.load %arg12[%c0_58, %c0_59, %c0_60] : memref<1x64x1xf32, #tpu.memory_space<vmem>>, vector<1x64x1xf32>
    %143 = vector.shape_cast %142 : vector<1x64x1xf32> to vector<64x1xf32>
    %144 = vector.shape_cast %141 : vector<64x1xf32> to vector<1x64x1xf32>
    tpu.vector_store %arg12[%c0_58, %c0_59, %c0_60], %144 {strides = array<i32>} : memref<1x64x1xf32, #tpu.memory_space<vmem>>, vector<1x64x1xf32>,
    return
  }
  func.func @transform_0(%arg0: i32) -> (i32, i32, i32) {
    %c0_i32 = arith.constant 0 : i32
    %c0_i32_0 = arith.constant 0 : i32
    %c0_i32_1 = arith.constant 0 : i32
    return %arg0, %c0_i32, %c0_i32_0 : i32, i32, i32
  }
  func.func @transform_1(%arg0: i32) -> (i32, i32) {
    %c0_i32 = arith.constant 0 : i32
    %c0_i32_0 = arith.constant 0 : i32
    %c0_i32_1 = arith.constant 0 : i32
    return %c0_i32, %c0_i32_0 : i32, i32
  }
  func.func @transform_2(%arg0: i32) -> (i32, i32) {
    %c0_i32 = arith.constant 0 : i32
    %c0_i32_0 = arith.constant 0 : i32
    %c0_i32_1 = arith.constant 0 : i32
    return %c0_i32, %c0_i32_0 : i32, i32
  }
  func.func @transform_3(%arg0: i32) -> (i32, i32) {
    %c0_i32 = arith.constant 0 : i32
    %c0_i32_0 = arith.constant 0 : i32
    %c0_i32_1 = arith.constant 0 : i32
    return %c0_i32, %c0_i32_0 : i32, i32
  }
  func.func @transform_4(%arg0: i32) -> (i32, i32) {
    %c0_i32 = arith.constant 0 : i32
    %c0_i32_0 = arith.constant 0 : i32
    %c0_i32_1 = arith.constant 0 : i32
    return %c0_i32, %c0_i32_0 : i32, i32
  }
  func.func @transform_5(%arg0: i32) -> (i32, i32) {
    %c0_i32 = arith.constant 0 : i32
    %c0_i32_0 = arith.constant 0 : i32
    %c0_i32_1 = arith.constant 0 : i32
    return %c0_i32, %c0_i32_0 : i32, i32
  }
  func.func @transform_6(%arg0: i32) -> (i32, i32) {
    %c0_i32 = arith.constant 0 : i32
    %c0_i32_0 = arith.constant 0 : i32
    %c0_i32_1 = arith.constant 0 : i32
    return %c0_i32, %c0_i32_0 : i32, i32
  }
  func.func @transform_7(%arg0: i32) -> (i32, i32, i32) {
    %c0_i32 = arith.constant 0 : i32
    %c0_i32_0 = arith.constant 0 : i32
    %c0_i32_1 = arith.constant 0 : i32
    %c0_i32_2 = arith.constant 0 : i32
    return %c0_i32, %c0_i32_0, %c0_i32_1 : i32, i32, i32
  }
  func.func @transform_8(%arg0: i32) -> (i32, i32) {
    %c0_i32 = arith.constant 0 : i32
    %c0_i32_0 = arith.constant 0 : i32
    %c0_i32_1 = arith.constant 0 : i32
    return %c0_i32, %c0_i32_0 : i32, i32
  }
  func.func @transform_9(%arg0: i32) -> (i32, i32) {
    %c0_i32 = arith.constant 0 : i32
    %c0_i32_0 = arith.constant 0 : i32
    %c0_i32_1 = arith.constant 0 : i32
    return %c0_i32, %c0_i32_0 : i32, i32
  }
  func.func @transform_10(%arg0: i32) -> (i32, i32) {
    %c0_i32 = arith.constant 0 : i32
    %c0_i32_0 = arith.constant 0 : i32
    %c0_i32_1 = arith.constant 0 : i32
    return %c0_i32, %c0_i32_0 : i32, i32
  }
  func.func @transform_11(%arg0: i32) -> (i32, i32, i32) {
    %c0_i32 = arith.constant 0 : i32
    %c0_i32_0 = arith.constant 0 : i32
    %c0_i32_1 = arith.constant 0 : i32
    return %arg0, %c0_i32, %c0_i32_0 : i32, i32, i32
  }
}

</mosaic_0001>

<llo_original>
// kernel: cnn1d_forward.2
$region0: #{cnn1d_forward.2}
  #allocation0 [shape = 'u32[]', space=smem, size = 0x4, offset = 0x4, fixed_abs, tag = 'smem constant byte address 0x4 - core index']
  #allocation1 [shape = 'u32[144,128]{1,0:T(1,128)}', space=vmem, size = 0x12000, scoped, tag = 'internal scratch']
  %s0 = inlined_call_operand.vmem [shape: bf16[2,16,962], index: 0, kind: input, shape index: {}]
  %s1 = inlined_call_operand.vmem [shape: bf16[128,80], index: 1, kind: input, shape index: {}]
  %s2 = inlined_call_operand.vmem [shape: f32[16,1], index: 2, kind: input, shape index: {}]
  %s3 = inlined_call_operand.vmem [shape: f32[2,16,958], index: 3, kind: output, shape index: {}]
  %s4 = sld [smem:[#allocation0]]
  $region45: #{cnn1d_forward.2} parent=0
    _
  %s6 = ssub.s32 1, %s4
  %s7 = scalar_select 0, %s6, %s4
  loop: start=0, step=1, limit=4
  $region2: #{cnn1d_forward.2} parent=0 // loop_pre_header
    _
  $region3: #{cnn1d_forward.2} parent=0 // loop_header
    %s9 = sphi 0, %s13
    %p10 = scmp.ge.s32.totalorder %s9, 4
    %s19 = sphi 0, %s21
    %s22 = sphi 0, %s19
    %s23 = sphi 0, %s22
    %s39 = sphi 0, %s23
    %s43 = sphi 0, %s43
    %s45 = sphi 0, %s43
    %s46 = sphi 0, %s45
    %s60 = sphi 0, %s46
    %s64 = sphi 0, %s64
    %s66 = sphi 0, %s64
    %s67 = sphi 0, %s66
    %s81 = sphi 0, %s67
    %s87 = sphi 0, %s89
    %s90 = sphi 0, %s87
    %s91 = sphi 0, %s90
    %s107 = sphi 0, %s91
  $region4: #{cnn1d_forward.2} parent=0 // loop_header_branch
    %12 = sbr.rel (%p10) target = $region8
  $region5: #{cnn1d_forward.2} parent=0 // loop_body
    %s14 = ssub.s32 %s9, 1
    %s15 = ssub.s32 %s9, 2
    %s16 = sadd.s32 %s9, 1
    %s17 = ssub.s32 %s9, %s16
    %p18 = scmp.eq.s32.totalorder %s17, 0
    %s20 = sadd.s32 %s19, 1
    %s21 = scalar_select %p18, %s19, %s20
    %p24 = pneg %p18
    %p25 = scmp.eq.s32.totalorder %s9, 1
    %p26 = por %p24, %p25
    %p27 = scmp.ne.s32.totalorder %s19, %s22
    %p28 = scmp.eq.s32.totalorder %s9, 0
    %p29 = por %p27, %p28
    %p30 = scmp.ne.s32.totalorder %s19, %s22
    %p31 = scmp.eq.s32.totalorder %s14, 1
    %p32 = por %p30, %p31
    %p33 = scmp.ne.s32.totalorder %s22, %s23
    %p34 = scmp.eq.s32.totalorder %s14, 0
    %p35 = por %p33, %p34
    %p36 = scmp.ne.s32.totalorder %s22, %s23
    %p37 = scmp.eq.s32.totalorder %s15, 1
    %p38 = por %p36, %p37
    %p40 = scmp.ne.s32.totalorder %s23, %s39
    %p41 = scmp.eq.s32.totalorder %s15, 0
    %p42 = por %p40, %p41
    %s44 = sadd.s32 %s43, 1
    %p47 = scmp.eq.s32.totalorder %s9, 1
    %p48 = scmp.ne.s32.totalorder %s43, %s45
    %p49 = scmp.eq.s32.totalorder %s9, 0
    %p50 = por %p48, %p49
    %p51 = scmp.ne.s32.totalorder %s43, %s45
    %p52 = scmp.eq.s32.totalorder %s14, 1
    %p53 = por %p51, %p52
    %p54 = scmp.ne.s32.totalorder %s45, %s46
    %p55 = scmp.eq.s32.totalorder %s14, 0
    %p56 = por %p54, %p55
    %p57 = scmp.ne.s32.totalorder %s45, %s46
    %p58 = scmp.eq.s32.totalorder %s15, 1
    %p59 = por %p57, %p58
    %p61 = scmp.ne.s32.totalorder %s46, %s60
    %p62 = scmp.eq.s32.totalorder %s15, 0
    %p63 = por %p61, %p62
    %s65 = sadd.s32 %s64, 1
    %p68 = scmp.eq.s32.totalorder %s9, 1
    %p69 = scmp.ne.s32.totalorder %s64, %s66
    %p70 = scmp.eq.s32.totalorder %s9, 0
    %p71 = por %p69, %p70
    %p72 = scmp.ne.s32.totalorder %s64, %s66
    %p73 = scmp.eq.s32.totalorder %s14, 1
    %p74 = por %p72, %p73
    %p75 = scmp.ne.s32.totalorder %s66, %s67
    %p76 = scmp.eq.s32.totalorder %s14, 0
    %p77 = por %p75, %p76
    %p78 = scmp.ne.s32.totalorder %s66, %s67
    %p79 = scmp.eq.s32.totalorder %s15, 1
    %p80 = por %p78, %p79
    %p82 = scmp.ne.s32.totalorder %s67, %s81
    %p83 = scmp.eq.s32.totalorder %s15, 0
    %p84 = por %p82, %p83
    %s85 = ssub.s32 %s9, %s16
    %p86 = scmp.eq.s32.totalorder %s85, 0
    %s88 = sadd.s32 %s87, 1
    %s89 = scalar_select %p86, %s87, %s88
    %p92 = pneg %p86
    %p93 = scmp.eq.s32.totalorder %s9, 1
    %p94 = por %p92, %p93
    %p95 = scmp.ne.s32.totalorder %s87, %s90
    %p96 = scmp.eq.s32.totalorder %s9, 0
    %p97 = por %p95, %p96
    %p98 = scmp.ne.s32.totalorder %s87, %s90
    %p99 = scmp.eq.s32.totalorder %s14, 1
    %p100 = por %p98, %p99
    %p101 = scmp.ne.s32.totalorder %s90, %s91
    %p102 = scmp.eq.s32.totalorder %s14, 0
    %p103 = por %p101, %p102
    %p104 = scmp.ne.s32.totalorder %s90, %s91
    %p105 = scmp.eq.s32.totalorder %s15, 1
    %p106 = por %p104, %p105
    %p108 = scmp.ne.s32.totalorder %s91, %s107
    %p109 = scmp.eq.s32.totalorder %s15, 0
    %p110 = por %p108, %p109
    %p111 = scmp.le.s32.totalorder 1, %s9
    %p112 = scmp.lt.s32.totalorder %s9, 3
    %p113 = pnand %p111, %p112
    %p114 = pneg %p113
    // Predicated region
    $region9: #{cnn1d_forward.2} parent=5 // pred_check
      _
    $region10: #{cnn1d_forward.2} parent=5 // pred_check_branch
      %116 = sbr.rel (%p113) target = $region12
    $region11: #{cnn1d_forward.2} parent=5 // pred_region
      %s117 = ssub.s32 %s9, 1
      // Predicated region
      $region13: #{cnn1d_forward.2} parent=11 // pred_check
        %p118 = pneg %p56
      $region14: #{cnn1d_forward.2} parent=11 // pred_check_branch
        %120 = sbr.rel (%p118) target = $region16
      $region15: #{cnn1d_forward.2} parent=11 // pred_region
        _
      $region16: #{cnn1d_forward.2} parent=11 // pred_fallthru
        _
      // Predicated region
      $region17: #{cnn1d_forward.2} parent=11 // pred_check
        %p121 = pneg %p77
      $region18: #{cnn1d_forward.2} parent=11 // pred_check_branch
        %123 = sbr.rel (%p121) target = $region20
      $region19: #{cnn1d_forward.2} parent=11 // pred_region
        _
      $region20: #{cnn1d_forward.2} parent=11 // pred_fallthru
        _
    $region12: #{cnn1d_forward.2} parent=5 // pred_fallthru
      _
    %p124 = scmp.lt.s32.totalorder %s9, 2
    // Predicated region
    $region21: #{cnn1d_forward.2} parent=5 // pred_check
      %p125 = pneg %p124
    $region22: #{cnn1d_forward.2} parent=5 // pred_check_branch
      %127 = sbr.rel (%p125) target = $region24
    $region23: #{cnn1d_forward.2} parent=5 // pred_region
      // Predicated region
      $region25: #{cnn1d_forward.2} parent=23 // pred_check
        %p128 = pneg %p29
      $region26: #{cnn1d_forward.2} parent=23 // pred_check_branch
        %130 = sbr.rel (%p128) target = $region28
      $region27: #{cnn1d_forward.2} parent=23 // pred_region
        %p131 = scmp.lt.s32.totalorder %s9, 1
        %s132 = scalar_select %p131, %s9, 1
        %s133 = smul.addr %s132, 16
        %s134 = smul.addr %s133, 4
        %s135 = scalar_lea.vmem %s0, %s134
      $region28: #{cnn1d_forward.2} parent=23 // pred_fallthru
        _
    $region24: #{cnn1d_forward.2} parent=5 // pred_fallthru
      _
    %p136 = scmp.le.s32.totalorder 1, %s9
    %p137 = scmp.lt.s32.totalorder %s9, 3
    %p138 = pnand %p136, %p137
    %p139 = pneg %p138
    // Predicated region
    $region29: #{cnn1d_forward.2} parent=5 // pred_check
      _
    $region30: #{cnn1d_forward.2} parent=5 // pred_check_branch
      %141 = sbr.rel (%p138) target = $region32
    $region31: #{cnn1d_forward.2} parent=5 // pred_region
      %s142 = ssub.s32 %s9, 1
      %p143 = scmp.lt.s32.totalorder %s14, 1
      %s144 = scalar_select %p143, %s14, 1
      %s145 = smul.addr %s144, 16
      %s146 = smul.addr %s145, 4
      %s147 = scalar_lea.vmem %s0, %s146
      %p148 = pneg %p35
      %p149 = pneg %p32
      %p150 = pneg %p56
      %p151 = pneg %p53
      %p152 = pneg %p77
      %p153 = pneg %p74
      %p154 = pneg %p103
      %p155 = pneg %p100
      %p156 = scmp.lt.s32.totalorder %s14, 1
      %s157 = scalar_select %p156, %s14, 1
      %s158 = smul.addr %s157, 16
      %s159 = smul.addr %s158, 8
      %s160 = scalar_lea.vmem %s3, %s159
      %p161 = scmp.lt.s32.totalorder %s14, 1
      %s162 = scalar_select %p161, %s14, 1
      %s163 = smul.addr %s162, 16
      %s164 = smul.addr %s163, 4
      %s165 = scalar_lea.vmem %s0, %s164
      %p166 = scmp.lt.s32.totalorder %s14, 1
      %s167 = scalar_select %p166, %s14, 1
      %s168 = smul.addr %s167, 16
      %s169 = smul.addr %s168, 8
      %s170 = scalar_lea.vmem %s3, %s169
      %v172 = vld [vmem:[%s165] sm:$0xff]
      %v173 = vld [vmem:[%s165 + $0x8] sm:$0xff]
      %v174 = vld [vmem:[%s165 + $0x10] sm:$0xff]
      %v175 = vld [vmem:[%s165 + $0x18] sm:$0xff]
      %v176 = vld [vmem:[%s165 + $0x20] sm:$0xff]
      %v177 = vld [vmem:[%s165 + $0x28] sm:$0xff]
      %v178 = vld [vmem:[%s165 + $0x30] sm:$0xff]
      %v179 = vld [vmem:[%s165 + $0x38] sm:$0xff]
      %v180 = vld [vmem:[%s1] sm:$0xf]
      %v181 = vld [vmem:[%s1 + $0x4] sm:$0xf]
      %v182 = vld [vmem:[%s1 + $0x8] sm:$0xf]
      %v183 = vld [vmem:[%s1 + $0xc] sm:$0xf]
      %v184 = vld [vmem:[%s1 + $0x10] sm:$0xf]
      %v185 = vld [vmem:[%s1 + $0x14] sm:$0xf]
      %v186 = vld [vmem:[%s1 + $0x18] sm:$0xf]
      %v187 = vld [vmem:[%s1 + $0x1c] sm:$0xf]
      %v188 = vld [vmem:[%s1 + $0x20] sm:$0xf]
      %v189 = vld [vmem:[%s1 + $0x24] sm:$0xf]
      %v190 = vld [vmem:[%s1 + $0x28] sm:$0xf]
      %v191 = vld [vmem:[%s1 + $0x2c] sm:$0xf]
      %v192 = vld [vmem:[%s1 + $0x30] sm:$0xf]
      %v193 = vld [vmem:[%s1 + $0x34] sm:$0xf]
      %v194 = vld [vmem:[%s1 + $0x38] sm:$0xf]
      %v195 = vld [vmem:[%s1 + $0x3c] sm:$0xf]
      %v196 = vld [vmem:[%s2] sm:$0xff]
      %v197 = vld [vmem:[%s2 + $0x8] sm:$0xff]
      %v206 = vunpack.c.l.b16 %v172
      %v207 = vunpack.c.h.b16 %v172
      %v208 = vunpack.c.l.b16 %v173
      %v209 = vunpack.c.h.b16 %v173
      %v210 = vunpack.c.l.b16 %v174
      %v211 = vunpack.c.h.b16 %v174
      %v212 = vunpack.c.l.b16 %v175
      %v213 = vunpack.c.h.b16 %v175
      %v214 = vunpack.c.l.b16 %v176
      %v215 = vunpack.c.h.b16 %v176
      %v216 = vunpack.c.l.b16 %v177
      %v217 = vunpack.c.h.b16 %v177
      %v218 = vunpack.c.l.b16 %v178
      %v219 = vunpack.c.h.b16 %v178
      %v220 = vunpack.c.l.b16 %v179
      %v221 = vunpack.c.h.b16 %v179
      %v222 = vpack.c.b16 %v214, %v206
      %v223 = vpack.c.b16 %v215, %v207
      %v224 = vpack.c.b16 %v216, %v208
      %v225 = vpack.c.b16 %v217, %v209
      %v226 = vpack.c.b16 %v218, %v210
      %v227 = vpack.c.b16 %v219, %v211
      %v228 = vpack.c.b16 %v220, %v212
      %v229 = vpack.c.b16 %v221, %v213
      %238 = vrot.lane.b32.xlu0 %v222, 127
      %v239 = vpop.permute.xlu0 %238
      %240 = vrot.lane.b32.xlu0 %v223, 127
      %v241 = vpop.permute.xlu0 %240
      %242 = vrot.lane.b32.xlu0 %v224, 127
      %v243 = vpop.permute.xlu0 %242
      %244 = vrot.lane.b32.xlu0 %v225, 127
      %v245 = vpop.permute.xlu0 %244
      %246 = vrot.lane.b32.xlu0 %v226, 127
      %v247 = vpop.permute.xlu0 %246
      %248 = vrot.lane.b32.xlu0 %v227, 127
      %v249 = vpop.permute.xlu0 %248
      %250 = vrot.lane.b32.xlu0 %v228, 127
      %v251 = vpop.permute.xlu0 %250
      %252 = vrot.lane.b32.xlu0 %v229, 127
      %v253 = vpop.permute.xlu0 %252
      %vm254 = vcmask 1039360
      %v255 = vsel %vm254, %v239, %v241
      %v256 = vsel %vm254, %v241, %v243
      %v257 = vsel %vm254, %v243, %v245
      %v258 = vsel %vm254, %v245, %v247
      %v259 = vsel %vm254, %v247, %v249
      %v260 = vsel %vm254, %v249, %v251
      %v261 = vsel %vm254, %v251, %v253
      %270 = vrot.lane.b32.xlu0 %v222, 126
      %v271 = vpop.permute.xlu0 %270
      %272 = vrot.lane.b32.xlu0 %v223, 126
      %v273 = vpop.permute.xlu0 %272
      %274 = vrot.lane.b32.xlu0 %v224, 126
      %v275 = vpop.permute.xlu0 %274
      %276 = vrot.lane.b32.xlu0 %v225, 126
      %v277 = vpop.permute.xlu0 %276
      %278 = vrot.lane.b32.xlu0 %v226, 126
      %v279 = vpop.permute.xlu0 %278
      %280 = vrot.lane.b32.xlu0 %v227, 126
      %v281 = vpop.permute.xlu0 %280
      %282 = vrot.lane.b32.xlu0 %v228, 126
      %v283 = vpop.permute.xlu0 %282
      %284 = vrot.lane.b32.xlu0 %v229, 126
      %v285 = vpop.permute.xlu0 %284
      %vm286 = vcmask 1031168
      %v287 = vsel %vm286, %v271, %v273
      %v288 = vsel %vm286, %v273, %v275
      %v289 = vsel %vm286, %v275, %v277
      %v290 = vsel %vm286, %v277, %v279
      %v291 = vsel %vm286, %v279, %v281
      %v292 = vsel %vm286, %v281, %v283
      %v293 = vsel %vm286, %v283, %v285
      %302 = vrot.lane.b32.xlu0 %v222, 125
      %v303 = vpop.permute.xlu0 %302
      %304 = vrot.lane.b32.xlu0 %v223, 125
      %v305 = vpop.permute.xlu0 %304
      %306 = vrot.lane.b32.xlu0 %v224, 125
      %v307 = vpop.permute.xlu0 %306
      %308 = vrot.lane.b32.xlu0 %v225, 125
      %v309 = vpop.permute.xlu0 %308
      %310 = vrot.lane.b32.xlu0 %v226, 125
      %v311 = vpop.permute.xlu0 %310
      %312 = vrot.lane.b32.xlu0 %v227, 125
      %v313 = vpop.permute.xlu0 %312
      %314 = vrot.lane.b32.xlu0 %v228, 125
      %v315 = vpop.permute.xlu0 %314
      %316 = vrot.lane.b32.xlu0 %v229, 125
      %v317 = vpop.permute.xlu0 %316
      %vm318 = vcmask 1022976
      %v319 = vsel %vm318, %v303, %v305
      %v320 = vsel %vm318, %v305, %v307
      %v321 = vsel %vm318, %v307, %v309
      %v322 = vsel %vm318, %v309, %v311
      %v323 = vsel %vm318, %v311, %v313
      %v324 = vsel %vm318, %v313, %v315
      %v325 = vsel %vm318, %v315, %v317
      %334 = vrot.lane.b32.xlu0 %v222, 124
      %v335 = vpop.permute.xlu0 %334
      %336 = vrot.lane.b32.xlu0 %v223, 124
      %v337 = vpop.permute.xlu0 %336
      %338 = vrot.lane.b32.xlu0 %v224, 124
      %v339 = vpop.permute.xlu0 %338
      %340 = vrot.lane.b32.xlu0 %v225, 124
      %v341 = vpop.permute.xlu0 %340
      %342 = vrot.lane.b32.xlu0 %v226, 124
      %v343 = vpop.permute.xlu0 %342
      %344 = vrot.lane.b32.xlu0 %v227, 124
      %v345 = vpop.permute.xlu0 %344
      %346 = vrot.lane.b32.xlu0 %v228, 124
      %v347 = vpop.permute.xlu0 %346
      %348 = vrot.lane.b32.xlu0 %v229, 124
      %v349 = vpop.permute.xlu0 %348
      %vm350 = vcmask 1014784
      %v351 = vsel %vm350, %v335, %v337
      %v352 = vsel %vm350, %v337, %v339
      %v353 = vsel %vm350, %v339, %v341
      %v354 = vsel %vm350, %v341, %v343
      %v355 = vsel %vm350, %v343, %v345
      %v356 = vsel %vm350, %v345, %v347
      %v357 = vsel %vm350, %v347, %v349
      %v382 = vunpack.c.l.b16 %v180
      %v383 = vunpack.c.l.b16 %v181
      %v384 = vunpack.c.l.b16 %v182
      %v385 = vunpack.c.l.b16 %v183
      %v386 = vunpack.c.l.b16 %v184
      %v387 = vunpack.c.l.b16 %v185
      %v388 = vunpack.c.l.b16 %v186
      %v389 = vunpack.c.l.b16 %v187
      %v390 = vunpack.c.l.b16 %v188
      %v391 = vunpack.c.l.b16 %v189
      %v392 = vunpack.c.l.b16 %v190
      %v393 = vunpack.c.l.b16 %v191
      %v394 = vunpack.c.l.b16 %v192
      %v395 = vunpack.c.l.b16 %v193
      %v396 = vunpack.c.l.b16 %v194
      %v397 = vunpack.c.l.b16 %v195
      %v398 = vpack.c.b16 %v383, %v382
      %v399 = vpack.c.b16 %v385, %v384
      %v400 = vpack.c.b16 %v387, %v386
      %v401 = vpack.c.b16 %v389, %v388
      %v402 = vpack.c.b16 %v391, %v390
      %v403 = vpack.c.b16 %v393, %v392
      %v404 = vpack.c.b16 %v395, %v394
      %v405 = vpack.c.b16 %v397, %v396
      %vm406 = vcmask 654336
      %v408 = vsel %vm406, %v398, 0
      %v411 = vsel %vm406, %v399, 0
      %v414 = vsel %vm406, %v400, 0
      %v417 = vsel %vm406, %v401, 0
      %v420 = vsel %vm406, %v402, 0
      %v423 = vsel %vm406, %v403, 0
      %v426 = vsel %vm406, %v404, 0
      %v429 = vsel %vm406, %v405, 0
      %431 = vmatprep.subr.bf16.mxu0 0
      %432 = vmatpush1.bf16.msra.mxu0 0
      %433 = vmatprep.subr.bf16.mxu0 0
      %434 = vmatpush1.bf16.msra.mxu0 0
      %435 = vmatprep.subr.bf16.mxu0 0
      %436 = vmatpush1.bf16.msra.mxu0 0
      %437 = vmatprep.subr.bf16.mxu0 %v352
      %438 = vmatpush1.bf16.msra.mxu0 %v351
      %439 = vmatprep.subr.bf16.mxu0 %v320
      %440 = vmatpush1.bf16.msra.mxu0 %v319
      %441 = vmatprep.subr.bf16.mxu0 %v288
      %442 = vmatpush1.bf16.msra.mxu0 %v287
      %443 = vmatprep.subr.bf16.mxu0 %v256
      %444 = vmatpush1.bf16.msra.mxu0 %v255
      %445 = vmatprep.subr.bf16.mxu0 %v223
      %446 = vmatpush1.bf16.msra.mxu0 %v222
      %447 = vmatprep.subr.bf16.mxu0 0
      %448 = vmatpush2.bf16.msra.mxu0 0
      %449 = vmatprep.subr.bf16.mxu0 0
      %450 = vmatpush2.bf16.msra.mxu0 0
      %451 = vmatprep.subr.bf16.mxu0 0
      %452 = vmatpush2.bf16.msra.mxu0 0
      %453 = vmatprep.subr.bf16.mxu0 0
      %454 = vmatpush2.bf16.msra.mxu0 0
      %455 = vmatprep.subr.bf16.mxu0 0
      %456 = vmatpush2.bf16.msra.mxu0 0
      %457 = vmatprep.subr.bf16.mxu0 0
      %458 = vmatpush2.bf16.msra.mxu0 0
      %459 = vmatprep.subr.bf16.mxu0 0
      %460 = vmatpush2.bf16.msra.mxu0 0
      %461 = vmatprep.subr.bf16.mxu0 0
      %462 = vmatpush2.bf16.msra.mxu0 0
      %463 = vmatprep.mubr.bf16.mxu0 0
      %464 = vmatmul.mubr.bf16.gmra.mxu0 %v408
      %v465 = vpop.f32.mrf.mxu0
      %v466 = vadd.f32 0.0, %v465
      %v467 = vpop.f32.mrf.mxu0
      %v468 = vadd.f32 0.0, %v467
      %v469 = vpop.f32.mrf.mxu0
      %v470 = vadd.f32 0.0, %v469
      %v471 = vpop.f32.mrf.mxu0
      %v472 = vadd.f32 0.0, %v471
      %473 = vmatprep.mubr.bf16.mxu0 0
      %474 = vmatmul.mubr.bf16.gmra.mxu0 %v411
      %v475 = vpop.f32.mrf.mxu0
      %v476 = vadd.f32 0.0, %v475
      %v477 = vpop.f32.mrf.mxu0
      %v478 = vadd.f32 0.0, %v477
      %v479 = vpop.f32.mrf.mxu0
      %v480 = vadd.f32 0.0, %v479
      %v481 = vpop.f32.mrf.mxu0
      %v482 = vadd.f32 0.0, %v481
      %483 = vmatprep.mubr.bf16.mxu0 0
      %484 = vmatmul.mubr.bf16.gmra.mxu0 %v414
      %v485 = vpop.f32.mrf.mxu0
      %v486 = vadd.f32 0.0, %v485
      %v487 = vpop.f32.mrf.mxu0
      %v488 = vadd.f32 0.0, %v487
      %v489 = vpop.f32.mrf.mxu0
      %v490 = vadd.f32 0.0, %v489
      %v491 = vpop.f32.mrf.mxu0
      %v492 = vadd.f32 0.0, %v491
      %493 = vmatprep.mubr.bf16.mxu0 0
      %494 = vmatmul.mubr.bf16.gmra.mxu0 %v417
      %v495 = vpop.f32.mrf.mxu0
      %v496 = vadd.f32 0.0, %v495
      %v497 = vpop.f32.mrf.mxu0
      %v498 = vadd.f32 0.0, %v497
      %v499 = vpop.f32.mrf.mxu0
      %v500 = vadd.f32 0.0, %v499
      %v501 = vpop.f32.mrf.mxu0
      %v502 = vadd.f32 0.0, %v501
      %503 = vmatprep.mubr.bf16.mxu0 0
      %504 = vmatmul.mubr.bf16.gmra.mxu0 %v420
      %v505 = vpop.f32.mrf.mxu0
      %v506 = vadd.f32 0.0, %v505
      %v507 = vpop.f32.mrf.mxu0
      %v508 = vadd.f32 0.0, %v507
      %v509 = vpop.f32.mrf.mxu0
      %v510 = vadd.f32 0.0, %v509
      %v511 = vpop.f32.mrf.mxu0
      %v512 = vadd.f32 0.0, %v511
      %513 = vmatprep.mubr.bf16.mxu0 0
      %514 = vmatmul.mubr.bf16.gmra.mxu0 %v423
      %v515 = vpop.f32.mrf.mxu0
      %v516 = vadd.f32 0.0, %v515
      %v517 = vpop.f32.mrf.mxu0
      %v518 = vadd.f32 0.0, %v517
      %v519 = vpop.f32.mrf.mxu0
      %v520 = vadd.f32 0.0, %v519
      %v521 = vpop.f32.mrf.mxu0
      %v522 = vadd.f32 0.0, %v521
      %523 = vmatprep.mubr.bf16.mxu0 0
      %524 = vmatmul.mubr.bf16.gmra.mxu0 %v426
      %v525 = vpop.f32.mrf.mxu0
      %v526 = vadd.f32 0.0, %v525
      %v527 = vpop.f32.mrf.mxu0
      %v528 = vadd.f32 0.0, %v527
      %v529 = vpop.f32.mrf.mxu0
      %v530 = vadd.f32 0.0, %v529
      %v531 = vpop.f32.mrf.mxu0
      %v532 = vadd.f32 0.0, %v531
      %533 = vmatprep.mubr.bf16.mxu0 0
      %534 = vmatmul.mubr.bf16.gmra.mxu0 %v429
      %v535 = vpop.f32.mrf.mxu0
      %v536 = vadd.f32 0.0, %v535
      %v537 = vpop.f32.mrf.mxu0
      %v538 = vadd.f32 0.0, %v537
      %v539 = vpop.f32.mrf.mxu0
      %v540 = vadd.f32 0.0, %v539
      %v541 = vpop.f32.mrf.mxu0
      %v542 = vadd.f32 0.0, %v541
      %543 = vdwg.mxu0
      %544 = vmatprep.subr.bf16.mxu0 0
      %545 = vmatpush1.bf16.msra.mxu0 0
      %546 = vmatprep.subr.bf16.mxu0 0
      %547 = vmatpush1.bf16.msra.mxu0 0
      %548 = vmatprep.subr.bf16.mxu0 0
      %549 = vmatpush1.bf16.msra.mxu0 0
      %550 = vmatprep.subr.bf16.mxu0 %v354
      %551 = vmatpush1.bf16.msra.mxu0 %v353
      %552 = vmatprep.subr.bf16.mxu0 %v322
      %553 = vmatpush1.bf16.msra.mxu0 %v321
      %554 = vmatprep.subr.bf16.mxu0 %v290
      %555 = vmatpush1.bf16.msra.mxu0 %v289
      %556 = vmatprep.subr.bf16.mxu0 %v258
      %557 = vmatpush1.bf16.msra.mxu0 %v257
      %558 = vmatprep.subr.bf16.mxu0 %v225
      %559 = vmatpush1.bf16.msra.mxu0 %v224
      %560 = vmatprep.subr.bf16.mxu0 0
      %561 = vmatpush2.bf16.msra.mxu0 0
      %562 = vmatprep.subr.bf16.mxu0 0
      %563 = vmatpush2.bf16.msra.mxu0 0
      %564 = vmatprep.subr.bf16.mxu0 0
      %565 = vmatpush2.bf16.msra.mxu0 0
      %566 = vmatprep.subr.bf16.mxu0 0
      %567 = vmatpush2.bf16.msra.mxu0 0
      %568 = vmatprep.subr.bf16.mxu0 0
      %569 = vmatpush2.bf16.msra.mxu0 0
      %570 = vmatprep.subr.bf16.mxu0 0
      %571 = vmatpush2.bf16.msra.mxu0 0
      %572 = vmatprep.subr.bf16.mxu0 0
      %573 = vmatpush2.bf16.msra.mxu0 0
      %574 = vmatprep.subr.bf16.mxu0 0
      %575 = vmatpush2.bf16.msra.mxu0 0
      %576 = vmatprep.mubr.bf16.mxu0 0
      %577 = vmatmul.mubr.bf16.gmra.mxu0 %v408
      %v578 = vpop.f32.mrf.mxu0
      %v579 = vadd.f32 0.0, %v578
      %v580 = vpop.f32.mrf.mxu0
      %v581 = vadd.f32 0.0, %v580
      %v582 = vpop.f32.mrf.mxu0
      %v583 = vadd.f32 0.0, %v582
      %v584 = vpop.f32.mrf.mxu0
      %v585 = vadd.f32 0.0, %v584
      %586 = vmatprep.mubr.bf16.mxu0 0
      %587 = vmatmul.mubr.bf16.gmra.mxu0 %v411
      %v588 = vpop.f32.mrf.mxu0
      %v589 = vadd.f32 0.0, %v588
      %v590 = vpop.f32.mrf.mxu0
      %v591 = vadd.f32 0.0, %v590
      %v592 = vpop.f32.mrf.mxu0
      %v593 = vadd.f32 0.0, %v592
      %v594 = vpop.f32.mrf.mxu0
      %v595 = vadd.f32 0.0, %v594
      %596 = vmatprep.mubr.bf16.mxu0 0
      %597 = vmatmul.mubr.bf16.gmra.mxu0 %v414
      %v598 = vpop.f32.mrf.mxu0
      %v599 = vadd.f32 0.0, %v598
      %v600 = vpop.f32.mrf.mxu0
      %v601 = vadd.f32 0.0, %v600
      %v602 = vpop.f32.mrf.mxu0
      %v603 = vadd.f32 0.0, %v602
      %v604 = vpop.f32.mrf.mxu0
      %v605 = vadd.f32 0.0, %v604
      %606 = vmatprep.mubr.bf16.mxu0 0
      %607 = vmatmul.mubr.bf16.gmra.mxu0 %v417
      %v608 = vpop.f32.mrf.mxu0
      %v609 = vadd.f32 0.0, %v608
      %v610 = vpop.f32.mrf.mxu0
      %v611 = vadd.f32 0.0, %v610
      %v612 = vpop.f32.mrf.mxu0
      %v613 = vadd.f32 0.0, %v612
      %v614 = vpop.f32.mrf.mxu0
      %v615 = vadd.f32 0.0, %v614
      %616 = vmatprep.mubr.bf16.mxu0 0
      %617 = vmatmul.mubr.bf16.gmra.mxu0 %v420
      %v618 = vpop.f32.mrf.mxu0
      %v619 = vadd.f32 0.0, %v618
      %v620 = vpop.f32.mrf.mxu0
      %v621 = vadd.f32 0.0, %v620
      %v622 = vpop.f32.mrf.mxu0
      %v623 = vadd.f32 0.0, %v622
      %v624 = vpop.f32.mrf.mxu0
      %v625 = vadd.f32 0.0, %v624
      %626 = vmatprep.mubr.bf16.mxu0 0
      %627 = vmatmul.mubr.bf16.gmra.mxu0 %v423
      %v628 = vpop.f32.mrf.mxu0
      %v629 = vadd.f32 0.0, %v628
      %v630 = vpop.f32.mrf.mxu0
      %v631 = vadd.f32 0.0, %v630
      %v632 = vpop.f32.mrf.mxu0
      %v633 = vadd.f32 0.0, %v632
      %v634 = vpop.f32.mrf.mxu0
      %v635 = vadd.f32 0.0, %v634
      %636 = vmatprep.mubr.bf16.mxu0 0
      %637 = vmatmul.mubr.bf16.gmra.mxu0 %v426
      %v638 = vpop.f32.mrf.mxu0
      %v639 = vadd.f32 0.0, %v638
      %v640 = vpop.f32.mrf.mxu0
      %v641 = vadd.f32 0.0, %v640
      %v642 = vpop.f32.mrf.mxu0
      %v643 = vadd.f32 0.0, %v642
      %v644 = vpop.f32.mrf.mxu0
      %v645 = vadd.f32 0.0, %v644
      %646 = vmatprep.mubr.bf16.mxu0 0
      %647 = vmatmul.mubr.bf16.gmra.mxu0 %v429
      %v648 = vpop.f32.mrf.mxu0
      %v649 = vadd.f32 0.0, %v648
      %v650 = vpop.f32.mrf.mxu0
      %v651 = vadd.f32 0.0, %v650
      %v652 = vpop.f32.mrf.mxu0
      %v653 = vadd.f32 0.0, %v652
      %v654 = vpop.f32.mrf.mxu0
      %v655 = vadd.f32 0.0, %v654
      %656 = vdwg.mxu0
      %657 = vmatprep.subr.bf16.mxu0 0
      %658 = vmatpush1.bf16.msra.mxu0 0
      %659 = vmatprep.subr.bf16.mxu0 0
      %660 = vmatpush1.bf16.msra.mxu0 0
      %661 = vmatprep.subr.bf16.mxu0 0
      %662 = vmatpush1.bf16.msra.mxu0 0
      %663 = vmatprep.subr.bf16.mxu0 %v356
      %664 = vmatpush1.bf16.msra.mxu0 %v355
      %665 = vmatprep.subr.bf16.mxu0 %v324
      %666 = vmatpush1.bf16.msra.mxu0 %v323
      %667 = vmatprep.subr.bf16.mxu0 %v292
      %668 = vmatpush1.bf16.msra.mxu0 %v291
      %669 = vmatprep.subr.bf16.mxu0 %v260
      %670 = vmatpush1.bf16.msra.mxu0 %v259
      %671 = vmatprep.subr.bf16.mxu0 %v227
      %672 = vmatpush1.bf16.msra.mxu0 %v226
      %673 = vmatprep.subr.bf16.mxu0 0
      %674 = vmatpush2.bf16.msra.mxu0 0
      %675 = vmatprep.subr.bf16.mxu0 0
      %676 = vmatpush2.bf16.msra.mxu0 0
      %677 = vmatprep.subr.bf16.mxu0 0
      %678 = vmatpush2.bf16.msra.mxu0 0
      %679 = vmatprep.subr.bf16.mxu0 0
      %680 = vmatpush2.bf16.msra.mxu0 0
      %681 = vmatprep.subr.bf16.mxu0 0
      %682 = vmatpush2.bf16.msra.mxu0 0
      %683 = vmatprep.subr.bf16.mxu0 0
      %684 = vmatpush2.bf16.msra.mxu0 0
      %685 = vmatprep.subr.bf16.mxu0 0
      %686 = vmatpush2.bf16.msra.mxu0 0
      %687 = vmatprep.subr.bf16.mxu0 0
      %688 = vmatpush2.bf16.msra.mxu0 0
      %689 = vmatprep.mubr.bf16.mxu0 0
      %690 = vmatmul.mubr.bf16.gmra.mxu0 %v408
      %v691 = vpop.f32.mrf.mxu0
      %v692 = vadd.f32 0.0, %v691
      %v693 = vpop.f32.mrf.mxu0
      %v694 = vadd.f32 0.0, %v693
      %v695 = vpop.f32.mrf.mxu0
      %v696 = vadd.f32 0.0, %v695
      %v697 = vpop.f32.mrf.mxu0
      %v698 = vadd.f32 0.0, %v697
      %699 = vmatprep.mubr.bf16.mxu0 0
      %700 = vmatmul.mubr.bf16.gmra.mxu0 %v411
      %v701 = vpop.f32.mrf.mxu0
      %v702 = vadd.f32 0.0, %v701
      %v703 = vpop.f32.mrf.mxu0
      %v704 = vadd.f32 0.0, %v703
      %v705 = vpop.f32.mrf.mxu0
      %v706 = vadd.f32 0.0, %v705
      %v707 = vpop.f32.mrf.mxu0
      %v708 = vadd.f32 0.0, %v707
      %709 = vmatprep.mubr.bf16.mxu0 0
      %710 = vmatmul.mubr.bf16.gmra.mxu0 %v414
      %v711 = vpop.f32.mrf.mxu0
      %v712 = vadd.f32 0.0, %v711
      %v713 = vpop.f32.mrf.mxu0
      %v714 = vadd.f32 0.0, %v713
      %v715 = vpop.f32.mrf.mxu0
      %v716 = vadd.f32 0.0, %v715
      %v717 = vpop.f32.mrf.mxu0
      %v718 = vadd.f32 0.0, %v717
      %719 = vmatprep.mubr.bf16.mxu0 0
      %720 = vmatmul.mubr.bf16.gmra.mxu0 %v417
      %v721 = vpop.f32.mrf.mxu0
      %v722 = vadd.f32 0.0, %v721
      %v723 = vpop.f32.mrf.mxu0
      %v724 = vadd.f32 0.0, %v723
      %v725 = vpop.f32.mrf.mxu0
      %v726 = vadd.f32 0.0, %v725
      %v727 = vpop.f32.mrf.mxu0
      %v728 = vadd.f32 0.0, %v727
      %729 = vmatprep.mubr.bf16.mxu0 0
      %730 = vmatmul.mubr.bf16.gmra.mxu0 %v420
      %v731 = vpop.f32.mrf.mxu0
      %v732 = vadd.f32 0.0, %v731
      %v733 = vpop.f32.mrf.mxu0
      %v734 = vadd.f32 0.0, %v733
      %v735 = vpop.f32.mrf.mxu0
      %v736 = vadd.f32 0.0, %v735
      %v737 = vpop.f32.mrf.mxu0
      %v738 = vadd.f32 0.0, %v737
      %739 = vmatprep.mubr.bf16.mxu0 0
      %740 = vmatmul.mubr.bf16.gmra.mxu0 %v423
      %v741 = vpop.f32.mrf.mxu0
      %v742 = vadd.f32 0.0, %v741
      %v743 = vpop.f32.mrf.mxu0
      %v744 = vadd.f32 0.0, %v743
      %v745 = vpop.f32.mrf.mxu0
      %v746 = vadd.f32 0.0, %v745
      %v747 = vpop.f32.mrf.mxu0
      %v748 = vadd.f32 0.0, %v747
      %749 = vmatprep.mubr.bf16.mxu0 0
      %750 = vmatmul.mubr.bf16.gmra.mxu0 %v426
      %v751 = vpop.f32.mrf.mxu0
      %v752 = vadd.f32 0.0, %v751
      %v753 = vpop.f32.mrf.mxu0
      %v754 = vadd.f32 0.0, %v753
      %v755 = vpop.f32.mrf.mxu0
      %v756 = vadd.f32 0.0, %v755
      %v757 = vpop.f32.mrf.mxu0
      %v758 = vadd.f32 0.0, %v757
      %759 = vmatprep.mubr.bf16.mxu0 0
      %760 = vmatmul.mubr.bf16.gmra.mxu0 %v429
      %v761 = vpop.f32.mrf.mxu0
      %v762 = vadd.f32 0.0, %v761
      %v763 = vpop.f32.mrf.mxu0
      %v764 = vadd.f32 0.0, %v763
      %v765 = vpop.f32.mrf.mxu0
      %v766 = vadd.f32 0.0, %v765
      %v767 = vpop.f32.mrf.mxu0
      %v768 = vadd.f32 0.0, %v767
      %769 = vdwg.mxu0
      %770 = vmatprep.subr.bf16.mxu0 0
      %771 = vmatpush1.bf16.msra.mxu0 0
      %772 = vmatprep.subr.bf16.mxu0 0
      %773 = vmatpush1.bf16.msra.mxu0 0
      %774 = vmatprep.subr.bf16.mxu0 0
      %775 = vmatpush1.bf16.msra.mxu0 0
      %776 = vmatprep.subr.bf16.mxu0 %v349
      %777 = vmatpush1.bf16.msra.mxu0 %v357
      %778 = vmatprep.subr.bf16.mxu0 %v317
      %779 = vmatpush1.bf16.msra.mxu0 %v325
      %780 = vmatprep.subr.bf16.mxu0 %v285
      %781 = vmatpush1.bf16.msra.mxu0 %v293
      %782 = vmatprep.subr.bf16.mxu0 %v253
      %783 = vmatpush1.bf16.msra.mxu0 %v261
      %784 = vmatprep.subr.bf16.mxu0 %v229
      %785 = vmatpush1.bf16.msra.mxu0 %v228
      %786 = vmatprep.subr.bf16.mxu0 0
      %787 = vmatpush2.bf16.msra.mxu0 0
      %788 = vmatprep.subr.bf16.mxu0 0
      %789 = vmatpush2.bf16.msra.mxu0 0
      %790 = vmatprep.subr.bf16.mxu0 0
      %791 = vmatpush2.bf16.msra.mxu0 0
      %792 = vmatprep.subr.bf16.mxu0 0
      %793 = vmatpush2.bf16.msra.mxu0 0
      %794 = vmatprep.subr.bf16.mxu0 0
      %795 = vmatpush2.bf16.msra.mxu0 0
      %796 = vmatprep.subr.bf16.mxu0 0
      %797 = vmatpush2.bf16.msra.mxu0 0
      %798 = vmatprep.subr.bf16.mxu0 0
      %799 = vmatpush2.bf16.msra.mxu0 0
      %800 = vmatprep.subr.bf16.mxu0 0
      %801 = vmatpush2.bf16.msra.mxu0 0
      %802 = vmatprep.mubr.bf16.mxu0 0
      %803 = vmatmul.mubr.bf16.gmra.mxu0 %v408
      %v804 = vpop.f32.mrf.mxu0
      %v805 = vadd.f32 0.0, %v804
      %v806 = vpop.f32.mrf.mxu0
      %v807 = vadd.f32 0.0, %v806
      %v808 = vpop.f32.mrf.mxu0
      %v809 = vadd.f32 0.0, %v808
      %v810 = vpop.f32.mrf.mxu0
      %v811 = vadd.f32 0.0, %v810
      %812 = vmatprep.mubr.bf16.mxu0 0
      %813 = vmatmul.mubr.bf16.gmra.mxu0 %v411
      %v814 = vpop.f32.mrf.mxu0
      %v815 = vadd.f32 0.0, %v814
      %v816 = vpop.f32.mrf.mxu0
      %v817 = vadd.f32 0.0, %v816
      %v818 = vpop.f32.mrf.mxu0
      %v819 = vadd.f32 0.0, %v818
      %v820 = vpop.f32.mrf.mxu0
      %v821 = vadd.f32 0.0, %v820
      %822 = vmatprep.mubr.bf16.mxu0 0
      %823 = vmatmul.mubr.bf16.gmra.mxu0 %v414
      %v824 = vpop.f32.mrf.mxu0
      %v825 = vadd.f32 0.0, %v824
      %v826 = vpop.f32.mrf.mxu0
      %v827 = vadd.f32 0.0, %v826
      %v828 = vpop.f32.mrf.mxu0
      %v829 = vadd.f32 0.0, %v828
      %v830 = vpop.f32.mrf.mxu0
      %v831 = vadd.f32 0.0, %v830
      %832 = vmatprep.mubr.bf16.mxu0 0
      %833 = vmatmul.mubr.bf16.gmra.mxu0 %v417
      %v834 = vpop.f32.mrf.mxu0
      %v835 = vadd.f32 0.0, %v834
      %v836 = vpop.f32.mrf.mxu0
      %v837 = vadd.f32 0.0, %v836
      %v838 = vpop.f32.mrf.mxu0
      %v839 = vadd.f32 0.0, %v838
      %v840 = vpop.f32.mrf.mxu0
      %v841 = vadd.f32 0.0, %v840
      %842 = vmatprep.mubr.bf16.mxu0 0
      %843 = vmatmul.mubr.bf16.gmra.mxu0 %v420
      %v844 = vpop.f32.mrf.mxu0
      %v845 = vadd.f32 0.0, %v844
      %v846 = vpop.f32.mrf.mxu0
      %v847 = vadd.f32 0.0, %v846
      %v848 = vpop.f32.mrf.mxu0
      %v849 = vadd.f32 0.0, %v848
      %v850 = vpop.f32.mrf.mxu0
      %v851 = vadd.f32 0.0, %v850
      %852 = vmatprep.mubr.bf16.mxu0 0
      %853 = vmatmul.mubr.bf16.gmra.mxu0 %v423
      %v854 = vpop.f32.mrf.mxu0
      %v855 = vadd.f32 0.0, %v854
      %v856 = vpop.f32.mrf.mxu0
      %v857 = vadd.f32 0.0, %v856
      %v858 = vpop.f32.mrf.mxu0
      %v859 = vadd.f32 0.0, %v858
      %v860 = vpop.f32.mrf.mxu0
      %v861 = vadd.f32 0.0, %v860
      %862 = vmatprep.mubr.bf16.mxu0 0
      %863 = vmatmul.mubr.bf16.gmra.mxu0 %v426
      %v864 = vpop.f32.mrf.mxu0
      %v865 = vadd.f32 0.0, %v864
      %v866 = vpop.f32.mrf.mxu0
      %v867 = vadd.f32 0.0, %v866
      %v868 = vpop.f32.mrf.mxu0
      %v869 = vadd.f32 0.0, %v868
      %v870 = vpop.f32.mrf.mxu0
      %v871 = vadd.f32 0.0, %v870
      %872 = vmatprep.mubr.bf16.mxu0 0
      %873 = vmatmul.mubr.bf16.gmra.mxu0 %v429
      %v874 = vpop.f32.mrf.mxu0
      %v875 = vadd.f32 0.0, %v874
      %v876 = vpop.f32.mrf.mxu0
      %v877 = vadd.f32 0.0, %v876
      %v878 = vpop.f32.mrf.mxu0
      %v879 = vadd.f32 0.0, %v878
      %v880 = vpop.f32.mrf.mxu0
      %v881 = vadd.f32 0.0, %v880
      %882 = vdwg.mxu0
      %v883 = vmax.f32 %v466, %v476
      %v884 = vmax.f32 %v468, %v478
      %v885 = vmax.f32 %v579, %v589
      %v886 = vmax.f32 %v581, %v591
      %v887 = vmax.f32 %v692, %v702
      %v888 = vmax.f32 %v694, %v704
      %v889 = vmax.f32 %v805, %v815
      %v890 = vmax.f32 %v807, %v817
      %v891 = vmax.f32 %v470, %v480
      %v892 = vmax.f32 %v472, %v482
      %v893 = vmax.f32 %v583, %v593
      %v894 = vmax.f32 %v585, %v595
      %v895 = vmax.f32 %v696, %v706
      %v896 = vmax.f32 %v698, %v708
      %v897 = vmax.f32 %v809, %v819
      %v898 = vmax.f32 %v811, %v821
      %v899 = vmax.f32 %v883, %v486
      %v900 = vmax.f32 %v884, %v488
      %v901 = vmax.f32 %v885, %v599
      %v902 = vmax.f32 %v886, %v601
      %v903 = vmax.f32 %v887, %v712
      %v904 = vmax.f32 %v888, %v714
      %v905 = vmax.f32 %v889, %v825
      %v906 = vmax.f32 %v890, %v827
      %v907 = vmax.f32 %v891, %v490
      %v908 = vmax.f32 %v892, %v492
      %v909 = vmax.f32 %v893, %v603
      %v910 = vmax.f32 %v894, %v605
      %v911 = vmax.f32 %v895, %v716
      %v912 = vmax.f32 %v896, %v718
      %v913 = vmax.f32 %v897, %v829
      %v914 = vmax.f32 %v898, %v831
      %v915 = vmax.f32 %v899, %v496
      %v916 = vmax.f32 %v900, %v498
      %v917 = vmax.f32 %v901, %v609
      %v918 = vmax.f32 %v902, %v611
      %v919 = vmax.f32 %v903, %v722
      %v920 = vmax.f32 %v904, %v724
      %v921 = vmax.f32 %v905, %v835
      %v922 = vmax.f32 %v906, %v837
      %v923 = vmax.f32 %v907, %v500
      %v924 = vmax.f32 %v908, %v502
      %v925 = vmax.f32 %v909, %v613
      %v926 = vmax.f32 %v910, %v615
      %v927 = vmax.f32 %v911, %v726
      %v928 = vmax.f32 %v912, %v728
      %v929 = vmax.f32 %v913, %v839
      %v930 = vmax.f32 %v914, %v841
      %v931 = vmax.f32 %v915, %v506
      %v932 = vmax.f32 %v916, %v508
      %v933 = vmax.f32 %v917, %v619
      %v934 = vmax.f32 %v918, %v621
      %v935 = vmax.f32 %v919, %v732
      %v936 = vmax.f32 %v920, %v734
      %v937 = vmax.f32 %v921, %v845
      %v938 = vmax.f32 %v922, %v847
      %v939 = vmax.f32 %v923, %v510
      %v940 = vmax.f32 %v924, %v512
      %v941 = vmax.f32 %v925, %v623
      %v942 = vmax.f32 %v926, %v625
      %v943 = vmax.f32 %v927, %v736
      %v944 = vmax.f32 %v928, %v738
      %v945 = vmax.f32 %v929, %v849
      %v946 = vmax.f32 %v930, %v851
      %v947 = vmax.f32 %v931, %v516
      %v948 = vmax.f32 %v932, %v518
      %v949 = vmax.f32 %v933, %v629
      %v950 = vmax.f32 %v934, %v631
      %v951 = vmax.f32 %v935, %v742
      %v952 = vmax.f32 %v936, %v744
      %v953 = vmax.f32 %v937, %v855
      %v954 = vmax.f32 %v938, %v857
      %v955 = vmax.f32 %v939, %v520
      %v956 = vmax.f32 %v940, %v522
      %v957 = vmax.f32 %v941, %v633
      %v958 = vmax.f32 %v942, %v635
      %v959 = vmax.f32 %v943, %v746
      %v960 = vmax.f32 %v944, %v748
      %v961 = vmax.f32 %v945, %v859
      %v962 = vmax.f32 %v946, %v861
      %v963 = vmax.f32 %v947, %v526
      %v964 = vmax.f32 %v948, %v528
      %v965 = vmax.f32 %v949, %v639
      %v966 = vmax.f32 %v950, %v641
      %v967 = vmax.f32 %v951, %v752
      %v968 = vmax.f32 %v952, %v754
      %v969 = vmax.f32 %v953, %v865
      %v970 = vmax.f32 %v954, %v867
      %v971 = vmax.f32 %v955, %v530
      %v972 = vmax.f32 %v956, %v532
      %v973 = vmax.f32 %v957, %v643
      %v974 = vmax.f32 %v958, %v645
      %v975 = vmax.f32 %v959, %v756
      %v976 = vmax.f32 %v960, %v758
      %v977 = vmax.f32 %v961, %v869
      %v978 = vmax.f32 %v962, %v871
      %v979 = vmax.f32 %v963, %v536
      %v980 = vmax.f32 %v964, %v538
      %v981 = vmax.f32 %v965, %v649
      %v982 = vmax.f32 %v966, %v651
      %v983 = vmax.f32 %v967, %v762
      %v984 = vmax.f32 %v968, %v764
      %v985 = vmax.f32 %v969, %v875
      %v986 = vmax.f32 %v970, %v877
      %v987 = vmax.f32 %v971, %v540
      %v988 = vmax.f32 %v972, %v542
      %v989 = vmax.f32 %v973, %v653
      %v990 = vmax.f32 %v974, %v655
      %v991 = vmax.f32 %v975, %v766
      %v992 = vmax.f32 %v976, %v768
      %v993 = vmax.f32 %v977, %v879
      %v994 = vmax.f32 %v978, %v881
      %996 = vset.pattern.permute.xlu0 0
      %997 = vperm.xlu0 %996, %v196
      %v998 = vpop.permute.xlu0 %997
      %1001 = vset.pattern.permute.xlu0 0
      %1002 = vperm.xlu0 %1001, %v197
      %v1003 = vpop.permute.xlu0 %1002
      %v1005 = vadd.f32 %v979, %v998
      %v1006 = vadd.f32 %v980, %v998
      %v1007 = vadd.f32 %v981, %v998
      %v1008 = vadd.f32 %v982, %v998
      %v1009 = vadd.f32 %v983, %v998
      %v1010 = vadd.f32 %v984, %v998
      %v1011 = vadd.f32 %v985, %v998
      %v1012 = vadd.f32 %v986, %v998
      %v1013 = vadd.f32 %v987, %v1003
      %v1014 = vadd.f32 %v988, %v1003
      %v1015 = vadd.f32 %v989, %v1003
      %v1016 = vadd.f32 %v990, %v1003
      %v1017 = vadd.f32 %v991, %v1003
      %v1018 = vadd.f32 %v992, %v1003
      %v1019 = vadd.f32 %v993, %v1003
      %v1020 = vadd.f32 %v994, %v1003
      %1021 = vst [vmem:[%s170] sm:$0xff] %v1005
      %1022 = vst [vmem:[%s170 + $0x8] sm:$0xff] %v1006
      %1023 = vst [vmem:[%s170 + $0x10] sm:$0xff] %v1007
      %1024 = vst [vmem:[%s170 + $0x18] sm:$0xff] %v1008
      %1025 = vst [vmem:[%s170 + $0x20] sm:$0xff] %v1009
      %1026 = vst [vmem:[%s170 + $0x28] sm:$0xff] %v1010
      %1027 = vst [vmem:[%s170 + $0x30] sm:$0xff] %v1011
      %vm1028 = vcmask 506880
      %1029 = vst.msk [vmem:[%s170 + $0x38] sm:$0xff] %vm1028, %v1012
      %1030 = vst [vmem:[%s170 + $0x40] sm:$0xff] %v1013
      %1031 = vst [vmem:[%s170 + $0x48] sm:$0xff] %v1014
      %1032 = vst [vmem:[%s170 + $0x50] sm:$0xff] %v1015
      %1033 = vst [vmem:[%s170 + $0x58] sm:$0xff] %v1016
      %1034 = vst [vmem:[%s170 + $0x60] sm:$0xff] %v1017
      %1035 = vst [vmem:[%s170 + $0x68] sm:$0xff] %v1018
      %1036 = vst [vmem:[%s170 + $0x70] sm:$0xff] %v1019
      %1037 = vst.msk [vmem:[%s170 + $0x78] sm:$0xff] %vm1028, %v1020
      %p1038 = scmp.lt.s32.totalorder %s14, 1
      %s1039 = scalar_select %p1038, %s14, 1
      %s1040 = smul.addr %s1039, 16
      %s1041 = smul.addr %s1040, 8
      %s1042 = scalar_lea.vmem %s3, %s1041
      // Predicated region
      $region33: #{cnn1d_forward.2} parent=31 // pred_check
        %p1043 = pneg %p100
      $region34: #{cnn1d_forward.2} parent=31 // pred_check_branch
        %1045 = sbr.rel (%p1043) target = $region36
      $region35: #{cnn1d_forward.2} parent=31 // pred_region
        _
      $region36: #{cnn1d_forward.2} parent=31 // pred_fallthru
        _
    $region32: #{cnn1d_forward.2} parent=5 // pred_fallthru
      _
    %p1046 = scmp.le.s32.totalorder 2, %s9
    // Predicated region
    $region37: #{cnn1d_forward.2} parent=5 // pred_check
      %p1047 = pneg %p1046
    $region38: #{cnn1d_forward.2} parent=5 // pred_check_branch
      %1049 = sbr.rel (%p1047) target = $region40
    $region39: #{cnn1d_forward.2} parent=5 // pred_region
      %s1050 = ssub.s32 %s9, 2
      // Predicated region
      $region41: #{cnn1d_forward.2} parent=39 // pred_check
        %p1051 = pneg %p106
      $region42: #{cnn1d_forward.2} parent=39 // pred_check_branch
        %1053 = sbr.rel (%p1051) target = $region44
      $region43: #{cnn1d_forward.2} parent=39 // pred_region
        %p1054 = scmp.lt.s32.totalorder %s15, 1
        %s1055 = scalar_select %p1054, %s15, 1
        %s1056 = smul.addr %s1055, 16
        %s1057 = smul.addr %s1056, 8
        %s1058 = scalar_lea.vmem %s3, %s1057
      $region44: #{cnn1d_forward.2} parent=39 // pred_fallthru
        _
    $region40: #{cnn1d_forward.2} parent=5 // pred_fallthru
      _
  $region6: #{cnn1d_forward.2} parent=0 // loop_footer
    %s13 = sadd.s32 1, %s9
  $region7: #{cnn1d_forward.2} parent=0 // loop_footer_branch
    %8 = sbr.rel target = $region3
  $region8: #{cnn1d_forward.2} parent=0 // loop_exit
    _

// kernel: cnn1d_forward.3
$region0: #{cnn1d_forward.3}
  #allocation0 [shape = 'u32[]', space=smem, size = 0x4, offset = 0x4, fixed_abs, tag = 'smem constant byte address 0x4 - core index']
  #allocation1 [shape = 'u32[144,128]{1,0:T(1,128)}', space=vmem, size = 0x12000, scoped, tag = 'internal scratch']
  %s0 = inlined_call_operand.vmem [shape: bf16[2,256,60], index: 0, kind: input, shape index: {}]
  %s1 = inlined_call_operand.vmem [shape: bf16[256,768], index: 1, kind: input, shape index: {}]
  %s2 = inlined_call_operand.vmem [shape: f32[32,1], index: 2, kind: input, shape index: {}]
  %s3 = inlined_call_operand.vmem [shape: bf16[64,512], index: 3, kind: input, shape index: {}]
  %s4 = inlined_call_operand.vmem [shape: f32[64,1], index: 4, kind: input, shape index: {}]
  %s5 = inlined_call_operand.vmem [shape: bf16[128,512], index: 5, kind: input, shape index: {}]
  %s6 = inlined_call_operand.vmem [shape: f32[128,1], index: 6, kind: input, shape index: {}]
  %s7 = inlined_call_operand.vmem [shape: bf16[8,128,128], index: 7, kind: input, shape index: {}]
  %s8 = inlined_call_operand.vmem [shape: f32[128,1], index: 8, kind: input, shape index: {}]
  %s9 = inlined_call_operand.vmem [shape: bf16[64,128], index: 9, kind: input, shape index: {}]
  %s10 = inlined_call_operand.vmem [shape: f32[64,1], index: 10, kind: input, shape index: {}]
  %s11 = inlined_call_operand.vmem [shape: f32[2,64,1], index: 11, kind: output, shape index: {}]
  %s12 = sld [smem:[#allocation0]]
  $region77: #{cnn1d_forward.3} parent=0
    _
  %s14 = ssub.s32 1, %s12
  %s15 = scalar_select 0, %s14, %s12
  loop: start=0, step=1, limit=4
  $region2: #{cnn1d_forward.3} parent=0 // loop_pre_header
    _
  $region3: #{cnn1d_forward.3} parent=0 // loop_header
    %s17 = sphi 0, %s21
    %p18 = scmp.ge.s32.totalorder %s17, 4
    %s27 = sphi 0, %s29
    %s30 = sphi 0, %s27
    %s31 = sphi 0, %s30
    %s47 = sphi 0, %s31
    %s51 = sphi 0, %s51
    %s53 = sphi 0, %s51
    %s54 = sphi 0, %s53
    %s68 = sphi 0, %s54
    %s72 = sphi 0, %s72
    %s74 = sphi 0, %s72
    %s75 = sphi 0, %s74
    %s89 = sphi 0, %s75
    %s93 = sphi 0, %s93
    %s95 = sphi 0, %s93
    %s96 = sphi 0, %s95
    %s110 = sphi 0, %s96
    %s114 = sphi 0, %s114
    %s116 = sphi 0, %s114
    %s117 = sphi 0, %s116
    %s131 = sphi 0, %s117
    %s135 = sphi 0, %s135
    %s137 = sphi 0, %s135
    %s138 = sphi 0, %s137
    %s152 = sphi 0, %s138
    %s156 = sphi 0, %s156
    %s158 = sphi 0, %s156
    %s159 = sphi 0, %s158
    %s173 = sphi 0, %s159
    %s177 = sphi 0, %s177
    %s179 = sphi 0, %s177
    %s180 = sphi 0, %s179
    %s194 = sphi 0, %s180
    %s198 = sphi 0, %s198
    %s200 = sphi 0, %s198
    %s201 = sphi 0, %s200
    %s215 = sphi 0, %s201
    %s219 = sphi 0, %s219
    %s221 = sphi 0, %s219
    %s222 = sphi 0, %s221
    %s236 = sphi 0, %s222
    %s240 = sphi 0, %s240
    %s242 = sphi 0, %s240
    %s243 = sphi 0, %s242
    %s257 = sphi 0, %s243
    %s263 = sphi 0, %s265
    %s266 = sphi 0, %s263
    %s267 = sphi 0, %s266
    %s283 = sphi 0, %s267
  $region4: #{cnn1d_forward.3} parent=0 // loop_header_branch
    %20 = sbr.rel (%p18) target = $region8
  $region5: #{cnn1d_forward.3} parent=0 // loop_body
    %s22 = ssub.s32 %s17, 1
    %s23 = ssub.s32 %s17, 2
    %s24 = sadd.s32 %s17, 1
    %s25 = ssub.s32 %s17, %s24
    %p26 = scmp.eq.s32.totalorder %s25, 0
    %s28 = sadd.s32 %s27, 1
    %s29 = scalar_select %p26, %s27, %s28
    %p32 = pneg %p26
    %p33 = scmp.eq.s32.totalorder %s17, 1
    %p34 = por %p32, %p33
    %p35 = scmp.ne.s32.totalorder %s27, %s30
    %p36 = scmp.eq.s32.totalorder %s17, 0
    %p37 = por %p35, %p36
    %p38 = scmp.ne.s32.totalorder %s27, %s30
    %p39 = scmp.eq.s32.totalorder %s22, 1
    %p40 = por %p38, %p39
    %p41 = scmp.ne.s32.totalorder %s30, %s31
    %p42 = scmp.eq.s32.totalorder %s22, 0
    %p43 = por %p41, %p42
    %p44 = scmp.ne.s32.totalorder %s30, %s31
    %p45 = scmp.eq.s32.totalorder %s23, 1
    %p46 = por %p44, %p45
    %p48 = scmp.ne.s32.totalorder %s31, %s47
    %p49 = scmp.eq.s32.totalorder %s23, 0
    %p50 = por %p48, %p49
    %s52 = sadd.s32 %s51, 1
    %p55 = scmp.eq.s32.totalorder %s17, 1
    %p56 = scmp.ne.s32.totalorder %s51, %s53
    %p57 = scmp.eq.s32.totalorder %s17, 0
    %p58 = por %p56, %p57
    %p59 = scmp.ne.s32.totalorder %s51, %s53
    %p60 = scmp.eq.s32.totalorder %s22, 1
    %p61 = por %p59, %p60
    %p62 = scmp.ne.s32.totalorder %s53, %s54
    %p63 = scmp.eq.s32.totalorder %s22, 0
    %p64 = por %p62, %p63
    %p65 = scmp.ne.s32.totalorder %s53, %s54
    %p66 = scmp.eq.s32.totalorder %s23, 1
    %p67 = por %p65, %p66
    %p69 = scmp.ne.s32.totalorder %s54, %s68
    %p70 = scmp.eq.s32.totalorder %s23, 0
    %p71 = por %p69, %p70
    %s73 = sadd.s32 %s72, 1
    %p76 = scmp.eq.s32.totalorder %s17, 1
    %p77 = scmp.ne.s32.totalorder %s72, %s74
    %p78 = scmp.eq.s32.totalorder %s17, 0
    %p79 = por %p77, %p78
    %p80 = scmp.ne.s32.totalorder %s72, %s74
    %p81 = scmp.eq.s32.totalorder %s22, 1
    %p82 = por %p80, %p81
    %p83 = scmp.ne.s32.totalorder %s74, %s75
    %p84 = scmp.eq.s32.totalorder %s22, 0
    %p85 = por %p83, %p84
    %p86 = scmp.ne.s32.totalorder %s74, %s75
    %p87 = scmp.eq.s32.totalorder %s23, 1
    %p88 = por %p86, %p87
    %p90 = scmp.ne.s32.totalorder %s75, %s89
    %p91 = scmp.eq.s32.totalorder %s23, 0
    %p92 = por %p90, %p91
    %s94 = sadd.s32 %s93, 1
    %p97 = scmp.eq.s32.totalorder %s17, 1
    %p98 = scmp.ne.s32.totalorder %s93, %s95
    %p99 = scmp.eq.s32.totalorder %s17, 0
    %p100 = por %p98, %p99
    %p101 = scmp.ne.s32.totalorder %s93, %s95
    %p102 = scmp.eq.s32.totalorder %s22, 1
    %p103 = por %p101, %p102
    %p104 = scmp.ne.s32.totalorder %s95, %s96
    %p105 = scmp.eq.s32.totalorder %s22, 0
    %p106 = por %p104, %p105
    %p107 = scmp.ne.s32.totalorder %s95, %s96
    %p108 = scmp.eq.s32.totalorder %s23, 1
    %p109 = por %p107, %p108
    %p111 = scmp.ne.s32.totalorder %s96, %s110
    %p112 = scmp.eq.s32.totalorder %s23, 0
    %p113 = por %p111, %p112
    %s115 = sadd.s32 %s114, 1
    %p118 = scmp.eq.s32.totalorder %s17, 1
    %p119 = scmp.ne.s32.totalorder %s114, %s116
    %p120 = scmp.eq.s32.totalorder %s17, 0
    %p121 = por %p119, %p120
    %p122 = scmp.ne.s32.totalorder %s114, %s116
    %p123 = scmp.eq.s32.totalorder %s22, 1
    %p124 = por %p122, %p123
    %p125 = scmp.ne.s32.totalorder %s116, %s117
    %p126 = scmp.eq.s32.totalorder %s22, 0
    %p127 = por %p125, %p126
    %p128 = scmp.ne.s32.totalorder %s116, %s117
    %p129 = scmp.eq.s32.totalorder %s23, 1
    %p130 = por %p128, %p129
    %p132 = scmp.ne.s32.totalorder %s117, %s131
    %p133 = scmp.eq.s32.totalorder %s23, 0
    %p134 = por %p132, %p133
    %s136 = sadd.s32 %s135, 1
    %p139 = scmp.eq.s32.totalorder %s17, 1
    %p140 = scmp.ne.s32.totalorder %s135, %s137
    %p141 = scmp.eq.s32.totalorder %s17, 0
    %p142 = por %p140, %p141
    %p143 = scmp.ne.s32.totalorder %s135, %s137
    %p144 = scmp.eq.s32.totalorder %s22, 1
    %p145 = por %p143, %p144
    %p146 = scmp.ne.s32.totalorder %s137, %s138
    %p147 = scmp.eq.s32.totalorder %s22, 0
    %p148 = por %p146, %p147
    %p149 = scmp.ne.s32.totalorder %s137, %s138
    %p150 = scmp.eq.s32.totalorder %s23, 1
    %p151 = por %p149, %p150
    %p153 = scmp.ne.s32.totalorder %s138, %s152
    %p154 = scmp.eq.s32.totalorder %s23, 0
    %p155 = por %p153, %p154
    %s157 = sadd.s32 %s156, 1
    %p160 = scmp.eq.s32.totalorder %s17, 1
    %p161 = scmp.ne.s32.totalorder %s156, %s158
    %p162 = scmp.eq.s32.totalorder %s17, 0
    %p163 = por %p161, %p162
    %p164 = scmp.ne.s32.totalorder %s156, %s158
    %p165 = scmp.eq.s32.totalorder %s22, 1
    %p166 = por %p164, %p165
    %p167 = scmp.ne.s32.totalorder %s158, %s159
    %p168 = scmp.eq.s32.totalorder %s22, 0
    %p169 = por %p167, %p168
    %p170 = scmp.ne.s32.totalorder %s158, %s159
    %p171 = scmp.eq.s32.totalorder %s23, 1
    %p172 = por %p170, %p171
    %p174 = scmp.ne.s32.totalorder %s159, %s173
    %p175 = scmp.eq.s32.totalorder %s23, 0
    %p176 = por %p174, %p175
    %s178 = sadd.s32 %s177, 1
    %p181 = scmp.eq.s32.totalorder %s17, 1
    %p182 = scmp.ne.s32.totalorder %s177, %s179
    %p183 = scmp.eq.s32.totalorder %s17, 0
    %p184 = por %p182, %p183
    %p185 = scmp.ne.s32.totalorder %s177, %s179
    %p186 = scmp.eq.s32.totalorder %s22, 1
    %p187 = por %p185, %p186
    %p188 = scmp.ne.s32.totalorder %s179, %s180
    %p189 = scmp.eq.s32.totalorder %s22, 0
    %p190 = por %p188, %p189
    %p191 = scmp.ne.s32.totalorder %s179, %s180
    %p192 = scmp.eq.s32.totalorder %s23, 1
    %p193 = por %p191, %p192
    %p195 = scmp.ne.s32.totalorder %s180, %s194
    %p196 = scmp.eq.s32.totalorder %s23, 0
    %p197 = por %p195, %p196
    %s199 = sadd.s32 %s198, 1
    %p202 = scmp.eq.s32.totalorder %s17, 1
    %p203 = scmp.ne.s32.totalorder %s198, %s200
    %p204 = scmp.eq.s32.totalorder %s17, 0
    %p205 = por %p203, %p204
    %p206 = scmp.ne.s32.totalorder %s198, %s200
    %p207 = scmp.eq.s32.totalorder %s22, 1
    %p208 = por %p206, %p207
    %p209 = scmp.ne.s32.totalorder %s200, %s201
    %p210 = scmp.eq.s32.totalorder %s22, 0
    %p211 = por %p209, %p210
    %p212 = scmp.ne.s32.totalorder %s200, %s201
    %p213 = scmp.eq.s32.totalorder %s23, 1
    %p214 = por %p212, %p213
    %p216 = scmp.ne.s32.totalorder %s201, %s215
    %p217 = scmp.eq.s32.totalorder %s23, 0
    %p218 = por %p216, %p217
    %s220 = sadd.s32 %s219, 1
    %p223 = scmp.eq.s32.totalorder %s17, 1
    %p224 = scmp.ne.s32.totalorder %s219, %s221
    %p225 = scmp.eq.s32.totalorder %s17, 0
    %p226 = por %p224, %p225
    %p227 = scmp.ne.s32.totalorder %s219, %s221
    %p228 = scmp.eq.s32.totalorder %s22, 1
    %p229 = por %p227, %p228
    %p230 = scmp.ne.s32.totalorder %s221, %s222
    %p231 = scmp.eq.s32.totalorder %s22, 0
    %p232 = por %p230, %p231
    %p233 = scmp.ne.s32.totalorder %s221, %s222
    %p234 = scmp.eq.s32.totalorder %s23, 1
    %p235 = por %p233, %p234
    %p237 = scmp.ne.s32.totalorder %s222, %s236
    %p238 = scmp.eq.s32.totalorder %s23, 0
    %p239 = por %p237, %p238
    %s241 = sadd.s32 %s240, 1
    %p244 = scmp.eq.s32.totalorder %s17, 1
    %p245 = scmp.ne.s32.totalorder %s240, %s242
    %p246 = scmp.eq.s32.totalorder %s17, 0
    %p247 = por %p245, %p246
    %p248 = scmp.ne.s32.totalorder %s240, %s242
    %p249 = scmp.eq.s32.totalorder %s22, 1
    %p250 = por %p248, %p249
    %p251 = scmp.ne.s32.totalorder %s242, %s243
    %p252 = scmp.eq.s32.totalorder %s22, 0
    %p253 = por %p251, %p252
    %p254 = scmp.ne.s32.totalorder %s242, %s243
    %p255 = scmp.eq.s32.totalorder %s23, 1
    %p256 = por %p254, %p255
    %p258 = scmp.ne.s32.totalorder %s243, %s257
    %p259 = scmp.eq.s32.totalorder %s23, 0
    %p260 = por %p258, %p259
    %s261 = ssub.s32 %s17, %s24
    %p262 = scmp.eq.s32.totalorder %s261, 0
    %s264 = sadd.s32 %s263, 1
    %s265 = scalar_select %p262, %s263, %s264
    %p268 = pneg %p262
    %p269 = scmp.eq.s32.totalorder %s17, 1
    %p270 = por %p268, %p269
    %p271 = scmp.ne.s32.totalorder %s263, %s266
    %p272 = scmp.eq.s32.totalorder %s17, 0
    %p273 = por %p271, %p272
    %p274 = scmp.ne.s32.totalorder %s263, %s266
    %p275 = scmp.eq.s32.totalorder %s22, 1
    %p276 = por %p274, %p275
    %p277 = scmp.ne.s32.totalorder %s266, %s267
    %p278 = scmp.eq.s32.totalorder %s22, 0
    %p279 = por %p277, %p278
    %p280 = scmp.ne.s32.totalorder %s266, %s267
    %p281 = scmp.eq.s32.totalorder %s23, 1
    %p282 = por %p280, %p281
    %p284 = scmp.ne.s32.totalorder %s267, %s283
    %p285 = scmp.eq.s32.totalorder %s23, 0
    %p286 = por %p284, %p285
    %p287 = scmp.le.s32.totalorder 1, %s17
    %p288 = scmp.lt.s32.totalorder %s17, 3
    %p289 = pnand %p287, %p288
    %p290 = pneg %p289
    // Predicated region
    $region9: #{cnn1d_forward.3} parent=5 // pred_check
      _
    $region10: #{cnn1d_forward.3} parent=5 // pred_check_branch
      %292 = sbr.rel (%p289) target = $region12
    $region11: #{cnn1d_forward.3} parent=5 // pred_region
      %s293 = ssub.s32 %s17, 1
      // Predicated region
      $region13: #{cnn1d_forward.3} parent=11 // pred_check
        %p294 = pneg %p64
      $region14: #{cnn1d_forward.3} parent=11 // pred_check_branch
        %296 = sbr.rel (%p294) target = $region16
      $region15: #{cnn1d_forward.3} parent=11 // pred_region
        _
      $region16: #{cnn1d_forward.3} parent=11 // pred_fallthru
        _
      // Predicated region
      $region17: #{cnn1d_forward.3} parent=11 // pred_check
        %p297 = pneg %p85
      $region18: #{cnn1d_forward.3} parent=11 // pred_check_branch
        %299 = sbr.rel (%p297) target = $region20
      $region19: #{cnn1d_forward.3} parent=11 // pred_region
        _
      $region20: #{cnn1d_forward.3} parent=11 // pred_fallthru
        _
      // Predicated region
      $region21: #{cnn1d_forward.3} parent=11 // pred_check
        %p300 = pneg %p106
      $region22: #{cnn1d_forward.3} parent=11 // pred_check_branch
        %302 = sbr.rel (%p300) target = $region24
      $region23: #{cnn1d_forward.3} parent=11 // pred_region
        _
      $region24: #{cnn1d_forward.3} parent=11 // pred_fallthru
        _
      // Predicated region
      $region25: #{cnn1d_forward.3} parent=11 // pred_check
        %p303 = pneg %p127
      $region26: #{cnn1d_forward.3} parent=11 // pred_check_branch
        %305 = sbr.rel (%p303) target = $region28
      $region27: #{cnn1d_forward.3} parent=11 // pred_region
        _
      $region28: #{cnn1d_forward.3} parent=11 // pred_fallthru
        _
      // Predicated region
      $region29: #{cnn1d_forward.3} parent=11 // pred_check
        %p306 = pneg %p148
      $region30: #{cnn1d_forward.3} parent=11 // pred_check_branch
        %308 = sbr.rel (%p306) target = $region32
      $region31: #{cnn1d_forward.3} parent=11 // pred_region
        _
      $region32: #{cnn1d_forward.3} parent=11 // pred_fallthru
        _
      // Predicated region
      $region33: #{cnn1d_forward.3} parent=11 // pred_check
        %p309 = pneg %p169
      $region34: #{cnn1d_forward.3} parent=11 // pred_check_branch
        %311 = sbr.rel (%p309) target = $region36
      $region35: #{cnn1d_forward.3} parent=11 // pred_region
        _
      $region36: #{cnn1d_forward.3} parent=11 // pred_fallthru
        _
      // Predicated region
      $region37: #{cnn1d_forward.3} parent=11 // pred_check
        %p312 = pneg %p190
      $region38: #{cnn1d_forward.3} parent=11 // pred_check_branch
        %314 = sbr.rel (%p312) target = $region40
      $region39: #{cnn1d_forward.3} parent=11 // pred_region
        _
      $region40: #{cnn1d_forward.3} parent=11 // pred_fallthru
        _
      // Predicated region
      $region41: #{cnn1d_forward.3} parent=11 // pred_check
        %p315 = pneg %p211
      $region42: #{cnn1d_forward.3} parent=11 // pred_check_branch
        %317 = sbr.rel (%p315) target = $region44
      $region43: #{cnn1d_forward.3} parent=11 // pred_region
        _
      $region44: #{cnn1d_forward.3} parent=11 // pred_fallthru
        _
      // Predicated region
      $region45: #{cnn1d_forward.3} parent=11 // pred_check
        %p318 = pneg %p232
      $region46: #{cnn1d_forward.3} parent=11 // pred_check_branch
        %320 = sbr.rel (%p318) target = $region48
      $region47: #{cnn1d_forward.3} parent=11 // pred_region
        _
      $region48: #{cnn1d_forward.3} parent=11 // pred_fallthru
        _
      // Predicated region
      $region49: #{cnn1d_forward.3} parent=11 // pred_check
        %p321 = pneg %p253
      $region50: #{cnn1d_forward.3} parent=11 // pred_check_branch
        %323 = sbr.rel (%p321) target = $region52
      $region51: #{cnn1d_forward.3} parent=11 // pred_region
        _
      $region52: #{cnn1d_forward.3} parent=11 // pred_fallthru
        _
    $region12: #{cnn1d_forward.3} parent=5 // pred_fallthru
      _
    %p324 = scmp.lt.s32.totalorder %s17, 2
    // Predicated region
    $region53: #{cnn1d_forward.3} parent=5 // pred_check
      %p325 = pneg %p324
    $region54: #{cnn1d_forward.3} parent=5 // pred_check_branch
      %327 = sbr.rel (%p325) target = $region56
    $region55: #{cnn1d_forward.3} parent=5 // pred_region
      // Predicated region
      $region57: #{cnn1d_forward.3} parent=55 // pred_check
        %p328 = pneg %p37
      $region58: #{cnn1d_forward.3} parent=55 // pred_check_branch
        %330 = sbr.rel (%p328) target = $region60
      $region59: #{cnn1d_forward.3} parent=55 // pred_region
        %p331 = scmp.lt.s32.totalorder %s17, 1
        %s332 = scalar_select %p331, %s17, 1
        %s333 = smul.addr %s332, 32
        %s334 = smul.addr %s333, 4
        %s335 = scalar_lea.vmem %s0, %s334
      $region60: #{cnn1d_forward.3} parent=55 // pred_fallthru
        _
    $region56: #{cnn1d_forward.3} parent=5 // pred_fallthru
      _
    %p336 = scmp.le.s32.totalorder 1, %s17
    %p337 = scmp.lt.s32.totalorder %s17, 3
    %p338 = pnand %p336, %p337
    %p339 = pneg %p338
    // Predicated region
    $region61: #{cnn1d_forward.3} parent=5 // pred_check
      _
    $region62: #{cnn1d_forward.3} parent=5 // pred_check_branch
      %341 = sbr.rel (%p338) target = $region64
    $region63: #{cnn1d_forward.3} parent=5 // pred_region
      %s342 = ssub.s32 %s17, 1
      %p343 = scmp.lt.s32.totalorder %s22, 1
      %s344 = scalar_select %p343, %s22, 1
      %s345 = smul.addr %s344, 32
      %s346 = smul.addr %s345, 4
      %s347 = scalar_lea.vmem %s0, %s346
      %p348 = pneg %p43
      %p349 = pneg %p40
      %p350 = pneg %p64
      %p351 = pneg %p61
      %p352 = pneg %p85
      %p353 = pneg %p82
      %p354 = pneg %p106
      %p355 = pneg %p103
      %p356 = pneg %p127
      %p357 = pneg %p124
      %p358 = pneg %p148
      %p359 = pneg %p145
      %p360 = pneg %p169
      %p361 = pneg %p166
      %p362 = pneg %p190
      %p363 = pneg %p187
      %p364 = pneg %p211
      %p365 = pneg %p208
      %p366 = pneg %p232
      %p367 = pneg %p229
      %p368 = pneg %p253
      %p369 = pneg %p250
      %p370 = pneg %p279
      %p371 = pneg %p276
      %p372 = scmp.lt.s32.totalorder %s22, 1
      %s373 = scalar_select %p372, %s22, 1
      %s374 = smul.addr %s373, 8
      %s375 = smul.addr %s374, 8
      %s376 = scalar_lea.vmem %s11, %s375
      %p377 = scmp.lt.s32.totalorder %s22, 1
      %s378 = scalar_select %p377, %s22, 1
      %s379 = smul.addr %s378, 32
      %s380 = smul.addr %s379, 4
      %s381 = scalar_lea.vmem %s0, %s380
      %p382 = scmp.lt.s32.totalorder %s22, 1
      %s383 = scalar_select %p382, %s22, 1
      %s384 = smul.addr %s383, 8
      %s385 = smul.addr %s384, 8
      %s386 = scalar_lea.vmem %s11, %s385
      %v388 = vld [vmem:[%s381] sm:$0xf]
      %v389 = vld [vmem:[%s381 + $0x4] sm:$0xf]
      %v390 = vld [vmem:[%s381 + $0x8] sm:$0xf]
      %v391 = vld [vmem:[%s381 + $0xc] sm:$0xf]
      %v392 = vld [vmem:[%s381 + $0x10] sm:$0xf]
      %v393 = vld [vmem:[%s381 + $0x14] sm:$0xf]
      %v394 = vld [vmem:[%s381 + $0x18] sm:$0xf]
      %v395 = vld [vmem:[%s381 + $0x1c] sm:$0xf]
      %v396 = vld [vmem:[%s381 + $0x20] sm:$0xf]
      %v397 = vld [vmem:[%s381 + $0x24] sm:$0xf]
      %v398 = vld [vmem:[%s381 + $0x28] sm:$0xf]
      %v399 = vld [vmem:[%s381 + $0x2c] sm:$0xf]
      %v400 = vld [vmem:[%s381 + $0x30] sm:$0xf]
      %v401 = vld [vmem:[%s381 + $0x34] sm:$0xf]
      %v402 = vld [vmem:[%s381 + $0x38] sm:$0xf]
      %v403 = vld [vmem:[%s381 + $0x3c] sm:$0xf]
      %v404 = vld [vmem:[%s381 + $0x40] sm:$0xf]
      %v405 = vld [vmem:[%s381 + $0x44] sm:$0xf]
      %v406 = vld [vmem:[%s381 + $0x48] sm:$0xf]
      %v407 = vld [vmem:[%s381 + $0x4c] sm:$0xf]
      %v408 = vld [vmem:[%s381 + $0x50] sm:$0xf]
      %v409 = vld [vmem:[%s381 + $0x54] sm:$0xf]
      %v410 = vld [vmem:[%s381 + $0x58] sm:$0xf]
      %v411 = vld [vmem:[%s381 + $0x5c] sm:$0xf]
      %v412 = vld [vmem:[%s381 + $0x60] sm:$0xf]
      %v413 = vld [vmem:[%s381 + $0x64] sm:$0xf]
      %v414 = vld [vmem:[%s381 + $0x68] sm:$0xf]
      %v415 = vld [vmem:[%s381 + $0x6c] sm:$0xf]
      %v416 = vld [vmem:[%s381 + $0x70] sm:$0xf]
      %v417 = vld [vmem:[%s381 + $0x74] sm:$0xf]
      %v418 = vld [vmem:[%s381 + $0x78] sm:$0xf]
      %v419 = vld [vmem:[%s381 + $0x7c] sm:$0xf]
      %v420 = vld [vmem:[%s1] sm:$0xff]
      %v421 = vld [vmem:[%s1 + $0x8] sm:$0xff]
      %v422 = vld [vmem:[%s1 + $0x10] sm:$0xff]
      %v423 = vld [vmem:[%s1 + $0x18] sm:$0xff]
      %v424 = vld [vmem:[%s1 + $0x20] sm:$0xff]
      %v425 = vld [vmem:[%s1 + $0x28] sm:$0xff]
      %v426 = vld [vmem:[%s1 + $0x30] sm:$0xff]
      %v427 = vld [vmem:[%s1 + $0x38] sm:$0xff]
      %v428 = vld [vmem:[%s1 + $0x40] sm:$0xff]
      %v429 = vld [vmem:[%s1 + $0x48] sm:$0xff]
      %v430 = vld [vmem:[%s1 + $0x50] sm:$0xff]
      %v431 = vld [vmem:[%s1 + $0x58] sm:$0xff]
      %v432 = vld [vmem:[%s1 + $0x60] sm:$0xff]
      %v433 = vld [vmem:[%s1 + $0x68] sm:$0xff]
      %v434 = vld [vmem:[%s1 + $0x70] sm:$0xff]
      %v435 = vld [vmem:[%s1 + $0x78] sm:$0xff]
      %v436 = vld [vmem:[%s1 + $0x80] sm:$0xff]
      %v437 = vld [vmem:[%s1 + $0x88] sm:$0xff]
      %v438 = vld [vmem:[%s1 + $0x90] sm:$0xff]
      %v439 = vld [vmem:[%s1 + $0x98] sm:$0xff]
      %v440 = vld [vmem:[%s1 + $0xa0] sm:$0xff]
      %v441 = vld [vmem:[%s1 + $0xa8] sm:$0xff]
      %v442 = vld [vmem:[%s1 + $0xb0] sm:$0xff]
      %v443 = vld [vmem:[%s1 + $0xb8] sm:$0xff]
      %v444 = vld [vmem:[%s1 + $0xc0] sm:$0xff]
      %v445 = vld [vmem:[%s1 + $0xc8] sm:$0xff]
      %v446 = vld [vmem:[%s1 + $0xd0] sm:$0xff]
      %v447 = vld [vmem:[%s1 + $0xd8] sm:$0xff]
      %v448 = vld [vmem:[%s1 + $0xe0] sm:$0xff]
      %v449 = vld [vmem:[%s1 + $0xe8] sm:$0xff]
      %v450 = vld [vmem:[%s1 + $0xf0] sm:$0xff]
      %v451 = vld [vmem:[%s1 + $0xf8] sm:$0xff]
      %v452 = vld [vmem:[%s1 + $0x100] sm:$0xff]
      %v453 = vld [vmem:[%s1 + $0x108] sm:$0xff]
      %v454 = vld [vmem:[%s1 + $0x110] sm:$0xff]
      %v455 = vld [vmem:[%s1 + $0x118] sm:$0xff]
      %v456 = vld [vmem:[%s1 + $0x120] sm:$0xff]
      %v457 = vld [vmem:[%s1 + $0x128] sm:$0xff]
      %v458 = vld [vmem:[%s1 + $0x130] sm:$0xff]
      %v459 = vld [vmem:[%s1 + $0x138] sm:$0xff]
      %v460 = vld [vmem:[%s1 + $0x140] sm:$0xff]
      %v461 = vld [vmem:[%s1 + $0x148] sm:$0xff]
      %v462 = vld [vmem:[%s1 + $0x150] sm:$0xff]
      %v463 = vld [vmem:[%s1 + $0x158] sm:$0xff]
      %v464 = vld [vmem:[%s1 + $0x160] sm:$0xff]
      %v465 = vld [vmem:[%s1 + $0x168] sm:$0xff]
      %v466 = vld [vmem:[%s1 + $0x170] sm:$0xff]
      %v467 = vld [vmem:[%s1 + $0x178] sm:$0xff]
      %v468 = vld [vmem:[%s1 + $0x180] sm:$0xff]
      %v469 = vld [vmem:[%s1 + $0x188] sm:$0xff]
      %v470 = vld [vmem:[%s1 + $0x190] sm:$0xff]
      %v471 = vld [vmem:[%s1 + $0x198] sm:$0xff]
      %v472 = vld [vmem:[%s1 + $0x1a0] sm:$0xff]
      %v473 = vld [vmem:[%s1 + $0x1a8] sm:$0xff]
      %v474 = vld [vmem:[%s1 + $0x1b0] sm:$0xff]
      %v475 = vld [vmem:[%s1 + $0x1b8] sm:$0xff]
      %v476 = vld [vmem:[%s1 + $0x1c0] sm:$0xff]
      %v477 = vld [vmem:[%s1 + $0x1c8] sm:$0xff]
      %v478 = vld [vmem:[%s1 + $0x1d0] sm:$0xff]
      %v479 = vld [vmem:[%s1 + $0x1d8] sm:$0xff]
      %v480 = vld [vmem:[%s1 + $0x1e0] sm:$0xff]
      %v481 = vld [vmem:[%s1 + $0x1e8] sm:$0xff]
      %v482 = vld [vmem:[%s1 + $0x1f0] sm:$0xff]
      %v483 = vld [vmem:[%s1 + $0x1f8] sm:$0xff]
      %v484 = vld [vmem:[%s1 + $0x200] sm:$0xff]
      %v485 = vld [vmem:[%s1 + $0x208] sm:$0xff]
      %v486 = vld [vmem:[%s1 + $0x210] sm:$0xff]
      %v487 = vld [vmem:[%s1 + $0x218] sm:$0xff]
      %v488 = vld [vmem:[%s1 + $0x220] sm:$0xff]
      %v489 = vld [vmem:[%s1 + $0x228] sm:$0xff]
      %v490 = vld [vmem:[%s1 + $0x230] sm:$0xff]
      %v491 = vld [vmem:[%s1 + $0x238] sm:$0xff]
      %v492 = vld [vmem:[%s1 + $0x240] sm:$0xff]
      %v493 = vld [vmem:[%s1 + $0x248] sm:$0xff]
      %v494 = vld [vmem:[%s1 + $0x250] sm:$0xff]
      %v495 = vld [vmem:[%s1 + $0x258] sm:$0xff]
      %v496 = vld [vmem:[%s1 + $0x260] sm:$0xff]
      %v497 = vld [vmem:[%s1 + $0x268] sm:$0xff]
      %v498 = vld [vmem:[%s1 + $0x270] sm:$0xff]
      %v499 = vld [vmem:[%s1 + $0x278] sm:$0xff]
      %v500 = vld [vmem:[%s1 + $0x280] sm:$0xff]
      %v501 = vld [vmem:[%s1 + $0x288] sm:$0xff]
      %v502 = vld [vmem:[%s1 + $0x290] sm:$0xff]
      %v503 = vld [vmem:[%s1 + $0x298] sm:$0xff]
      %v504 = vld [vmem:[%s1 + $0x2a0] sm:$0xff]
      %v505 = vld [vmem:[%s1 + $0x2a8] sm:$0xff]
      %v506 = vld [vmem:[%s1 + $0x2b0] sm:$0xff]
      %v507 = vld [vmem:[%s1 + $0x2b8] sm:$0xff]
      %v508 = vld [vmem:[%s1 + $0x2c0] sm:$0xff]
      %v509 = vld [vmem:[%s1 + $0x2c8] sm:$0xff]
      %v510 = vld [vmem:[%s1 + $0x2d0] sm:$0xff]
      %v511 = vld [vmem:[%s1 + $0x2d8] sm:$0xff]
      %v512 = vld [vmem:[%s1 + $0x2e0] sm:$0xff]
      %v513 = vld [vmem:[%s1 + $0x2e8] sm:$0xff]
      %v514 = vld [vmem:[%s1 + $0x2f0] sm:$0xff]
      %v515 = vld [vmem:[%s1 + $0x2f8] sm:$0xff]
      %v516 = vld [vmem:[%s2] sm:$0xff]
      %v517 = vld [vmem:[%s2 + $0x8] sm:$0xff]
      %v518 = vld [vmem:[%s2 + $0x10] sm:$0xff]
      %v519 = vld [vmem:[%s2 + $0x18] sm:$0xff]
      %v552 = vunpack.c.l.b16 %v388
      %v553 = vunpack.c.l.b16 %v389
      %v554 = vunpack.c.l.b16 %v390
      %v555 = vunpack.c.l.b16 %v391
      %v556 = vunpack.c.l.b16 %v392
      %v557 = vunpack.c.l.b16 %v393
      %v558 = vunpack.c.l.b16 %v394
      %v559 = vunpack.c.l.b16 %v395
      %v560 = vunpack.c.l.b16 %v396
      %v561 = vunpack.c.l.b16 %v397
      %v562 = vunpack.c.l.b16 %v398
      %v563 = vunpack.c.l.b16 %v399
      %v564 = vunpack.c.l.b16 %v400
      %v565 = vunpack.c.l.b16 %v401
      %v566 = vunpack.c.l.b16 %v402
      %v567 = vunpack.c.l.b16 %v403
      %v568 = vunpack.c.l.b16 %v404
      %v569 = vunpack.c.l.b16 %v405
      %v570 = vunpack.c.l.b16 %v406
      %v571 = vunpack.c.l.b16 %v407
      %v572 = vunpack.c.l.b16 %v408
      %v573 = vunpack.c.l.b16 %v409
      %v574 = vunpack.c.l.b16 %v410
      %v575 = vunpack.c.l.b16 %v411
      %v576 = vunpack.c.l.b16 %v412
      %v577 = vunpack.c.l.b16 %v413
      %v578 = vunpack.c.l.b16 %v414
      %v579 = vunpack.c.l.b16 %v415
      %v580 = vunpack.c.l.b16 %v416
      %v581 = vunpack.c.l.b16 %v417
      %v582 = vunpack.c.l.b16 %v418
      %v583 = vunpack.c.l.b16 %v419
      %v584 = vpack.c.b16 %v553, %v552
      %v585 = vpack.c.b16 %v555, %v554
      %v586 = vpack.c.b16 %v557, %v556
      %v587 = vpack.c.b16 %v559, %v558
      %v588 = vpack.c.b16 %v561, %v560
      %v589 = vpack.c.b16 %v563, %v562
      %v590 = vpack.c.b16 %v565, %v564
      %v591 = vpack.c.b16 %v567, %v566
      %v592 = vpack.c.b16 %v569, %v568
      %v593 = vpack.c.b16 %v571, %v570
      %v594 = vpack.c.b16 %v573, %v572
      %v595 = vpack.c.b16 %v575, %v574
      %v596 = vpack.c.b16 %v577, %v576
      %v597 = vpack.c.b16 %v579, %v578
      %v598 = vpack.c.b16 %v581, %v580
      %v599 = vpack.c.b16 %v583, %v582
      %616 = vrot.lane.b32.xlu0 %v584, 127
      %v617 = vpop.permute.xlu0 %616
      %618 = vrot.lane.b32.xlu0 %v585, 127
      %v619 = vpop.permute.xlu0 %618
      %620 = vrot.lane.b32.xlu0 %v586, 127
      %v621 = vpop.permute.xlu0 %620
      %622 = vrot.lane.b32.xlu0 %v587, 127
      %v623 = vpop.permute.xlu0 %622
      %624 = vrot.lane.b32.xlu0 %v588, 127
      %v625 = vpop.permute.xlu0 %624
      %626 = vrot.lane.b32.xlu0 %v589, 127
      %v627 = vpop.permute.xlu0 %626
      %628 = vrot.lane.b32.xlu0 %v590, 127
      %v629 = vpop.permute.xlu0 %628
      %630 = vrot.lane.b32.xlu0 %v591, 127
      %v631 = vpop.permute.xlu0 %630
      %632 = vrot.lane.b32.xlu0 %v592, 127
      %v633 = vpop.permute.xlu0 %632
      %634 = vrot.lane.b32.xlu0 %v593, 127
      %v635 = vpop.permute.xlu0 %634
      %636 = vrot.lane.b32.xlu0 %v594, 127
      %v637 = vpop.permute.xlu0 %636
      %638 = vrot.lane.b32.xlu0 %v595, 127
      %v639 = vpop.permute.xlu0 %638
      %640 = vrot.lane.b32.xlu0 %v596, 127
      %v641 = vpop.permute.xlu0 %640
      %642 = vrot.lane.b32.xlu0 %v597, 127
      %v643 = vpop.permute.xlu0 %642
      %644 = vrot.lane.b32.xlu0 %v598, 127
      %v645 = vpop.permute.xlu0 %644
      %646 = vrot.lane.b32.xlu0 %v599, 127
      %v647 = vpop.permute.xlu0 %646
      %664 = vrot.lane.b32.xlu0 %v584, 126
      %v665 = vpop.permute.xlu0 %664
      %666 = vrot.lane.b32.xlu0 %v585, 126
      %v667 = vpop.permute.xlu0 %666
      %668 = vrot.lane.b32.xlu0 %v586, 126
      %v669 = vpop.permute.xlu0 %668
      %670 = vrot.lane.b32.xlu0 %v587, 126
      %v671 = vpop.permute.xlu0 %670
      %672 = vrot.lane.b32.xlu0 %v588, 126
      %v673 = vpop.permute.xlu0 %672
      %674 = vrot.lane.b32.xlu0 %v589, 126
      %v675 = vpop.permute.xlu0 %674
      %676 = vrot.lane.b32.xlu0 %v590, 126
      %v677 = vpop.permute.xlu0 %676
      %678 = vrot.lane.b32.xlu0 %v591, 126
      %v679 = vpop.permute.xlu0 %678
      %680 = vrot.lane.b32.xlu0 %v592, 126
      %v681 = vpop.permute.xlu0 %680
      %682 = vrot.lane.b32.xlu0 %v593, 126
      %v683 = vpop.permute.xlu0 %682
      %684 = vrot.lane.b32.xlu0 %v594, 126
      %v685 = vpop.permute.xlu0 %684
      %686 = vrot.lane.b32.xlu0 %v595, 126
      %v687 = vpop.permute.xlu0 %686
      %688 = vrot.lane.b32.xlu0 %v596, 126
      %v689 = vpop.permute.xlu0 %688
      %690 = vrot.lane.b32.xlu0 %v597, 126
      %v691 = vpop.permute.xlu0 %690
      %692 = vrot.lane.b32.xlu0 %v598, 126
      %v693 = vpop.permute.xlu0 %692
      %694 = vrot.lane.b32.xlu0 %v599, 126
      %v695 = vpop.permute.xlu0 %694
      %v808 = vunpack.c.l.b16 %v420
      %v809 = vunpack.c.h.b16 %v420
      %v810 = vunpack.c.l.b16 %v421
      %v811 = vunpack.c.h.b16 %v421
      %v812 = vunpack.c.l.b16 %v422
      %v813 = vunpack.c.h.b16 %v422
      %v814 = vunpack.c.l.b16 %v423
      %v815 = vunpack.c.h.b16 %v423
      %v816 = vunpack.c.l.b16 %v424
      %v817 = vunpack.c.h.b16 %v424
      %v818 = vunpack.c.l.b16 %v425
      %v819 = vunpack.c.h.b16 %v425
      %v820 = vunpack.c.l.b16 %v426
      %v821 = vunpack.c.h.b16 %v426
      %v822 = vunpack.c.l.b16 %v427
      %v823 = vunpack.c.h.b16 %v427
      %v824 = vunpack.c.l.b16 %v428
      %v825 = vunpack.c.h.b16 %v428
      %v826 = vunpack.c.l.b16 %v429
      %v827 = vunpack.c.h.b16 %v429
      %v828 = vunpack.c.l.b16 %v430
      %v829 = vunpack.c.h.b16 %v430
      %v830 = vunpack.c.l.b16 %v431
      %v831 = vunpack.c.h.b16 %v431
      %v832 = vunpack.c.l.b16 %v432
      %v833 = vunpack.c.h.b16 %v432
      %v834 = vunpack.c.l.b16 %v433
      %v835 = vunpack.c.h.b16 %v433
      %v836 = vunpack.c.l.b16 %v434
      %v837 = vunpack.c.h.b16 %v434
      %v838 = vunpack.c.l.b16 %v435
      %v839 = vunpack.c.h.b16 %v435
      %v840 = vunpack.c.l.b16 %v436
      %v841 = vunpack.c.h.b16 %v436
      %v842 = vunpack.c.l.b16 %v437
      %v843 = vunpack.c.h.b16 %v437
      %v844 = vunpack.c.l.b16 %v438
      %v845 = vunpack.c.h.b16 %v438
      %v846 = vunpack.c.l.b16 %v439
      %v847 = vunpack.c.h.b16 %v439
      %v848 = vunpack.c.l.b16 %v440
      %v849 = vunpack.c.h.b16 %v440
      %v850 = vunpack.c.l.b16 %v441
      %v851 = vunpack.c.h.b16 %v441
      %v852 = vunpack.c.l.b16 %v442
      %v853 = vunpack.c.h.b16 %v442
      %v854 = vunpack.c.l.b16 %v443
      %v855 = vunpack.c.h.b16 %v443
      %v856 = vunpack.c.l.b16 %v444
      %v857 = vunpack.c.h.b16 %v444
      %v858 = vunpack.c.l.b16 %v445
      %v859 = vunpack.c.h.b16 %v445
      %v860 = vunpack.c.l.b16 %v446
      %v861 = vunpack.c.h.b16 %v446
      %v862 = vunpack.c.l.b16 %v447
      %v863 = vunpack.c.h.b16 %v447
      %v864 = vunpack.c.l.b16 %v448
      %v865 = vunpack.c.h.b16 %v448
      %v866 = vunpack.c.l.b16 %v449
      %v867 = vunpack.c.h.b16 %v449
      %v868 = vunpack.c.l.b16 %v450
      %v869 = vunpack.c.h.b16 %v450
      %v870 = vunpack.c.l.b16 %v451
      %v871 = vunpack.c.h.b16 %v451
      %v872 = vunpack.c.l.b16 %v452
      %v873 = vunpack.c.h.b16 %v452
      %v874 = vunpack.c.l.b16 %v453
      %v875 = vunpack.c.h.b16 %v453
      %v876 = vunpack.c.l.b16 %v454
      %v877 = vunpack.c.h.b16 %v454
      %v878 = vunpack.c.l.b16 %v455
      %v879 = vunpack.c.h.b16 %v455
      %v880 = vunpack.c.l.b16 %v456
      %v881 = vunpack.c.h.b16 %v456
      %v882 = vunpack.c.l.b16 %v457
      %v883 = vunpack.c.h.b16 %v457
      %v884 = vunpack.c.l.b16 %v458
      %v885 = vunpack.c.h.b16 %v458
      %v886 = vunpack.c.l.b16 %v459
      %v887 = vunpack.c.h.b16 %v459
      %v888 = vunpack.c.l.b16 %v460
      %v889 = vunpack.c.h.b16 %v460
      %v890 = vunpack.c.l.b16 %v461
      %v891 = vunpack.c.h.b16 %v461
      %v892 = vunpack.c.l.b16 %v462
      %v893 = vunpack.c.h.b16 %v462
      %v894 = vunpack.c.l.b16 %v463
      %v895 = vunpack.c.h.b16 %v463
      %v896 = vunpack.c.l.b16 %v464
      %v897 = vunpack.c.h.b16 %v464
      %v898 = vunpack.c.l.b16 %v465
      %v899 = vunpack.c.h.b16 %v465
      %v900 = vunpack.c.l.b16 %v466
      %v901 = vunpack.c.h.b16 %v466
      %v902 = vunpack.c.l.b16 %v467
      %v903 = vunpack.c.h.b16 %v467
      %v904 = vunpack.c.l.b16 %v468
      %v905 = vunpack.c.h.b16 %v468
      %v906 = vunpack.c.l.b16 %v469
      %v907 = vunpack.c.h.b16 %v469
      %v908 = vunpack.c.l.b16 %v470
      %v909 = vunpack.c.h.b16 %v470
      %v910 = vunpack.c.l.b16 %v471
      %v911 = vunpack.c.h.b16 %v471
      %v912 = vunpack.c.l.b16 %v472
      %v913 = vunpack.c.h.b16 %v472
      %v914 = vunpack.c.l.b16 %v473
      %v915 = vunpack.c.h.b16 %v473
      %v916 = vunpack.c.l.b16 %v474
      %v917 = vunpack.c.h.b16 %v474
      %v918 = vunpack.c.l.b16 %v475
      %v919 = vunpack.c.h.b16 %v475
      %v920 = vunpack.c.l.b16 %v476
      %v921 = vunpack.c.h.b16 %v476
      %v922 = vunpack.c.l.b16 %v477
      %v923 = vunpack.c.h.b16 %v477
      %v924 = vunpack.c.l.b16 %v478
      %v925 = vunpack.c.h.b16 %v478
      %v926 = vunpack.c.l.b16 %v479
      %v927 = vunpack.c.h.b16 %v479
      %v928 = vunpack.c.l.b16 %v480
      %v929 = vunpack.c.h.b16 %v480
      %v930 = vunpack.c.l.b16 %v481
      %v931 = vunpack.c.h.b16 %v481
      %v932 = vunpack.c.l.b16 %v482
      %v933 = vunpack.c.h.b16 %v482
      %v934 = vunpack.c.l.b16 %v483
      %v935 = vunpack.c.h.b16 %v483
      %v936 = vunpack.c.l.b16 %v484
      %v937 = vunpack.c.h.b16 %v484
      %v938 = vunpack.c.l.b16 %v485
      %v939 = vunpack.c.h.b16 %v485
      %v940 = vunpack.c.l.b16 %v486
      %v941 = vunpack.c.h.b16 %v486
      %v942 = vunpack.c.l.b16 %v487
      %v943 = vunpack.c.h.b16 %v487
      %v944 = vunpack.c.l.b16 %v488
      %v945 = vunpack.c.h.b16 %v488
      %v946 = vunpack.c.l.b16 %v489
      %v947 = vunpack.c.h.b16 %v489
      %v948 = vunpack.c.l.b16 %v490
      %v949 = vunpack.c.h.b16 %v490
      %v950 = vunpack.c.l.b16 %v491
      %v951 = vunpack.c.h.b16 %v491
      %v952 = vunpack.c.l.b16 %v492
      %v953 = vunpack.c.h.b16 %v492
      %v954 = vunpack.c.l.b16 %v493
      %v955 = vunpack.c.h.b16 %v493
      %v956 = vunpack.c.l.b16 %v494
      %v957 = vunpack.c.h.b16 %v494
      %v958 = vunpack.c.l.b16 %v495
      %v959 = vunpack.c.h.b16 %v495
      %v960 = vunpack.c.l.b16 %v496
      %v961 = vunpack.c.h.b16 %v496
      %v962 = vunpack.c.l.b16 %v497
      %v963 = vunpack.c.h.b16 %v497
      %v964 = vunpack.c.l.b16 %v498
      %v965 = vunpack.c.h.b16 %v498
      %v966 = vunpack.c.l.b16 %v499
      %v967 = vunpack.c.h.b16 %v499
      %v968 = vunpack.c.l.b16 %v500
      %v969 = vunpack.c.h.b16 %v500
      %v970 = vunpack.c.l.b16 %v501
      %v971 = vunpack.c.h.b16 %v501
      %v972 = vunpack.c.l.b16 %v502
      %v973 = vunpack.c.h.b16 %v502
      %v974 = vunpack.c.l.b16 %v503
      %v975 = vunpack.c.h.b16 %v503
      %v976 = vunpack.c.l.b16 %v504
      %v977 = vunpack.c.h.b16 %v504
      %v978 = vunpack.c.l.b16 %v505
      %v979 = vunpack.c.h.b16 %v505
      %v980 = vunpack.c.l.b16 %v506
      %v981 = vunpack.c.h.b16 %v506
      %v982 = vunpack.c.l.b16 %v507
      %v983 = vunpack.c.h.b16 %v507
      %v984 = vunpack.c.l.b16 %v508
      %v985 = vunpack.c.h.b16 %v508
      %v986 = vunpack.c.l.b16 %v509
      %v987 = vunpack.c.h.b16 %v509
      %v988 = vunpack.c.l.b16 %v510
      %v989 = vunpack.c.h.b16 %v510
      %v990 = vunpack.c.l.b16 %v511
      %v991 = vunpack.c.h.b16 %v511
      %v992 = vunpack.c.l.b16 %v512
      %v993 = vunpack.c.h.b16 %v512
      %v994 = vunpack.c.l.b16 %v513
      %v995 = vunpack.c.h.b16 %v513
      %v996 = vunpack.c.l.b16 %v514
      %v997 = vunpack.c.h.b16 %v514
      %v998 = vunpack.c.l.b16 %v515
      %v999 = vunpack.c.h.b16 %v515
      %v1000 = vpack.c.b16 %v814, %v808
      %v1001 = vpack.c.b16 %v815, %v809
      %v1002 = vpack.c.b16 %v816, %v810
      %v1003 = vpack.c.b16 %v817, %v811
      %v1004 = vpack.c.b16 %v818, %v812
      %v1005 = vpack.c.b16 %v819, %v813
      %v1006 = vpack.c.b16 %v826, %v820
      %v1007 = vpack.c.b16 %v827, %v821
      %v1008 = vpack.c.b16 %v828, %v822
      %v1009 = vpack.c.b16 %v829, %v823
      %v1010 = vpack.c.b16 %v830, %v824
      %v1011 = vpack.c.b16 %v831, %v825
      %v1012 = vpack.c.b16 %v838, %v832
      %v1013 = vpack.c.b16 %v839, %v833
      %v1014 = vpack.c.b16 %v840, %v834
      %v1015 = vpack.c.b16 %v841, %v835
      %v1016 = vpack.c.b16 %v842, %v836
      %v1017 = vpack.c.b16 %v843, %v837
      %v1018 = vpack.c.b16 %v850, %v844
      %v1019 = vpack.c.b16 %v851, %v845
      %v1020 = vpack.c.b16 %v852, %v846
      %v1021 = vpack.c.b16 %v853, %v847
      %v1022 = vpack.c.b16 %v854, %v848
      %v1023 = vpack.c.b16 %v855, %v849
      %v1024 = vpack.c.b16 %v862, %v856
      %v1025 = vpack.c.b16 %v863, %v857
      %v1026 = vpack.c.b16 %v864, %v858
      %v1027 = vpack.c.b16 %v865, %v859
      %v1028 = vpack.c.b16 %v866, %v860
      %v1029 = vpack.c.b16 %v867, %v861
      %v1030 = vpack.c.b16 %v874, %v868
      %v1031 = vpack.c.b16 %v875, %v869
      %v1032 = vpack.c.b16 %v876, %v870
      %v1033 = vpack.c.b16 %v877, %v871
      %v1034 = vpack.c.b16 %v878, %v872
      %v1035 = vpack.c.b16 %v879, %v873
      %v1036 = vpack.c.b16 %v886, %v880
      %v1037 = vpack.c.b16 %v887, %v881
      %v1038 = vpack.c.b16 %v888, %v882
      %v1039 = vpack.c.b16 %v889, %v883
      %v1040 = vpack.c.b16 %v890, %v884
      %v1041 = vpack.c.b16 %v891, %v885
      %v1042 = vpack.c.b16 %v898, %v892
      %v1043 = vpack.c.b16 %v899, %v893
      %v1044 = vpack.c.b16 %v900, %v894
      %v1045 = vpack.c.b16 %v901, %v895
      %v1046 = vpack.c.b16 %v902, %v896
      %v1047 = vpack.c.b16 %v903, %v897
      %v1048 = vpack.c.b16 %v910, %v904
      %v1049 = vpack.c.b16 %v911, %v905
      %v1050 = vpack.c.b16 %v912, %v906
      %v1051 = vpack.c.b16 %v913, %v907
      %v1052 = vpack.c.b16 %v914, %v908
      %v1053 = vpack.c.b16 %v915, %v909
      %v1054 = vpack.c.b16 %v922, %v916
      %v1055 = vpack.c.b16 %v923, %v917
      %v1056 = vpack.c.b16 %v924, %v918
      %v1057 = vpack.c.b16 %v925, %v919
      %v1058 = vpack.c.b16 %v926, %v920
      %v1059 = vpack.c.b16 %v927, %v921
      %v1060 = vpack.c.b16 %v934, %v928
      %v1061 = vpack.c.b16 %v935, %v929
      %v1062 = vpack.c.b16 %v936, %v930
      %v1063 = vpack.c.b16 %v937, %v931
      %v1064 = vpack.c.b16 %v938, %v932
      %v1065 = vpack.c.b16 %v939, %v933
      %v1066 = vpack.c.b16 %v946, %v940
      %v1067 = vpack.c.b16 %v947, %v941
      %v1068 = vpack.c.b16 %v948, %v942
      %v1069 = vpack.c.b16 %v949, %v943
      %v1070 = vpack.c.b16 %v950, %v944
      %v1071 = vpack.c.b16 %v951, %v945
      %v1072 = vpack.c.b16 %v958, %v952
      %v1073 = vpack.c.b16 %v959, %v953
      %v1074 = vpack.c.b16 %v960, %v954
      %v1075 = vpack.c.b16 %v961, %v955
      %v1076 = vpack.c.b16 %v962, %v956
      %v1077 = vpack.c.b16 %v963, %v957
      %v1078 = vpack.c.b16 %v970, %v964
      %v1079 = vpack.c.b16 %v971, %v965
      %v1080 = vpack.c.b16 %v972, %v966
      %v1081 = vpack.c.b16 %v973, %v967
      %v1082 = vpack.c.b16 %v974, %v968
      %v1083 = vpack.c.b16 %v975, %v969
      %v1084 = vpack.c.b16 %v982, %v976
      %v1085 = vpack.c.b16 %v983, %v977
      %v1086 = vpack.c.b16 %v984, %v978
      %v1087 = vpack.c.b16 %v985, %v979
      %v1088 = vpack.c.b16 %v986, %v980
      %v1089 = vpack.c.b16 %v987, %v981
      %v1090 = vpack.c.b16 %v994, %v988
      %v1091 = vpack.c.b16 %v995, %v989
      %v1092 = vpack.c.b16 %v996, %v990
      %v1093 = vpack.c.b16 %v997, %v991
      %v1094 = vpack.c.b16 %v998, %v992
      %v1095 = vpack.c.b16 %v999, %v993
      %1192 = vmatprep.subr.bf16.mxu0 0
      %1193 = vmatpush1.bf16.msra.mxu0 %v591
      %1194 = vmatprep.subr.bf16.mxu0 0
      %1195 = vmatpush1.bf16.msra.mxu0 %v590
      %1196 = vmatprep.subr.bf16.mxu0 0
      %1197 = vmatpush1.bf16.msra.mxu0 %v589
      %1198 = vmatprep.subr.bf16.mxu0 0
      %1199 = vmatpush1.bf16.msra.mxu0 %v588
      %1200 = vmatprep.subr.bf16.mxu0 0
      %1201 = vmatpush1.bf16.msra.mxu0 %v587
      %1202 = vmatprep.subr.bf16.mxu0 0
      %1203 = vmatpush1.bf16.msra.mxu0 %v586
      %1204 = vmatprep.subr.bf16.mxu0 0
      %1205 = vmatpush1.bf16.msra.mxu0 %v585
      %1206 = vmatprep.subr.bf16.mxu0 0
      %1207 = vmatpush1.bf16.msra.mxu0 %v584
      %1208 = vmatprep.subr.bf16.mxu0 0
      %1209 = vmatpush2.bf16.msra.mxu0 %v599
      %1210 = vmatprep.subr.bf16.mxu0 0
      %1211 = vmatpush2.bf16.msra.mxu0 %v598
      %1212 = vmatprep.subr.bf16.mxu0 0
      %1213 = vmatpush2.bf16.msra.mxu0 %v597
      %1214 = vmatprep.subr.bf16.mxu0 0
      %1215 = vmatpush2.bf16.msra.mxu0 %v596
      %1216 = vmatprep.subr.bf16.mxu0 0
      %1217 = vmatpush2.bf16.msra.mxu0 %v595
      %1218 = vmatprep.subr.bf16.mxu0 0
      %1219 = vmatpush2.bf16.msra.mxu0 %v594
      %1220 = vmatprep.subr.bf16.mxu0 0
      %1221 = vmatpush2.bf16.msra.mxu0 %v593
      %1222 = vmatprep.subr.bf16.mxu0 0
      %1223 = vmatpush2.bf16.msra.mxu0 %v592
      %1224 = vmatprep.mubr.bf16.mxu0 %v1001
      %1225 = vmatmul.mubr.bf16.gmra.mxu0 %v1000
      %v1226 = vpop.f32.mrf.mxu0
      %v1227 = vadd.f32 0.0, %v1226
      %v1228 = vpop.f32.mrf.mxu0
      %v1229 = vpop.f32.mrf.mxu0
      %v1230 = vadd.f32 0.0, %v1229
      %v1231 = vpop.f32.mrf.mxu0
      %1232 = vmatprep.mubr.bf16.mxu0 %v1007
      %1233 = vmatmul.mubr.bf16.gmra.mxu0 %v1006
      %v1234 = vpop.f32.mrf.mxu0
      %v1235 = vadd.f32 0.0, %v1234
      %v1236 = vpop.f32.mrf.mxu0
      %v1237 = vpop.f32.mrf.mxu0
      %v1238 = vadd.f32 0.0, %v1237
      %v1239 = vpop.f32.mrf.mxu0
      %1240 = vmatprep.mubr.bf16.mxu0 %v1013
      %1241 = vmatmul.mubr.bf16.gmra.mxu0 %v1012
      %v1242 = vpop.f32.mrf.mxu0
      %v1243 = vadd.f32 0.0, %v1242
      %v1244 = vpop.f32.mrf.mxu0
      %v1245 = vpop.f32.mrf.mxu0
      %v1246 = vadd.f32 0.0, %v1245
      %v1247 = vpop.f32.mrf.mxu0
      %1248 = vmatprep.mubr.bf16.mxu0 %v1019
      %1249 = vmatmul.mubr.bf16.gmra.mxu0 %v1018
      %v1250 = vpop.f32.mrf.mxu0
      %v1251 = vadd.f32 0.0, %v1250
      %v1252 = vpop.f32.mrf.mxu0
      %v1253 = vpop.f32.mrf.mxu0
      %v1254 = vadd.f32 0.0, %v1253
      %v1255 = vpop.f32.mrf.mxu0
      %1256 = vmatprep.mubr.bf16.mxu0 %v1025
      %1257 = vmatmul.mubr.bf16.gmra.mxu0 %v1024
      %v1258 = vpop.f32.mrf.mxu0
      %v1259 = vadd.f32 0.0, %v1258
      %v1260 = vpop.f32.mrf.mxu0
      %v1261 = vpop.f32.mrf.mxu0
      %v1262 = vadd.f32 0.0, %v1261
      %v1263 = vpop.f32.mrf.mxu0
      %1264 = vmatprep.mubr.bf16.mxu0 %v1031
      %1265 = vmatmul.mubr.bf16.gmra.mxu0 %v1030
      %v1266 = vpop.f32.mrf.mxu0
      %v1267 = vadd.f32 0.0, %v1266
      %v1268 = vpop.f32.mrf.mxu0
      %v1269 = vpop.f32.mrf.mxu0
      %v1270 = vadd.f32 0.0, %v1269
      %v1271 = vpop.f32.mrf.mxu0
      %1272 = vmatprep.mubr.bf16.mxu0 %v1037
      %1273 = vmatmul.mubr.bf16.gmra.mxu0 %v1036
      %v1274 = vpop.f32.mrf.mxu0
      %v1275 = vadd.f32 0.0, %v1274
      %v1276 = vpop.f32.mrf.mxu0
      %v1277 = vpop.f32.mrf.mxu0
      %v1278 = vadd.f32 0.0, %v1277
      %v1279 = vpop.f32.mrf.mxu0
      %1280 = vmatprep.mubr.bf16.mxu0 %v1043
      %1281 = vmatmul.mubr.bf16.gmra.mxu0 %v1042
      %v1282 = vpop.f32.mrf.mxu0
      %v1283 = vadd.f32 0.0, %v1282
      %v1284 = vpop.f32.mrf.mxu0
      %v1285 = vpop.f32.mrf.mxu0
      %v1286 = vadd.f32 0.0, %v1285
      %v1287 = vpop.f32.mrf.mxu0
      %1288 = vmatprep.mubr.bf16.mxu0 %v1049
      %1289 = vmatmul.mubr.bf16.gmra.mxu0 %v1048
      %v1290 = vpop.f32.mrf.mxu0
      %v1291 = vadd.f32 0.0, %v1290
      %v1292 = vpop.f32.mrf.mxu0
      %v1293 = vpop.f32.mrf.mxu0
      %v1294 = vadd.f32 0.0, %v1293
      %v1295 = vpop.f32.mrf.mxu0
      %1296 = vmatprep.mubr.bf16.mxu0 %v1055
      %1297 = vmatmul.mubr.bf16.gmra.mxu0 %v1054
      %v1298 = vpop.f32.mrf.mxu0
      %v1299 = vadd.f32 0.0, %v1298
      %v1300 = vpop.f32.mrf.mxu0
      %v1301 = vpop.f32.mrf.mxu0
      %v1302 = vadd.f32 0.0, %v1301
      %v1303 = vpop.f32.mrf.mxu0
      %1304 = vmatprep.mubr.bf16.mxu0 %v1061
      %1305 = vmatmul.mubr.bf16.gmra.mxu0 %v1060
      %v1306 = vpop.f32.mrf.mxu0
      %v1307 = vadd.f32 0.0, %v1306
      %v1308 = vpop.f32.mrf.mxu0
      %v1309 = vpop.f32.mrf.mxu0
      %v1310 = vadd.f32 0.0, %v1309
      %v1311 = vpop.f32.mrf.mxu0
      %1312 = vmatprep.mubr.bf16.mxu0 %v1067
      %1313 = vmatmul.mubr.bf16.gmra.mxu0 %v1066
      %v1314 = vpop.f32.mrf.mxu0
      %v1315 = vadd.f32 0.0, %v1314
      %v1316 = vpop.f32.mrf.mxu0
      %v1317 = vpop.f32.mrf.mxu0
      %v1318 = vadd.f32 0.0, %v1317
      %v1319 = vpop.f32.mrf.mxu0
      %1320 = vmatprep.mubr.bf16.mxu0 %v1073
      %1321 = vmatmul.mubr.bf16.gmra.mxu0 %v1072
      %v1322 = vpop.f32.mrf.mxu0
      %v1323 = vadd.f32 0.0, %v1322
      %v1324 = vpop.f32.mrf.mxu0
      %v1325 = vpop.f32.mrf.mxu0
      %v1326 = vadd.f32 0.0, %v1325
      %v1327 = vpop.f32.mrf.mxu0
      %1328 = vmatprep.mubr.bf16.mxu0 %v1079
      %1329 = vmatmul.mubr.bf16.gmra.mxu0 %v1078
      %v1330 = vpop.f32.mrf.mxu0
      %v1331 = vadd.f32 0.0, %v1330
      %v1332 = vpop.f32.mrf.mxu0
      %v1333 = vpop.f32.mrf.mxu0
      %v1334 = vadd.f32 0.0, %v1333
      %v1335 = vpop.f32.mrf.mxu0
      %1336 = vmatprep.mubr.bf16.mxu0 %v1085
      %1337 = vmatmul.mubr.bf16.gmra.mxu0 %v1084
      %v1338 = vpop.f32.mrf.mxu0
      %v1339 = vadd.f32 0.0, %v1338
      %v1340 = vpop.f32.mrf.mxu0
      %v1341 = vpop.f32.mrf.mxu0
      %v1342 = vadd.f32 0.0, %v1341
      %v1343 = vpop.f32.mrf.mxu0
      %1344 = vmatprep.mubr.bf16.mxu0 %v1091
      %1345 = vmatmul.mubr.bf16.gmra.mxu0 %v1090
      %v1346 = vpop.f32.mrf.mxu0
      %v1347 = vadd.f32 0.0, %v1346
      %v1348 = vpop.f32.mrf.mxu0
      %v1349 = vpop.f32.mrf.mxu0
      %v1350 = vadd.f32 0.0, %v1349
      %v1351 = vpop.f32.mrf.mxu0
      %1352 = vdwg.mxu0
      %1353 = vmatprep.subr.bf16.mxu0 0
      %1354 = vmatpush1.bf16.msra.mxu0 %v631
      %1355 = vmatprep.subr.bf16.mxu0 0
      %1356 = vmatpush1.bf16.msra.mxu0 %v629
      %1357 = vmatprep.subr.bf16.mxu0 0
      %1358 = vmatpush1.bf16.msra.mxu0 %v627
      %1359 = vmatprep.subr.bf16.mxu0 0
      %1360 = vmatpush1.bf16.msra.mxu0 %v625
      %1361 = vmatprep.subr.bf16.mxu0 0
      %1362 = vmatpush1.bf16.msra.mxu0 %v623
      %1363 = vmatprep.subr.bf16.mxu0 0
      %1364 = vmatpush1.bf16.msra.mxu0 %v621
      %1365 = vmatprep.subr.bf16.mxu0 0
      %1366 = vmatpush1.bf16.msra.mxu0 %v619
      %1367 = vmatprep.subr.bf16.mxu0 0
      %1368 = vmatpush1.bf16.msra.mxu0 %v617
      %1369 = vmatprep.subr.bf16.mxu0 0
      %1370 = vmatpush2.bf16.msra.mxu0 %v647
      %1371 = vmatprep.subr.bf16.mxu0 0
      %1372 = vmatpush2.bf16.msra.mxu0 %v645
      %1373 = vmatprep.subr.bf16.mxu0 0
      %1374 = vmatpush2.bf16.msra.mxu0 %v643
      %1375 = vmatprep.subr.bf16.mxu0 0
      %1376 = vmatpush2.bf16.msra.mxu0 %v641
      %1377 = vmatprep.subr.bf16.mxu0 0
      %1378 = vmatpush2.bf16.msra.mxu0 %v639
      %1379 = vmatprep.subr.bf16.mxu0 0
      %1380 = vmatpush2.bf16.msra.mxu0 %v637
      %1381 = vmatprep.subr.bf16.mxu0 0
      %1382 = vmatpush2.bf16.msra.mxu0 %v635
      %1383 = vmatprep.subr.bf16.mxu0 0
      %1384 = vmatpush2.bf16.msra.mxu0 %v633
      %1385 = vmatprep.mubr.bf16.mxu0 %v1003
      %1386 = vmatmul.mubr.bf16.gmra.mxu0 %v1002
      %v1387 = vpop.f32.mrf.mxu0
      %v1388 = vadd.f32 %v1227, %v1387
      %v1389 = vpop.f32.mrf.mxu0
      %v1390 = vpop.f32.mrf.mxu0
      %v1391 = vadd.f32 %v1230, %v1390
      %v1392 = vpop.f32.mrf.mxu0
      %1393 = vmatprep.mubr.bf16.mxu0 %v1009
      %1394 = vmatmul.mubr.bf16.gmra.mxu0 %v1008
      %v1395 = vpop.f32.mrf.mxu0
      %v1396 = vadd.f32 %v1235, %v1395
      %v1397 = vpop.f32.mrf.mxu0
      %v1398 = vpop.f32.mrf.mxu0
      %v1399 = vadd.f32 %v1238, %v1398
      %v1400 = vpop.f32.mrf.mxu0
      %1401 = vmatprep.mubr.bf16.mxu0 %v1015
      %1402 = vmatmul.mubr.bf16.gmra.mxu0 %v1014
      %v1403 = vpop.f32.mrf.mxu0
      %v1404 = vadd.f32 %v1243, %v1403
      %v1405 = vpop.f32.mrf.mxu0
      %v1406 = vpop.f32.mrf.mxu0
      %v1407 = vadd.f32 %v1246, %v1406
      %v1408 = vpop.f32.mrf.mxu0
      %1409 = vmatprep.mubr.bf16.mxu0 %v1021
      %1410 = vmatmul.mubr.bf16.gmra.mxu0 %v1020
      %v1411 = vpop.f32.mrf.mxu0
      %v1412 = vadd.f32 %v1251, %v1411
      %v1413 = vpop.f32.mrf.mxu0
      %v1414 = vpop.f32.mrf.mxu0
      %v1415 = vadd.f32 %v1254, %v1414
      %v1416 = vpop.f32.mrf.mxu0
      %1417 = vmatprep.mubr.bf16.mxu0 %v1027
      %1418 = vmatmul.mubr.bf16.gmra.mxu0 %v1026
      %v1419 = vpop.f32.mrf.mxu0
      %v1420 = vadd.f32 %v1259, %v1419
      %v1421 = vpop.f32.mrf.mxu0
      %v1422 = vpop.f32.mrf.mxu0
      %v1423 = vadd.f32 %v1262, %v1422
      %v1424 = vpop.f32.mrf.mxu0
      %1425 = vmatprep.mubr.bf16.mxu0 %v1033
      %1426 = vmatmul.mubr.bf16.gmra.mxu0 %v1032
      %v1427 = vpop.f32.mrf.mxu0
      %v1428 = vadd.f32 %v1267, %v1427
      %v1429 = vpop.f32.mrf.mxu0
      %v1430 = vpop.f32.mrf.mxu0
      %v1431 = vadd.f32 %v1270, %v1430
      %v1432 = vpop.f32.mrf.mxu0
      %1433 = vmatprep.mubr.bf16.mxu0 %v1039
      %1434 = vmatmul.mubr.bf16.gmra.mxu0 %v1038
      %v1435 = vpop.f32.mrf.mxu0
      %v1436 = vadd.f32 %v1275, %v1435
      %v1437 = vpop.f32.mrf.mxu0
      %v1438 = vpop.f32.mrf.mxu0
      %v1439 = vadd.f32 %v1278, %v1438
      %v1440 = vpop.f32.mrf.mxu0
      %1441 = vmatprep.mubr.bf16.mxu0 %v1045
      %1442 = vmatmul.mubr.bf16.gmra.mxu0 %v1044
      %v1443 = vpop.f32.mrf.mxu0
      %v1444 = vadd.f32 %v1283, %v1443
      %v1445 = vpop.f32.mrf.mxu0
      %v1446 = vpop.f32.mrf.mxu0
      %v1447 = vadd.f32 %v1286, %v1446
      %v1448 = vpop.f32.mrf.mxu0
      %1449 = vmatprep.mubr.bf16.mxu0 %v1051
      %1450 = vmatmul.mubr.bf16.gmra.mxu0 %v1050
      %v1451 = vpop.f32.mrf.mxu0
      %v1452 = vadd.f32 %v1291, %v1451
      %v1453 = vpop.f32.mrf.mxu0
      %v1454 = vpop.f32.mrf.mxu0
      %v1455 = vadd.f32 %v1294, %v1454
      %v1456 = vpop.f32.mrf.mxu0
      %1457 = vmatprep.mubr.bf16.mxu0 %v1057
      %1458 = vmatmul.mubr.bf16.gmra.mxu0 %v1056
      %v1459 = vpop.f32.mrf.mxu0
      %v1460 = vadd.f32 %v1299, %v1459
      %v1461 = vpop.f32.mrf.mxu0
      %v1462 = vpop.f32.mrf.mxu0
      %v1463 = vadd.f32 %v1302, %v1462
      %v1464 = vpop.f32.mrf.mxu0
      %1465 = vmatprep.mubr.bf16.mxu0 %v1063
      %1466 = vmatmul.mubr.bf16.gmra.mxu0 %v1062
      %v1467 = vpop.f32.mrf.mxu0
      %v1468 = vadd.f32 %v1307, %v1467
      %v1469 = vpop.f32.mrf.mxu0
      %v1470 = vpop.f32.mrf.mxu0
      %v1471 = vadd.f32 %v1310, %v1470
      %v1472 = vpop.f32.mrf.mxu0
      %1473 = vmatprep.mubr.bf16.mxu0 %v1069
      %1474 = vmatmul.mubr.bf16.gmra.mxu0 %v1068
      %v1475 = vpop.f32.mrf.mxu0
      %v1476 = vadd.f32 %v1315, %v1475
      %v1477 = vpop.f32.mrf.mxu0
      %v1478 = vpop.f32.mrf.mxu0
      %v1479 = vadd.f32 %v1318, %v1478
      %v1480 = vpop.f32.mrf.mxu0
      %1481 = vmatprep.mubr.bf16.mxu0 %v1075
      %1482 = vmatmul.mubr.bf16.gmra.mxu0 %v1074
      %v1483 = vpop.f32.mrf.mxu0
      %v1484 = vadd.f32 %v1323, %v1483
      %v1485 = vpop.f32.mrf.mxu0
      %v1486 = vpop.f32.mrf.mxu0
      %v1487 = vadd.f32 %v1326, %v1486
      %v1488 = vpop.f32.mrf.mxu0
      %1489 = vmatprep.mubr.bf16.mxu0 %v1081
      %1490 = vmatmul.mubr.bf16.gmra.mxu0 %v1080
      %v1491 = vpop.f32.mrf.mxu0
      %v1492 = vadd.f32 %v1331, %v1491
      %v1493 = vpop.f32.mrf.mxu0
      %v1494 = vpop.f32.mrf.mxu0
      %v1495 = vadd.f32 %v1334, %v1494
      %v1496 = vpop.f32.mrf.mxu0
      %1497 = vmatprep.mubr.bf16.mxu0 %v1087
      %1498 = vmatmul.mubr.bf16.gmra.mxu0 %v1086
      %v1499 = vpop.f32.mrf.mxu0
      %v1500 = vadd.f32 %v1339, %v1499
      %v1501 = vpop.f32.mrf.mxu0
      %v1502 = vpop.f32.mrf.mxu0
      %v1503 = vadd.f32 %v1342, %v1502
      %v1504 = vpop.f32.mrf.mxu0
      %1505 = vmatprep.mubr.bf16.mxu0 %v1093
      %1506 = vmatmul.mubr.bf16.gmra.mxu0 %v1092
      %v1507 = vpop.f32.mrf.mxu0
      %v1508 = vadd.f32 %v1347, %v1507
      %v1509 = vpop.f32.mrf.mxu0
      %v1510 = vpop.f32.mrf.mxu0
      %v1511 = vadd.f32 %v1350, %v1510
      %v1512 = vpop.f32.mrf.mxu0
      %1513 = vdwg.mxu0
      %1514 = vmatprep.subr.bf16.mxu0 0
      %1515 = vmatpush1.bf16.msra.mxu0 %v679
      %1516 = vmatprep.subr.bf16.mxu0 0
      %1517 = vmatpush1.bf16.msra.mxu0 %v677
      %1518 = vmatprep.subr.bf16.mxu0 0
      %1519 = vmatpush1.bf16.msra.mxu0 %v675
      %1520 = vmatprep.subr.bf16.mxu0 0
      %1521 = vmatpush1.bf16.msra.mxu0 %v673
      %1522 = vmatprep.subr.bf16.mxu0 0
      %1523 = vmatpush1.bf16.msra.mxu0 %v671
      %1524 = vmatprep.subr.bf16.mxu0 0
      %1525 = vmatpush1.bf16.msra.mxu0 %v669
      %1526 = vmatprep.subr.bf16.mxu0 0
      %1527 = vmatpush1.bf16.msra.mxu0 %v667
      %1528 = vmatprep.subr.bf16.mxu0 0
      %1529 = vmatpush1.bf16.msra.mxu0 %v665
      %1530 = vmatprep.subr.bf16.mxu0 0
      %1531 = vmatpush2.bf16.msra.mxu0 %v695
      %1532 = vmatprep.subr.bf16.mxu0 0
      %1533 = vmatpush2.bf16.msra.mxu0 %v693
      %1534 = vmatprep.subr.bf16.mxu0 0
      %1535 = vmatpush2.bf16.msra.mxu0 %v691
      %1536 = vmatprep.subr.bf16.mxu0 0
      %1537 = vmatpush2.bf16.msra.mxu0 %v689
      %1538 = vmatprep.subr.bf16.mxu0 0
      %1539 = vmatpush2.bf16.msra.mxu0 %v687
      %1540 = vmatprep.subr.bf16.mxu0 0
      %1541 = vmatpush2.bf16.msra.mxu0 %v685
      %1542 = vmatprep.subr.bf16.mxu0 0
      %1543 = vmatpush2.bf16.msra.mxu0 %v683
      %1544 = vmatprep.subr.bf16.mxu0 0
      %1545 = vmatpush2.bf16.msra.mxu0 %v681
      %1546 = vmatprep.mubr.bf16.mxu0 %v1005
      %1547 = vmatmul.mubr.bf16.gmra.mxu0 %v1004
      %v1548 = vpop.f32.mrf.mxu0
      %v1549 = vadd.f32 %v1388, %v1548
      %v1550 = vpop.f32.mrf.mxu0
      %v1551 = vpop.f32.mrf.mxu0
      %v1552 = vadd.f32 %v1391, %v1551
      %v1553 = vpop.f32.mrf.mxu0
      %1554 = vmatprep.mubr.bf16.mxu0 %v1011
      %1555 = vmatmul.mubr.bf16.gmra.mxu0 %v1010
      %v1556 = vpop.f32.mrf.mxu0
      %v1557 = vadd.f32 %v1396, %v1556
      %v1558 = vpop.f32.mrf.mxu0
      %v1559 = vpop.f32.mrf.mxu0
      %v1560 = vadd.f32 %v1399, %v1559
      %v1561 = vpop.f32.mrf.mxu0
      %1562 = vmatprep.mubr.bf16.mxu0 %v1017
      %1563 = vmatmul.mubr.bf16.gmra.mxu0 %v1016
      %v1564 = vpop.f32.mrf.mxu0
      %v1565 = vadd.f32 %v1404, %v1564
      %v1566 = vpop.f32.mrf.mxu0
      %v1567 = vpop.f32.mrf.mxu0
      %v1568 = vadd.f32 %v1407, %v1567
      %v1569 = vpop.f32.mrf.mxu0
      %1570 = vmatprep.mubr.bf16.mxu0 %v1023
      %1571 = vmatmul.mubr.bf16.gmra.mxu0 %v1022
      %v1572 = vpop.f32.mrf.mxu0
      %v1573 = vadd.f32 %v1412, %v1572
      %v1574 = vpop.f32.mrf.mxu0
      %v1575 = vpop.f32.mrf.mxu0
      %v1576 = vadd.f32 %v1415, %v1575
      %v1577 = vpop.f32.mrf.mxu0
      %1578 = vmatprep.mubr.bf16.mxu0 %v1029
      %1579 = vmatmul.mubr.bf16.gmra.mxu0 %v1028
      %v1580 = vpop.f32.mrf.mxu0
      %v1581 = vadd.f32 %v1420, %v1580
      %v1582 = vpop.f32.mrf.mxu0
      %v1583 = vpop.f32.mrf.mxu0
      %v1584 = vadd.f32 %v1423, %v1583
      %v1585 = vpop.f32.mrf.mxu0
      %1586 = vmatprep.mubr.bf16.mxu0 %v1035
      %1587 = vmatmul.mubr.bf16.gmra.mxu0 %v1034
      %v1588 = vpop.f32.mrf.mxu0
      %v1589 = vadd.f32 %v1428, %v1588
      %v1590 = vpop.f32.mrf.mxu0
      %v1591 = vpop.f32.mrf.mxu0
      %v1592 = vadd.f32 %v1431, %v1591
      %v1593 = vpop.f32.mrf.mxu0
      %1594 = vmatprep.mubr.bf16.mxu0 %v1041
      %1595 = vmatmul.mubr.bf16.gmra.mxu0 %v1040
      %v1596 = vpop.f32.mrf.mxu0
      %v1597 = vadd.f32 %v1436, %v1596
      %v1598 = vpop.f32.mrf.mxu0
      %v1599 = vpop.f32.mrf.mxu0
      %v1600 = vadd.f32 %v1439, %v1599
      %v1601 = vpop.f32.mrf.mxu0
      %1602 = vmatprep.mubr.bf16.mxu0 %v1047
      %1603 = vmatmul.mubr.bf16.gmra.mxu0 %v1046
      %v1604 = vpop.f32.mrf.mxu0
      %v1605 = vadd.f32 %v1444, %v1604
      %v1606 = vpop.f32.mrf.mxu0
      %v1607 = vpop.f32.mrf.mxu0
      %v1608 = vadd.f32 %v1447, %v1607
      %v1609 = vpop.f32.mrf.mxu0
      %1610 = vmatprep.mubr.bf16.mxu0 %v1053
      %1611 = vmatmul.mubr.bf16.gmra.mxu0 %v1052
      %v1612 = vpop.f32.mrf.mxu0
      %v1613 = vadd.f32 %v1452, %v1612
      %v1614 = vpop.f32.mrf.mxu0
      %v1615 = vpop.f32.mrf.mxu0
      %v1616 = vadd.f32 %v1455, %v1615
      %v1617 = vpop.f32.mrf.mxu0
      %1618 = vmatprep.mubr.bf16.mxu0 %v1059
      %1619 = vmatmul.mubr.bf16.gmra.mxu0 %v1058
      %v1620 = vpop.f32.mrf.mxu0
      %v1621 = vadd.f32 %v1460, %v1620
      %v1622 = vpop.f32.mrf.mxu0
      %v1623 = vpop.f32.mrf.mxu0
      %v1624 = vadd.f32 %v1463, %v1623
      %v1625 = vpop.f32.mrf.mxu0
      %1626 = vmatprep.mubr.bf16.mxu0 %v1065
      %1627 = vmatmul.mubr.bf16.gmra.mxu0 %v1064
      %v1628 = vpop.f32.mrf.mxu0
      %v1629 = vadd.f32 %v1468, %v1628
      %v1630 = vpop.f32.mrf.mxu0
      %v1631 = vpop.f32.mrf.mxu0
      %v1632 = vadd.f32 %v1471, %v1631
      %v1633 = vpop.f32.mrf.mxu0
      %1634 = vmatprep.mubr.bf16.mxu0 %v1071
      %1635 = vmatmul.mubr.bf16.gmra.mxu0 %v1070
      %v1636 = vpop.f32.mrf.mxu0
      %v1637 = vadd.f32 %v1476, %v1636
      %v1638 = vpop.f32.mrf.mxu0
      %v1639 = vpop.f32.mrf.mxu0
      %v1640 = vadd.f32 %v1479, %v1639
      %v1641 = vpop.f32.mrf.mxu0
      %1642 = vmatprep.mubr.bf16.mxu0 %v1077
      %1643 = vmatmul.mubr.bf16.gmra.mxu0 %v1076
      %v1644 = vpop.f32.mrf.mxu0
      %v1645 = vadd.f32 %v1484, %v1644
      %v1646 = vpop.f32.mrf.mxu0
      %v1647 = vpop.f32.mrf.mxu0
      %v1648 = vadd.f32 %v1487, %v1647
      %v1649 = vpop.f32.mrf.mxu0
      %1650 = vmatprep.mubr.bf16.mxu0 %v1083
      %1651 = vmatmul.mubr.bf16.gmra.mxu0 %v1082
      %v1652 = vpop.f32.mrf.mxu0
      %v1653 = vadd.f32 %v1492, %v1652
      %v1654 = vpop.f32.mrf.mxu0
      %v1655 = vpop.f32.mrf.mxu0
      %v1656 = vadd.f32 %v1495, %v1655
      %v1657 = vpop.f32.mrf.mxu0
      %1658 = vmatprep.mubr.bf16.mxu0 %v1089
      %1659 = vmatmul.mubr.bf16.gmra.mxu0 %v1088
      %v1660 = vpop.f32.mrf.mxu0
      %v1661 = vadd.f32 %v1500, %v1660
      %v1662 = vpop.f32.mrf.mxu0
      %v1663 = vpop.f32.mrf.mxu0
      %v1664 = vadd.f32 %v1503, %v1663
      %v1665 = vpop.f32.mrf.mxu0
      %1666 = vmatprep.mubr.bf16.mxu0 %v1095
      %1667 = vmatmul.mubr.bf16.gmra.mxu0 %v1094
      %v1668 = vpop.f32.mrf.mxu0
      %v1669 = vadd.f32 %v1508, %v1668
      %v1670 = vpop.f32.mrf.mxu0
      %v1671 = vpop.f32.mrf.mxu0
      %v1672 = vadd.f32 %v1511, %v1671
      %v1673 = vpop.f32.mrf.mxu0
      %1674 = vdwg.mxu0
      %v1675 = vmax.f32 %v1549, %v1565
      %v1676 = vmax.f32 %v1552, %v1568
      %v1677 = vmax.f32 %v1557, %v1573
      %v1678 = vmax.f32 %v1560, %v1576
      %v1679 = vmax.f32 %v1675, %v1581
      %v1680 = vmax.f32 %v1676, %v1584
      %v1681 = vmax.f32 %v1677, %v1589
      %v1682 = vmax.f32 %v1678, %v1592
      %v1683 = vmax.f32 %v1679, %v1597
      %v1684 = vmax.f32 %v1680, %v1600
      %v1685 = vmax.f32 %v1681, %v1605
      %v1686 = vmax.f32 %v1682, %v1608
      %v1687 = vmax.f32 %v1683, %v1613
      %v1688 = vmax.f32 %v1684, %v1616
      %v1689 = vmax.f32 %v1685, %v1621
      %v1690 = vmax.f32 %v1686, %v1624
      %v1691 = vmax.f32 %v1687, %v1629
      %v1692 = vmax.f32 %v1688, %v1632
      %v1693 = vmax.f32 %v1689, %v1637
      %v1694 = vmax.f32 %v1690, %v1640
      %v1695 = vmax.f32 %v1691, %v1645
      %v1696 = vmax.f32 %v1692, %v1648
      %v1697 = vmax.f32 %v1693, %v1653
      %v1698 = vmax.f32 %v1694, %v1656
      %v1699 = vmax.f32 %v1695, %v1661
      %v1700 = vmax.f32 %v1696, %v1664
      %v1701 = vmax.f32 %v1697, %v1669
      %v1702 = vmax.f32 %v1698, %v1672
      %1704 = vset.pattern.permute.xlu0 0
      %1705 = vperm.xlu0 %1704, %v516
      %v1706 = vpop.permute.xlu0 %1705
      %1709 = vset.pattern.permute.xlu0 0
      %1710 = vperm.xlu0 %1709, %v517
      %v1711 = vpop.permute.xlu0 %1710
      %1714 = vset.pattern.permute.xlu0 0
      %1715 = vperm.xlu0 %1714, %v518
      %v1716 = vpop.permute.xlu0 %1715
      %1719 = vset.pattern.permute.xlu0 0
      %1720 = vperm.xlu0 %1719, %v519
      %v1721 = vpop.permute.xlu0 %1720
      %v1723 = vadd.f32 %v1699, %v1706
      %v1724 = vadd.f32 %v1700, %v1711
      %v1725 = vadd.f32 %v1701, %v1716
      %v1726 = vadd.f32 %v1702, %v1721
      %v1727 = vlaneseq
      %v1728 = vshrl.u32 %v1727, 7
      %v1729 = vadd.s32 %v1728, 8
      %v1730 = vadd.s32 %v1728, 16
      %v1731 = vadd.s32 %v1728, 24
      %v1732 = vadd.s32 %v1728, 32
      %v1733 = vadd.s32 %v1728, 40
      %v1734 = vadd.s32 %v1728, 48
      %v1735 = vadd.s32 %v1728, 56
      %v1736 = vlaneseq
      %v1737 = vand.u32 %v1736, 127
      %v1738 = vmul.u32 %v1737, 2
      %vm1739 = vcmp.eq.s32.totalorder %v1728, %v1738
      %vm1740 = vcmp.eq.s32.totalorder %v1729, %v1738
      %vm1741 = vcmp.eq.s32.totalorder %v1730, %v1738
      %vm1742 = vcmp.eq.s32.totalorder %v1731, %v1738
      %vm1743 = vcmp.eq.s32.totalorder %v1732, %v1738
      %vm1744 = vcmp.eq.s32.totalorder %v1733, %v1738
      %vm1745 = vcmp.eq.s32.totalorder %v1734, %v1738
      %vm1746 = vcmp.eq.s32.totalorder %v1735, %v1738
      %v1747 = vsel %vm1739, 1, 0
      %v1748 = vsel %vm1740, 1, 0
      %v1749 = vsel %vm1741, 1, 0
      %v1750 = vsel %vm1742, 1, 0
      %v1751 = vsel %vm1743, 1, 0
      %v1752 = vsel %vm1744, 1, 0
      %v1753 = vsel %vm1745, 1, 0
      %v1754 = vsel %vm1746, 1, 0
      %v1755 = vcvt.s32.f32 %v1747
      %v1756 = vcvt.s32.f32 %v1748
      %v1757 = vcvt.s32.f32 %v1749
      %v1758 = vcvt.s32.f32 %v1750
      %v1759 = vcvt.s32.f32 %v1751
      %v1760 = vcvt.s32.f32 %v1752
      %v1761 = vcvt.s32.f32 %v1753
      %v1762 = vcvt.s32.f32 %v1754
      %v1763 = vadd.s32 %v1738, 1
      %vm1764 = vcmp.eq.s32.totalorder %v1728, %v1763
      %vm1765 = vcmp.eq.s32.totalorder %v1729, %v1763
      %vm1766 = vcmp.eq.s32.totalorder %v1730, %v1763
      %vm1767 = vcmp.eq.s32.totalorder %v1731, %v1763
      %vm1768 = vcmp.eq.s32.totalorder %v1732, %v1763
      %vm1769 = vcmp.eq.s32.totalorder %v1733, %v1763
      %vm1770 = vcmp.eq.s32.totalorder %v1734, %v1763
      %vm1771 = vcmp.eq.s32.totalorder %v1735, %v1763
      %v1772 = vsel %vm1764, 1, 0
      %v1773 = vsel %vm1765, 1, 0
      %v1774 = vsel %vm1766, 1, 0
      %v1775 = vsel %vm1767, 1, 0
      %v1776 = vsel %vm1768, 1, 0
      %v1777 = vsel %vm1769, 1, 0
      %v1778 = vsel %vm1770, 1, 0
      %v1779 = vsel %vm1771, 1, 0
      %v1780 = vcvt.s32.f32 %v1772
      %v1781 = vcvt.s32.f32 %v1773
      %v1782 = vcvt.s32.f32 %v1774
      %v1783 = vcvt.s32.f32 %v1775
      %v1784 = vcvt.s32.f32 %v1776
      %v1785 = vcvt.s32.f32 %v1777
      %v1786 = vcvt.s32.f32 %v1778
      %v1787 = vcvt.s32.f32 %v1779
      %vm1788 = vcmask 474112
      %v1790 = vsel %vm1788, %v1723, 0
      %v1793 = vsel %vm1788, %v1724, 0
      %v1796 = vsel %vm1788, %v1725, 0
      %v1799 = vsel %vm1788, %v1726, 0
      %vm1801 = vcmask 1041408
      %v1803 = vsel %vm1801, %v1762, 0
      %1805 = vmatprep.subr.mxu0 0.0
      %1806 = vmatpush1.msra.mxu0 0.0
      %1807 = vmatprep.subr.mxu0 0.0
      %1808 = vmatpush1.msra.mxu0 0.0
      %1809 = vmatprep.subr.mxu0 0.0
      %1810 = vmatpush1.msra.mxu0 0.0
      %1811 = vmatprep.subr.mxu0 0.0
      %1812 = vmatpush1.msra.mxu0 0.0
      %1813 = vmatprep.subr.mxu0 0.0
      %1814 = vmatpush1.msra.mxu0 0.0
      %1815 = vmatprep.subr.mxu0 0.0
      %1816 = vmatpush1.msra.mxu0 0.0
      %1817 = vmatprep.subr.mxu0 0.0
      %1818 = vmatpush1.msra.mxu0 0.0
      %1819 = vmatprep.subr.mxu0 0.0
      %1820 = vmatpush1.msra.mxu0 0.0
      %1821 = vmatprep.subr.mxu0 0.0
      %1822 = vmatpush1.msra.mxu0 %v1803
      %1823 = vmatprep.subr.mxu0 0.0
      %1824 = vmatpush1.msra.mxu0 %v1761
      %1825 = vmatprep.subr.mxu0 0.0
      %1826 = vmatpush1.msra.mxu0 %v1760
      %1827 = vmatprep.subr.mxu0 0.0
      %1828 = vmatpush1.msra.mxu0 %v1759
      %1829 = vmatprep.subr.mxu0 0.0
      %1830 = vmatpush1.msra.mxu0 %v1758
      %1831 = vmatprep.subr.mxu0 0.0
      %1832 = vmatpush1.msra.mxu0 %v1757
      %1833 = vmatprep.subr.mxu0 0.0
      %1834 = vmatpush1.msra.mxu0 %v1756
      %1835 = vmatprep.subr.mxu0 0.0
      %1836 = vmatpush1.msra.mxu0 %v1755
      %1837 = vmatprep.subr.mxu0 0.0
      %1838 = vmatpush2.msra.mxu0 0.0
      %1839 = vmatprep.subr.mxu0 0.0
      %1840 = vmatpush2.msra.mxu0 0.0
      %1841 = vmatprep.subr.mxu0 0.0
      %1842 = vmatpush2.msra.mxu0 0.0
      %1843 = vmatprep.subr.mxu0 0.0
      %1844 = vmatpush2.msra.mxu0 0.0
      %1845 = vmatprep.subr.mxu0 0.0
      %1846 = vmatpush2.msra.mxu0 0.0
      %1847 = vmatprep.subr.mxu0 0.0
      %1848 = vmatpush2.msra.mxu0 0.0
      %1849 = vmatprep.subr.mxu0 0.0
      %1850 = vmatpush2.msra.mxu0 0.0
      %1851 = vmatprep.subr.mxu0 0.0
      %1852 = vmatpush2.msra.mxu0 0.0
      %1853 = vmatprep.subr.mxu0 0.0
      %1854 = vmatpush2.msra.mxu0 0.0
      %1855 = vmatprep.subr.mxu0 0.0
      %1856 = vmatpush2.msra.mxu0 0.0
      %1857 = vmatprep.subr.mxu0 0.0
      %1858 = vmatpush2.msra.mxu0 0.0
      %1859 = vmatprep.subr.mxu0 0.0
      %1860 = vmatpush2.msra.mxu0 0.0
      %1861 = vmatprep.subr.mxu0 0.0
      %1862 = vmatpush2.msra.mxu0 0.0
      %1863 = vmatprep.subr.mxu0 0.0
      %1864 = vmatpush2.msra.mxu0 0.0
      %1865 = vmatprep.subr.mxu0 0.0
      %1866 = vmatpush2.msra.mxu0 0.0
      %1867 = vmatprep.subr.mxu0 0.0
      %1868 = vmatpush2.msra.mxu0 0.0
      %1869 = vmatprep.mubr.f32.mxu0 0.0
      %1870 = vmatmul.mubr.f32.gmra.mxu0 %v1790
      %v1871 = vpop.f32.mrf.mxu0
      %v1872 = vadd.f32 0.0, %v1871
      %v1873 = vpop.f32.mrf.mxu0
      %1874 = vmatprep.mubr.f32.mxu0 0.0
      %1875 = vmatmul.mubr.f32.gmra.mxu0 %v1793
      %v1876 = vpop.f32.mrf.mxu0
      %v1877 = vadd.f32 0.0, %v1876
      %v1878 = vpop.f32.mrf.mxu0
      %1879 = vmatprep.mubr.f32.mxu0 0.0
      %1880 = vmatmul.mubr.f32.gmra.mxu0 %v1796
      %v1881 = vpop.f32.mrf.mxu0
      %v1882 = vadd.f32 0.0, %v1881
      %v1883 = vpop.f32.mrf.mxu0
      %1884 = vmatprep.mubr.f32.mxu0 0.0
      %1885 = vmatmul.mubr.f32.gmra.mxu0 %v1799
      %v1886 = vpop.f32.mrf.mxu0
      %v1887 = vadd.f32 0.0, %v1886
      %v1888 = vpop.f32.mrf.mxu0
      %1889 = vdwg.mxu0
      %v1891 = vsel %vm1801, %v1787, 0
      %1893 = vmatprep.subr.mxu0 0.0
      %1894 = vmatpush1.msra.mxu0 0.0
      %1895 = vmatprep.subr.mxu0 0.0
      %1896 = vmatpush1.msra.mxu0 0.0
      %1897 = vmatprep.subr.mxu0 0.0
      %1898 = vmatpush1.msra.mxu0 0.0
      %1899 = vmatprep.subr.mxu0 0.0
      %1900 = vmatpush1.msra.mxu0 0.0
      %1901 = vmatprep.subr.mxu0 0.0
      %1902 = vmatpush1.msra.mxu0 0.0
      %1903 = vmatprep.subr.mxu0 0.0
      %1904 = vmatpush1.msra.mxu0 0.0
      %1905 = vmatprep.subr.mxu0 0.0
      %1906 = vmatpush1.msra.mxu0 0.0
      %1907 = vmatprep.subr.mxu0 0.0
      %1908 = vmatpush1.msra.mxu0 0.0
      %1909 = vmatprep.subr.mxu0 0.0
      %1910 = vmatpush1.msra.mxu0 %v1891
      %1911 = vmatprep.subr.mxu0 0.0
      %1912 = vmatpush1.msra.mxu0 %v1786
      %1913 = vmatprep.subr.mxu0 0.0
      %1914 = vmatpush1.msra.mxu0 %v1785
      %1915 = vmatprep.subr.mxu0 0.0
      %1916 = vmatpush1.msra.mxu0 %v1784
      %1917 = vmatprep.subr.mxu0 0.0
      %1918 = vmatpush1.msra.mxu0 %v1783
      %1919 = vmatprep.subr.mxu0 0.0
      %1920 = vmatpush1.msra.mxu0 %v1782
      %1921 = vmatprep.subr.mxu0 0.0
      %1922 = vmatpush1.msra.mxu0 %v1781
      %1923 = vmatprep.subr.mxu0 0.0
      %1924 = vmatpush1.msra.mxu0 %v1780
      %1925 = vmatprep.subr.mxu0 0.0
      %1926 = vmatpush2.msra.mxu0 0.0
      %1927 = vmatprep.subr.mxu0 0.0
      %1928 = vmatpush2.msra.mxu0 0.0
      %1929 = vmatprep.subr.mxu0 0.0
      %1930 = vmatpush2.msra.mxu0 0.0
      %1931 = vmatprep.subr.mxu0 0.0
      %1932 = vmatpush2.msra.mxu0 0.0
      %1933 = vmatprep.subr.mxu0 0.0
      %1934 = vmatpush2.msra.mxu0 0.0
      %1935 = vmatprep.subr.mxu0 0.0
      %1936 = vmatpush2.msra.mxu0 0.0
      %1937 = vmatprep.subr.mxu0 0.0
      %1938 = vmatpush2.msra.mxu0 0.0
      %1939 = vmatprep.subr.mxu0 0.0
      %1940 = vmatpush2.msra.mxu0 0.0
      %1941 = vmatprep.subr.mxu0 0.0
      %1942 = vmatpush2.msra.mxu0 0.0
      %1943 = vmatprep.subr.mxu0 0.0
      %1944 = vmatpush2.msra.mxu0 0.0
      %1945 = vmatprep.subr.mxu0 0.0
      %1946 = vmatpush2.msra.mxu0 0.0
      %1947 = vmatprep.subr.mxu0 0.0
      %1948 = vmatpush2.msra.mxu0 0.0
      %1949 = vmatprep.subr.mxu0 0.0
      %1950 = vmatpush2.msra.mxu0 0.0
      %1951 = vmatprep.subr.mxu0 0.0
      %1952 = vmatpush2.msra.mxu0 0.0
      %1953 = vmatprep.subr.mxu0 0.0
      %1954 = vmatpush2.msra.mxu0 0.0
      %1955 = vmatprep.subr.mxu0 0.0
      %1956 = vmatpush2.msra.mxu0 0.0
      %1957 = vmatprep.mubr.f32.mxu0 0.0
      %1958 = vmatmul.mubr.f32.gmra.mxu0 %v1790
      %v1959 = vpop.f32.mrf.mxu0
      %v1960 = vadd.f32 0.0, %v1959
      %v1961 = vpop.f32.mrf.mxu0
      %1962 = vmatprep.mubr.f32.mxu0 0.0
      %1963 = vmatmul.mubr.f32.gmra.mxu0 %v1793
      %v1964 = vpop.f32.mrf.mxu0
      %v1965 = vadd.f32 0.0, %v1964
      %v1966 = vpop.f32.mrf.mxu0
      %1967 = vmatprep.mubr.f32.mxu0 0.0
      %1968 = vmatmul.mubr.f32.gmra.mxu0 %v1796
      %v1969 = vpop.f32.mrf.mxu0
      %v1970 = vadd.f32 0.0, %v1969
      %v1971 = vpop.f32.mrf.mxu0
      %1972 = vmatprep.mubr.f32.mxu0 0.0
      %1973 = vmatmul.mubr.f32.gmra.mxu0 %v1799
      %v1974 = vpop.f32.mrf.mxu0
      %v1975 = vadd.f32 0.0, %v1974
      %v1976 = vpop.f32.mrf.mxu0
      %1977 = vdwg.mxu0
      %v1978 = vld [vmem:[%s3] sm:$0xff]
      %v1979 = vld [vmem:[%s3 + $0x8] sm:$0xff]
      %v1980 = vld [vmem:[%s3 + $0x10] sm:$0xff]
      %v1981 = vld [vmem:[%s3 + $0x18] sm:$0xff]
      %v1982 = vld [vmem:[%s3 + $0x20] sm:$0xff]
      %v1983 = vld [vmem:[%s3 + $0x28] sm:$0xff]
      %v1984 = vld [vmem:[%s3 + $0x30] sm:$0xff]
      %v1985 = vld [vmem:[%s3 + $0x38] sm:$0xff]
      %v1986 = vld [vmem:[%s3 + $0x40] sm:$0xff]
      %v1987 = vld [vmem:[%s3 + $0x48] sm:$0xff]
      %v1988 = vld [vmem:[%s3 + $0x50] sm:$0xff]
      %v1989 = vld [vmem:[%s3 + $0x58] sm:$0xff]
      %v1990 = vld [vmem:[%s3 + $0x60] sm:$0xff]
      %v1991 = vld [vmem:[%s3 + $0x68] sm:$0xff]
      %v1992 = vld [vmem:[%s3 + $0x70] sm:$0xff]
      %v1993 = vld [vmem:[%s3 + $0x78] sm:$0xff]
      %v1994 = vld [vmem:[%s4] sm:$0xff]
      %v1995 = vld [vmem:[%s4 + $0x8] sm:$0xff]
      %v1996 = vld [vmem:[%s4 + $0x10] sm:$0xff]
      %v1997 = vld [vmem:[%s4 + $0x18] sm:$0xff]
      %v1998 = vld [vmem:[%s4 + $0x20] sm:$0xff]
      %v1999 = vld [vmem:[%s4 + $0x28] sm:$0xff]
      %v2000 = vld [vmem:[%s4 + $0x30] sm:$0xff]
      %v2001 = vld [vmem:[%s4 + $0x38] sm:$0xff]
      %2010 = vrot.lane.b32.xlu0 %v1872, 127
      %v2011 = vpop.permute.xlu0 %2010
      %2012 = vrot.lane.b32.xlu0 %v1877, 127
      %v2013 = vpop.permute.xlu0 %2012
      %2014 = vrot.lane.b32.xlu0 %v1882, 127
      %v2015 = vpop.permute.xlu0 %2014
      %2016 = vrot.lane.b32.xlu0 %v1887, 127
      %v2017 = vpop.permute.xlu0 %2016
      %2018 = vrot.lane.b32.xlu0 %v1960, 127
      %v2019 = vpop.permute.xlu0 %2018
      %2020 = vrot.lane.b32.xlu0 %v1965, 127
      %v2021 = vpop.permute.xlu0 %2020
      %2022 = vrot.lane.b32.xlu0 %v1970, 127
      %v2023 = vpop.permute.xlu0 %2022
      %2024 = vrot.lane.b32.xlu0 %v1975, 127
      %v2025 = vpop.permute.xlu0 %2024
      %2034 = vrot.lane.b32.xlu0 %v1872, 126
      %v2035 = vpop.permute.xlu0 %2034
      %2036 = vrot.lane.b32.xlu0 %v1877, 126
      %v2037 = vpop.permute.xlu0 %2036
      %2038 = vrot.lane.b32.xlu0 %v1882, 126
      %v2039 = vpop.permute.xlu0 %2038
      %2040 = vrot.lane.b32.xlu0 %v1887, 126
      %v2041 = vpop.permute.xlu0 %2040
      %2042 = vrot.lane.b32.xlu0 %v1960, 126
      %v2043 = vpop.permute.xlu0 %2042
      %2044 = vrot.lane.b32.xlu0 %v1965, 126
      %v2045 = vpop.permute.xlu0 %2044
      %2046 = vrot.lane.b32.xlu0 %v1970, 126
      %v2047 = vpop.permute.xlu0 %2046
      %2048 = vrot.lane.b32.xlu0 %v1975, 126
      %v2049 = vpop.permute.xlu0 %2048
      %2058 = vrot.lane.b32.xlu0 %v1872, 125
      %v2059 = vpop.permute.xlu0 %2058
      %2060 = vrot.lane.b32.xlu0 %v1877, 125
      %v2061 = vpop.permute.xlu0 %2060
      %2062 = vrot.lane.b32.xlu0 %v1882, 125
      %v2063 = vpop.permute.xlu0 %2062
      %2064 = vrot.lane.b32.xlu0 %v1887, 125
      %v2065 = vpop.permute.xlu0 %2064
      %2066 = vrot.lane.b32.xlu0 %v1960, 125
      %v2067 = vpop.permute.xlu0 %2066
      %2068 = vrot.lane.b32.xlu0 %v1965, 125
      %v2069 = vpop.permute.xlu0 %2068
      %2070 = vrot.lane.b32.xlu0 %v1970, 125
      %v2071 = vpop.permute.xlu0 %2070
      %2072 = vrot.lane.b32.xlu0 %v1975, 125
      %v2073 = vpop.permute.xlu0 %2072
      %2082 = vrot.lane.b32.xlu0 %v1872, 124
      %v2083 = vpop.permute.xlu0 %2082
      %2084 = vrot.lane.b32.xlu0 %v1877, 124
      %v2085 = vpop.permute.xlu0 %2084
      %2086 = vrot.lane.b32.xlu0 %v1882, 124
      %v2087 = vpop.permute.xlu0 %2086
      %2088 = vrot.lane.b32.xlu0 %v1887, 124
      %v2089 = vpop.permute.xlu0 %2088
      %2090 = vrot.lane.b32.xlu0 %v1960, 124
      %v2091 = vpop.permute.xlu0 %2090
      %2092 = vrot.lane.b32.xlu0 %v1965, 124
      %v2093 = vpop.permute.xlu0 %2092
      %2094 = vrot.lane.b32.xlu0 %v1970, 124
      %v2095 = vpop.permute.xlu0 %2094
      %2096 = vrot.lane.b32.xlu0 %v1975, 124
      %v2097 = vpop.permute.xlu0 %2096
      %2106 = vrot.lane.b32.xlu0 %v1872, 123
      %v2107 = vpop.permute.xlu0 %2106
      %2108 = vrot.lane.b32.xlu0 %v1877, 123
      %v2109 = vpop.permute.xlu0 %2108
      %2110 = vrot.lane.b32.xlu0 %v1882, 123
      %v2111 = vpop.permute.xlu0 %2110
      %2112 = vrot.lane.b32.xlu0 %v1887, 123
      %v2113 = vpop.permute.xlu0 %2112
      %2114 = vrot.lane.b32.xlu0 %v1960, 123
      %v2115 = vpop.permute.xlu0 %2114
      %2116 = vrot.lane.b32.xlu0 %v1965, 123
      %v2117 = vpop.permute.xlu0 %2116
      %2118 = vrot.lane.b32.xlu0 %v1970, 123
      %v2119 = vpop.permute.xlu0 %2118
      %2120 = vrot.lane.b32.xlu0 %v1975, 123
      %v2121 = vpop.permute.xlu0 %2120
      %2130 = vrot.lane.b32.xlu0 %v1872, 122
      %v2131 = vpop.permute.xlu0 %2130
      %2132 = vrot.lane.b32.xlu0 %v1877, 122
      %v2133 = vpop.permute.xlu0 %2132
      %2134 = vrot.lane.b32.xlu0 %v1882, 122
      %v2135 = vpop.permute.xlu0 %2134
      %2136 = vrot.lane.b32.xlu0 %v1887, 122
      %v2137 = vpop.permute.xlu0 %2136
      %2138 = vrot.lane.b32.xlu0 %v1960, 122
      %v2139 = vpop.permute.xlu0 %2138
      %2140 = vrot.lane.b32.xlu0 %v1965, 122
      %v2141 = vpop.permute.xlu0 %2140
      %2142 = vrot.lane.b32.xlu0 %v1970, 122
      %v2143 = vpop.permute.xlu0 %2142
      %2144 = vrot.lane.b32.xlu0 %v1975, 122
      %v2145 = vpop.permute.xlu0 %2144
      %2154 = vrot.lane.b32.xlu0 %v1872, 121
      %v2155 = vpop.permute.xlu0 %2154
      %2156 = vrot.lane.b32.xlu0 %v1877, 121
      %v2157 = vpop.permute.xlu0 %2156
      %2158 = vrot.lane.b32.xlu0 %v1882, 121
      %v2159 = vpop.permute.xlu0 %2158
      %2160 = vrot.lane.b32.xlu0 %v1887, 121
      %v2161 = vpop.permute.xlu0 %2160
      %2162 = vrot.lane.b32.xlu0 %v1960, 121
      %v2163 = vpop.permute.xlu0 %2162
      %2164 = vrot.lane.b32.xlu0 %v1965, 121
      %v2165 = vpop.permute.xlu0 %2164
      %2166 = vrot.lane.b32.xlu0 %v1970, 121
      %v2167 = vpop.permute.xlu0 %2166
      %2168 = vrot.lane.b32.xlu0 %v1975, 121
      %v2169 = vpop.permute.xlu0 %2168
      %v2178 = vpack.c.bf16 %v1877, %v1872
      %v2179 = vpack.c.bf16 %v1887, %v1882
      %v2180 = vpack.c.bf16 %v1965, %v1960
      %v2181 = vpack.c.bf16 %v1975, %v1970
      %v2182 = vpack.c.bf16 %v2013, %v2011
      %v2183 = vpack.c.bf16 %v2017, %v2015
      %v2184 = vpack.c.bf16 %v2021, %v2019
      %v2185 = vpack.c.bf16 %v2025, %v2023
      %v2186 = vpack.c.bf16 %v2037, %v2035
      %v2187 = vpack.c.bf16 %v2041, %v2039
      %v2188 = vpack.c.bf16 %v2045, %v2043
      %v2189 = vpack.c.bf16 %v2049, %v2047
      %v2190 = vpack.c.bf16 %v2061, %v2059
      %v2191 = vpack.c.bf16 %v2065, %v2063
      %v2192 = vpack.c.bf16 %v2069, %v2067
      %v2193 = vpack.c.bf16 %v2073, %v2071
      %v2194 = vpack.c.bf16 %v2085, %v2083
      %v2195 = vpack.c.bf16 %v2089, %v2087
      %v2196 = vpack.c.bf16 %v2093, %v2091
      %v2197 = vpack.c.bf16 %v2097, %v2095
      %v2198 = vpack.c.bf16 %v2109, %v2107
      %v2199 = vpack.c.bf16 %v2113, %v2111
      %v2200 = vpack.c.bf16 %v2117, %v2115
      %v2201 = vpack.c.bf16 %v2121, %v2119
      %v2202 = vpack.c.bf16 %v2133, %v2131
      %v2203 = vpack.c.bf16 %v2137, %v2135
      %v2204 = vpack.c.bf16 %v2141, %v2139
      %v2205 = vpack.c.bf16 %v2145, %v2143
      %v2206 = vpack.c.bf16 %v2157, %v2155
      %v2207 = vpack.c.bf16 %v2161, %v2159
      %v2208 = vpack.c.bf16 %v2165, %v2163
      %v2209 = vpack.c.bf16 %v2169, %v2167
      %2211 = vset.pattern.permute.xlu0 0
      %2212 = vperm.xlu0 %2211, %v1994
      %v2213 = vpop.permute.xlu0 %2212
      %2216 = vset.pattern.permute.xlu0 0
      %2217 = vperm.xlu0 %2216, %v1995
      %v2218 = vpop.permute.xlu0 %2217
      %2221 = vset.pattern.permute.xlu0 0
      %2222 = vperm.xlu0 %2221, %v1996
      %v2223 = vpop.permute.xlu0 %2222
      %2226 = vset.pattern.permute.xlu0 0
      %2227 = vperm.xlu0 %2226, %v1997
      %v2228 = vpop.permute.xlu0 %2227
      %2231 = vset.pattern.permute.xlu0 0
      %2232 = vperm.xlu0 %2231, %v1998
      %v2233 = vpop.permute.xlu0 %2232
      %2236 = vset.pattern.permute.xlu0 0
      %2237 = vperm.xlu0 %2236, %v1999
      %v2238 = vpop.permute.xlu0 %2237
      %2241 = vset.pattern.permute.xlu0 0
      %2242 = vperm.xlu0 %2241, %v2000
      %v2243 = vpop.permute.xlu0 %2242
      %2246 = vset.pattern.permute.xlu0 0
      %2247 = vperm.xlu0 %2246, %v2001
      %v2248 = vpop.permute.xlu0 %2247
      %v2266 = vunpack.c.l.b16 %v1978
      %v2267 = vunpack.c.h.b16 %v1978
      %v2268 = vunpack.c.l.b16 %v1979
      %v2269 = vunpack.c.h.b16 %v1979
      %v2270 = vunpack.c.l.b16 %v1980
      %v2271 = vunpack.c.h.b16 %v1980
      %v2272 = vunpack.c.l.b16 %v1981
      %v2273 = vunpack.c.h.b16 %v1981
      %v2274 = vunpack.c.l.b16 %v1982
      %v2275 = vunpack.c.h.b16 %v1982
      %v2276 = vunpack.c.l.b16 %v1983
      %v2277 = vunpack.c.h.b16 %v1983
      %v2278 = vunpack.c.l.b16 %v1984
      %v2279 = vunpack.c.h.b16 %v1984
      %v2280 = vunpack.c.l.b16 %v1985
      %v2281 = vunpack.c.h.b16 %v1985
      %v2282 = vunpack.c.l.b16 %v1986
      %v2283 = vunpack.c.h.b16 %v1986
      %v2284 = vunpack.c.l.b16 %v1987
      %v2285 = vunpack.c.h.b16 %v1987
      %v2286 = vunpack.c.l.b16 %v1988
      %v2287 = vunpack.c.h.b16 %v1988
      %v2288 = vunpack.c.l.b16 %v1989
      %v2289 = vunpack.c.h.b16 %v1989
      %v2290 = vunpack.c.l.b16 %v1990
      %v2291 = vunpack.c.h.b16 %v1990
      %v2292 = vunpack.c.l.b16 %v1991
      %v2293 = vunpack.c.h.b16 %v1991
      %v2294 = vunpack.c.l.b16 %v1992
      %v2295 = vunpack.c.h.b16 %v1992
      %v2296 = vunpack.c.l.b16 %v1993
      %v2297 = vunpack.c.h.b16 %v1993
      %v2298 = vpack.c.b16 %v2270, %v2266
      %v2299 = vpack.c.b16 %v2271, %v2267
      %v2300 = vpack.c.b16 %v2272, %v2268
      %v2301 = vpack.c.b16 %v2273, %v2269
      %v2302 = vpack.c.b16 %v2278, %v2274
      %v2303 = vpack.c.b16 %v2279, %v2275
      %v2304 = vpack.c.b16 %v2280, %v2276
      %v2305 = vpack.c.b16 %v2281, %v2277
      %v2306 = vpack.c.b16 %v2286, %v2282
      %v2307 = vpack.c.b16 %v2287, %v2283
      %v2308 = vpack.c.b16 %v2288, %v2284
      %v2309 = vpack.c.b16 %v2289, %v2285
      %v2310 = vpack.c.b16 %v2294, %v2290
      %v2311 = vpack.c.b16 %v2295, %v2291
      %v2312 = vpack.c.b16 %v2296, %v2292
      %v2313 = vpack.c.b16 %v2297, %v2293
      %2330 = vmatprep.subr.bf16.mxu0 0
      %2331 = vmatpush1.bf16.msra.mxu0 %v2185
      %2332 = vmatprep.subr.bf16.mxu0 0
      %2333 = vmatpush1.bf16.msra.mxu0 %v2184
      %2334 = vmatprep.subr.bf16.mxu0 0
      %2335 = vmatpush1.bf16.msra.mxu0 %v2183
      %2336 = vmatprep.subr.bf16.mxu0 0
      %2337 = vmatpush1.bf16.msra.mxu0 %v2182
      %2338 = vmatprep.subr.bf16.mxu0 0
      %2339 = vmatpush1.bf16.msra.mxu0 %v2181
      %2340 = vmatprep.subr.bf16.mxu0 0
      %2341 = vmatpush1.bf16.msra.mxu0 %v2180
      %2342 = vmatprep.subr.bf16.mxu0 0
      %2343 = vmatpush1.bf16.msra.mxu0 %v2179
      %2344 = vmatprep.subr.bf16.mxu0 0
      %2345 = vmatpush1.bf16.msra.mxu0 %v2178
      %2346 = vmatprep.subr.bf16.mxu0 0
      %2347 = vmatpush2.bf16.msra.mxu0 %v2193
      %2348 = vmatprep.subr.bf16.mxu0 0
      %2349 = vmatpush2.bf16.msra.mxu0 %v2192
      %2350 = vmatprep.subr.bf16.mxu0 0
      %2351 = vmatpush2.bf16.msra.mxu0 %v2191
      %2352 = vmatprep.subr.bf16.mxu0 0
      %2353 = vmatpush2.bf16.msra.mxu0 %v2190
      %2354 = vmatprep.subr.bf16.mxu0 0
      %2355 = vmatpush2.bf16.msra.mxu0 %v2189
      %2356 = vmatprep.subr.bf16.mxu0 0
      %2357 = vmatpush2.bf16.msra.mxu0 %v2188
      %2358 = vmatprep.subr.bf16.mxu0 0
      %2359 = vmatpush2.bf16.msra.mxu0 %v2187
      %2360 = vmatprep.subr.bf16.mxu0 0
      %2361 = vmatpush2.bf16.msra.mxu0 %v2186
      %2362 = vmatprep.mubr.bf16.mxu0 %v2299
      %2363 = vmatmul.mubr.bf16.gmra.mxu0 %v2298
      %v2364 = vpop.f32.mrf.mxu0
      %v2365 = vadd.f32 %v2213, %v2364
      %v2366 = vpop.f32.mrf.mxu0
      %v2367 = vpop.f32.mrf.mxu0
      %v2368 = vadd.f32 %v2218, %v2367
      %v2369 = vpop.f32.mrf.mxu0
      %2370 = vmatprep.mubr.bf16.mxu0 %v2303
      %2371 = vmatmul.mubr.bf16.gmra.mxu0 %v2302
      %v2372 = vpop.f32.mrf.mxu0
      %v2373 = vadd.f32 %v2223, %v2372
      %v2374 = vpop.f32.mrf.mxu0
      %v2375 = vpop.f32.mrf.mxu0
      %v2376 = vadd.f32 %v2228, %v2375
      %v2377 = vpop.f32.mrf.mxu0
      %2378 = vmatprep.mubr.bf16.mxu0 %v2307
      %2379 = vmatmul.mubr.bf16.gmra.mxu0 %v2306
      %v2380 = vpop.f32.mrf.mxu0
      %v2381 = vadd.f32 %v2233, %v2380
      %v2382 = vpop.f32.mrf.mxu0
      %v2383 = vpop.f32.mrf.mxu0
      %v2384 = vadd.f32 %v2238, %v2383
      %v2385 = vpop.f32.mrf.mxu0
      %2386 = vmatprep.mubr.bf16.mxu0 %v2311
      %2387 = vmatmul.mubr.bf16.gmra.mxu0 %v2310
      %v2388 = vpop.f32.mrf.mxu0
      %v2389 = vadd.f32 %v2243, %v2388
      %v2390 = vpop.f32.mrf.mxu0
      %v2391 = vpop.f32.mrf.mxu0
      %v2392 = vadd.f32 %v2248, %v2391
      %v2393 = vpop.f32.mrf.mxu0
      %2394 = vdwg.mxu0
      %2395 = vmatprep.subr.bf16.mxu0 0
      %2396 = vmatpush1.bf16.msra.mxu0 %v2201
      %2397 = vmatprep.subr.bf16.mxu0 0
      %2398 = vmatpush1.bf16.msra.mxu0 %v2200
      %2399 = vmatprep.subr.bf16.mxu0 0
      %2400 = vmatpush1.bf16.msra.mxu0 %v2199
      %2401 = vmatprep.subr.bf16.mxu0 0
      %2402 = vmatpush1.bf16.msra.mxu0 %v2198
      %2403 = vmatprep.subr.bf16.mxu0 0
      %2404 = vmatpush1.bf16.msra.mxu0 %v2197
      %2405 = vmatprep.subr.bf16.mxu0 0
      %2406 = vmatpush1.bf16.msra.mxu0 %v2196
      %2407 = vmatprep.subr.bf16.mxu0 0
      %2408 = vmatpush1.bf16.msra.mxu0 %v2195
      %2409 = vmatprep.subr.bf16.mxu0 0
      %2410 = vmatpush1.bf16.msra.mxu0 %v2194
      %2411 = vmatprep.subr.bf16.mxu0 0
      %2412 = vmatpush2.bf16.msra.mxu0 %v2209
      %2413 = vmatprep.subr.bf16.mxu0 0
      %2414 = vmatpush2.bf16.msra.mxu0 %v2208
      %2415 = vmatprep.subr.bf16.mxu0 0
      %2416 = vmatpush2.bf16.msra.mxu0 %v2207
      %2417 = vmatprep.subr.bf16.mxu0 0
      %2418 = vmatpush2.bf16.msra.mxu0 %v2206
      %2419 = vmatprep.subr.bf16.mxu0 0
      %2420 = vmatpush2.bf16.msra.mxu0 %v2205
      %2421 = vmatprep.subr.bf16.mxu0 0
      %2422 = vmatpush2.bf16.msra.mxu0 %v2204
      %2423 = vmatprep.subr.bf16.mxu0 0
      %2424 = vmatpush2.bf16.msra.mxu0 %v2203
      %2425 = vmatprep.subr.bf16.mxu0 0
      %2426 = vmatpush2.bf16.msra.mxu0 %v2202
      %2427 = vmatprep.mubr.bf16.mxu0 %v2301
      %2428 = vmatmul.mubr.bf16.gmra.mxu0 %v2300
      %v2429 = vpop.f32.mrf.mxu0
      %v2430 = vadd.f32 %v2365, %v2429
      %v2431 = vpop.f32.mrf.mxu0
      %v2432 = vpop.f32.mrf.mxu0
      %v2433 = vadd.f32 %v2368, %v2432
      %v2434 = vpop.f32.mrf.mxu0
      %2435 = vmatprep.mubr.bf16.mxu0 %v2305
      %2436 = vmatmul.mubr.bf16.gmra.mxu0 %v2304
      %v2437 = vpop.f32.mrf.mxu0
      %v2438 = vadd.f32 %v2373, %v2437
      %v2439 = vpop.f32.mrf.mxu0
      %v2440 = vpop.f32.mrf.mxu0
      %v2441 = vadd.f32 %v2376, %v2440
      %v2442 = vpop.f32.mrf.mxu0
      %2443 = vmatprep.mubr.bf16.mxu0 %v2309
      %2444 = vmatmul.mubr.bf16.gmra.mxu0 %v2308
      %v2445 = vpop.f32.mrf.mxu0
      %v2446 = vadd.f32 %v2381, %v2445
      %v2447 = vpop.f32.mrf.mxu0
      %v2448 = vpop.f32.mrf.mxu0
      %v2449 = vadd.f32 %v2384, %v2448
      %v2450 = vpop.f32.mrf.mxu0
      %2451 = vmatprep.mubr.bf16.mxu0 %v2313
      %2452 = vmatmul.mubr.bf16.gmra.mxu0 %v2312
      %v2453 = vpop.f32.mrf.mxu0
      %v2454 = vadd.f32 %v2389, %v2453
      %v2455 = vpop.f32.mrf.mxu0
      %v2456 = vpop.f32.mrf.mxu0
      %v2457 = vadd.f32 %v2392, %v2456
      %v2458 = vpop.f32.mrf.mxu0
      %2459 = vdwg.mxu0
      %vm2460 = vcmask 179200
      %v2462 = vsel %vm2460, %v2430, 0
      %v2465 = vsel %vm2460, %v2433, 0
      %v2468 = vsel %vm2460, %v2438, 0
      %v2471 = vsel %vm2460, %v2441, 0
      %v2474 = vsel %vm2460, %v2446, 0
      %v2477 = vsel %vm2460, %v2449, 0
      %v2480 = vsel %vm2460, %v2454, 0
      %v2483 = vsel %vm2460, %v2457, 0
      %vm2485 = vcmask 1045504
      %v2487 = vsel %vm2485, %v1757, 0
      %2489 = vmatprep.subr.mxu0 0.0
      %2490 = vmatpush1.msra.mxu0 0.0
      %2491 = vmatprep.subr.mxu0 0.0
      %2492 = vmatpush1.msra.mxu0 0.0
      %2493 = vmatprep.subr.mxu0 0.0
      %2494 = vmatpush1.msra.mxu0 0.0
      %2495 = vmatprep.subr.mxu0 0.0
      %2496 = vmatpush1.msra.mxu0 0.0
      %2497 = vmatprep.subr.mxu0 0.0
      %2498 = vmatpush1.msra.mxu0 0.0
      %2499 = vmatprep.subr.mxu0 0.0
      %2500 = vmatpush1.msra.mxu0 0.0
      %2501 = vmatprep.subr.mxu0 0.0
      %2502 = vmatpush1.msra.mxu0 0.0
      %2503 = vmatprep.subr.mxu0 0.0
      %2504 = vmatpush1.msra.mxu0 0.0
      %2505 = vmatprep.subr.mxu0 0.0
      %2506 = vmatpush1.msra.mxu0 0.0
      %2507 = vmatprep.subr.mxu0 0.0
      %2508 = vmatpush1.msra.mxu0 0.0
      %2509 = vmatprep.subr.mxu0 0.0
      %2510 = vmatpush1.msra.mxu0 0.0
      %2511 = vmatprep.subr.mxu0 0.0
      %2512 = vmatpush1.msra.mxu0 0.0
      %2513 = vmatprep.subr.mxu0 0.0
      %2514 = vmatpush1.msra.mxu0 0.0
      %2515 = vmatprep.subr.mxu0 0.0
      %2516 = vmatpush1.msra.mxu0 %v2487
      %2517 = vmatprep.subr.mxu0 0.0
      %2518 = vmatpush1.msra.mxu0 %v1756
      %2519 = vmatprep.subr.mxu0 0.0
      %2520 = vmatpush1.msra.mxu0 %v1755
      %2521 = vmatprep.subr.mxu0 0.0
      %2522 = vmatpush2.msra.mxu0 0.0
      %2523 = vmatprep.subr.mxu0 0.0
      %2524 = vmatpush2.msra.mxu0 0.0
      %2525 = vmatprep.subr.mxu0 0.0
      %2526 = vmatpush2.msra.mxu0 0.0
      %2527 = vmatprep.subr.mxu0 0.0
      %2528 = vmatpush2.msra.mxu0 0.0
      %2529 = vmatprep.subr.mxu0 0.0
      %2530 = vmatpush2.msra.mxu0 0.0
      %2531 = vmatprep.subr.mxu0 0.0
      %2532 = vmatpush2.msra.mxu0 0.0
      %2533 = vmatprep.subr.mxu0 0.0
      %2534 = vmatpush2.msra.mxu0 0.0
      %2535 = vmatprep.subr.mxu0 0.0
      %2536 = vmatpush2.msra.mxu0 0.0
      %2537 = vmatprep.subr.mxu0 0.0
      %2538 = vmatpush2.msra.mxu0 0.0
      %2539 = vmatprep.subr.mxu0 0.0
      %2540 = vmatpush2.msra.mxu0 0.0
      %2541 = vmatprep.subr.mxu0 0.0
      %2542 = vmatpush2.msra.mxu0 0.0
      %2543 = vmatprep.subr.mxu0 0.0
      %2544 = vmatpush2.msra.mxu0 0.0
      %2545 = vmatprep.subr.mxu0 0.0
      %2546 = vmatpush2.msra.mxu0 0.0
      %2547 = vmatprep.subr.mxu0 0.0
      %2548 = vmatpush2.msra.mxu0 0.0
      %2549 = vmatprep.subr.mxu0 0.0
      %2550 = vmatpush2.msra.mxu0 0.0
      %2551 = vmatprep.subr.mxu0 0.0
      %2552 = vmatpush2.msra.mxu0 0.0
      %2553 = vmatprep.mubr.f32.mxu0 0.0
      %2554 = vmatmul.mubr.f32.gmra.mxu0 %v2462
      %v2555 = vpop.f32.mrf.mxu0
      %v2556 = vadd.f32 0.0, %v2555
      %v2557 = vpop.f32.mrf.mxu0
      %2558 = vmatprep.mubr.f32.mxu0 0.0
      %2559 = vmatmul.mubr.f32.gmra.mxu0 %v2465
      %v2560 = vpop.f32.mrf.mxu0
      %v2561 = vadd.f32 0.0, %v2560
      %v2562 = vpop.f32.mrf.mxu0
      %2563 = vmatprep.mubr.f32.mxu0 0.0
      %2564 = vmatmul.mubr.f32.gmra.mxu0 %v2468
      %v2565 = vpop.f32.mrf.mxu0
      %v2566 = vadd.f32 0.0, %v2565
      %v2567 = vpop.f32.mrf.mxu0
      %2568 = vmatprep.mubr.f32.mxu0 0.0
      %2569 = vmatmul.mubr.f32.gmra.mxu0 %v2471
      %v2570 = vpop.f32.mrf.mxu0
      %v2571 = vadd.f32 0.0, %v2570
      %v2572 = vpop.f32.mrf.mxu0
      %2573 = vmatprep.mubr.f32.mxu0 0.0
      %2574 = vmatmul.mubr.f32.gmra.mxu0 %v2474
      %v2575 = vpop.f32.mrf.mxu0
      %v2576 = vadd.f32 0.0, %v2575
      %v2577 = vpop.f32.mrf.mxu0
      %2578 = vmatprep.mubr.f32.mxu0 0.0
      %2579 = vmatmul.mubr.f32.gmra.mxu0 %v2477
      %v2580 = vpop.f32.mrf.mxu0
      %v2581 = vadd.f32 0.0, %v2580
      %v2582 = vpop.f32.mrf.mxu0
      %2583 = vmatprep.mubr.f32.mxu0 0.0
      %2584 = vmatmul.mubr.f32.gmra.mxu0 %v2480
      %v2585 = vpop.f32.mrf.mxu0
      %v2586 = vadd.f32 0.0, %v2585
      %v2587 = vpop.f32.mrf.mxu0
      %2588 = vmatprep.mubr.f32.mxu0 0.0
      %2589 = vmatmul.mubr.f32.gmra.mxu0 %v2483
      %v2590 = vpop.f32.mrf.mxu0
      %v2591 = vadd.f32 0.0, %v2590
      %v2592 = vpop.f32.mrf.mxu0
      %2593 = vdwg.mxu0
      %v2595 = vsel %vm2485, %v1782, 0
      %2597 = vmatprep.subr.mxu0 0.0
      %2598 = vmatpush1.msra.mxu0 0.0
      %2599 = vmatprep.subr.mxu0 0.0
      %2600 = vmatpush1.msra.mxu0 0.0
      %2601 = vmatprep.subr.mxu0 0.0
      %2602 = vmatpush1.msra.mxu0 0.0
      %2603 = vmatprep.subr.mxu0 0.0
      %2604 = vmatpush1.msra.mxu0 0.0
      %2605 = vmatprep.subr.mxu0 0.0
      %2606 = vmatpush1.msra.mxu0 0.0
      %2607 = vmatprep.subr.mxu0 0.0
      %2608 = vmatpush1.msra.mxu0 0.0
      %2609 = vmatprep.subr.mxu0 0.0
      %2610 = vmatpush1.msra.mxu0 0.0
      %2611 = vmatprep.subr.mxu0 0.0
      %2612 = vmatpush1.msra.mxu0 0.0
      %2613 = vmatprep.subr.mxu0 0.0
      %2614 = vmatpush1.msra.mxu0 0.0
      %2615 = vmatprep.subr.mxu0 0.0
      %2616 = vmatpush1.msra.mxu0 0.0
      %2617 = vmatprep.subr.mxu0 0.0
      %2618 = vmatpush1.msra.mxu0 0.0
      %2619 = vmatprep.subr.mxu0 0.0
      %2620 = vmatpush1.msra.mxu0 0.0
      %2621 = vmatprep.subr.mxu0 0.0
      %2622 = vmatpush1.msra.mxu0 0.0
      %2623 = vmatprep.subr.mxu0 0.0
      %2624 = vmatpush1.msra.mxu0 %v2595
      %2625 = vmatprep.subr.mxu0 0.0
      %2626 = vmatpush1.msra.mxu0 %v1781
      %2627 = vmatprep.subr.mxu0 0.0
      %2628 = vmatpush1.msra.mxu0 %v1780
      %2629 = vmatprep.subr.mxu0 0.0
      %2630 = vmatpush2.msra.mxu0 0.0
      %2631 = vmatprep.subr.mxu0 0.0
      %2632 = vmatpush2.msra.mxu0 0.0
      %2633 = vmatprep.subr.mxu0 0.0
      %2634 = vmatpush2.msra.mxu0 0.0
      %2635 = vmatprep.subr.mxu0 0.0
      %2636 = vmatpush2.msra.mxu0 0.0
      %2637 = vmatprep.subr.mxu0 0.0
      %2638 = vmatpush2.msra.mxu0 0.0
      %2639 = vmatprep.subr.mxu0 0.0
      %2640 = vmatpush2.msra.mxu0 0.0
      %2641 = vmatprep.subr.mxu0 0.0
      %2642 = vmatpush2.msra.mxu0 0.0
      %2643 = vmatprep.subr.mxu0 0.0
      %2644 = vmatpush2.msra.mxu0 0.0
      %2645 = vmatprep.subr.mxu0 0.0
      %2646 = vmatpush2.msra.mxu0 0.0
      %2647 = vmatprep.subr.mxu0 0.0
      %2648 = vmatpush2.msra.mxu0 0.0
      %2649 = vmatprep.subr.mxu0 0.0
      %2650 = vmatpush2.msra.mxu0 0.0
      %2651 = vmatprep.subr.mxu0 0.0
      %2652 = vmatpush2.msra.mxu0 0.0
      %2653 = vmatprep.subr.mxu0 0.0
      %2654 = vmatpush2.msra.mxu0 0.0
      %2655 = vmatprep.subr.mxu0 0.0
      %2656 = vmatpush2.msra.mxu0 0.0
      %2657 = vmatprep.subr.mxu0 0.0
      %2658 = vmatpush2.msra.mxu0 0.0
      %2659 = vmatprep.subr.mxu0 0.0
      %2660 = vmatpush2.msra.mxu0 0.0
      %2661 = vmatprep.mubr.f32.mxu0 0.0
      %2662 = vmatmul.mubr.f32.gmra.mxu0 %v2462
      %v2663 = vpop.f32.mrf.mxu0
      %v2664 = vadd.f32 0.0, %v2663
      %v2665 = vpop.f32.mrf.mxu0
      %2666 = vmatprep.mubr.f32.mxu0 0.0
      %2667 = vmatmul.mubr.f32.gmra.mxu0 %v2465
      %v2668 = vpop.f32.mrf.mxu0
      %v2669 = vadd.f32 0.0, %v2668
      %v2670 = vpop.f32.mrf.mxu0
      %2671 = vmatprep.mubr.f32.mxu0 0.0
      %2672 = vmatmul.mubr.f32.gmra.mxu0 %v2468
      %v2673 = vpop.f32.mrf.mxu0
      %v2674 = vadd.f32 0.0, %v2673
      %v2675 = vpop.f32.mrf.mxu0
      %2676 = vmatprep.mubr.f32.mxu0 0.0
      %2677 = vmatmul.mubr.f32.gmra.mxu0 %v2471
      %v2678 = vpop.f32.mrf.mxu0
      %v2679 = vadd.f32 0.0, %v2678
      %v2680 = vpop.f32.mrf.mxu0
      %2681 = vmatprep.mubr.f32.mxu0 0.0
      %2682 = vmatmul.mubr.f32.gmra.mxu0 %v2474
      %v2683 = vpop.f32.mrf.mxu0
      %v2684 = vadd.f32 0.0, %v2683
      %v2685 = vpop.f32.mrf.mxu0
      %2686 = vmatprep.mubr.f32.mxu0 0.0
      %2687 = vmatmul.mubr.f32.gmra.mxu0 %v2477
      %v2688 = vpop.f32.mrf.mxu0
      %v2689 = vadd.f32 0.0, %v2688
      %v2690 = vpop.f32.mrf.mxu0
      %2691 = vmatprep.mubr.f32.mxu0 0.0
      %2692 = vmatmul.mubr.f32.gmra.mxu0 %v2480
      %v2693 = vpop.f32.mrf.mxu0
      %v2694 = vadd.f32 0.0, %v2693
      %v2695 = vpop.f32.mrf.mxu0
      %2696 = vmatprep.mubr.f32.mxu0 0.0
      %2697 = vmatmul.mubr.f32.gmra.mxu0 %v2483
      %v2698 = vpop.f32.mrf.mxu0
      %v2699 = vadd.f32 0.0, %v2698
      %v2700 = vpop.f32.mrf.mxu0
      %2701 = vdwg.mxu0
      %v2702 = vld [vmem:[%s5] sm:$0xff]
      %v2703 = vld [vmem:[%s5 + $0x8] sm:$0xff]
      %v2704 = vld [vmem:[%s5 + $0x10] sm:$0xff]
      %v2705 = vld [vmem:[%s5 + $0x18] sm:$0xff]
      %v2706 = vld [vmem:[%s5 + $0x20] sm:$0xff]
      %v2707 = vld [vmem:[%s5 + $0x28] sm:$0xff]
      %v2708 = vld [vmem:[%s5 + $0x30] sm:$0xff]
      %v2709 = vld [vmem:[%s5 + $0x38] sm:$0xff]
      %v2710 = vld [vmem:[%s5 + $0x40] sm:$0xff]
      %v2711 = vld [vmem:[%s5 + $0x48] sm:$0xff]
      %v2712 = vld [vmem:[%s5 + $0x50] sm:$0xff]
      %v2713 = vld [vmem:[%s5 + $0x58] sm:$0xff]
      %v2714 = vld [vmem:[%s5 + $0x60] sm:$0xff]
      %v2715 = vld [vmem:[%s5 + $0x68] sm:$0xff]
      %v2716 = vld [vmem:[%s5 + $0x70] sm:$0xff]
      %v2717 = vld [vmem:[%s5 + $0x78] sm:$0xff]
      %v2718 = vld [vmem:[%s5 + $0x80] sm:$0xff]
      %v2719 = vld [vmem:[%s5 + $0x88] sm:$0xff]
      %v2720 = vld [vmem:[%s5 + $0x90] sm:$0xff]
      %v2721 = vld [vmem:[%s5 + $0x98] sm:$0xff]
      %v2722 = vld [vmem:[%s5 + $0xa0] sm:$0xff]
      %v2723 = vld [vmem:[%s5 + $0xa8] sm:$0xff]
      %v2724 = vld [vmem:[%s5 + $0xb0] sm:$0xff]
      %v2725 = vld [vmem:[%s5 + $0xb8] sm:$0xff]
      %v2726 = vld [vmem:[%s5 + $0xc0] sm:$0xff]
      %v2727 = vld [vmem:[%s5 + $0xc8] sm:$0xff]
      %v2728 = vld [vmem:[%s5 + $0xd0] sm:$0xff]
      %v2729 = vld [vmem:[%s5 + $0xd8] sm:$0xff]
      %v2730 = vld [vmem:[%s5 + $0xe0] sm:$0xff]
      %v2731 = vld [vmem:[%s5 + $0xe8] sm:$0xff]
      %v2732 = vld [vmem:[%s5 + $0xf0] sm:$0xff]
      %v2733 = vld [vmem:[%s5 + $0xf8] sm:$0xff]
      %v2734 = vld [vmem:[%s6] sm:$0xff]
      %v2735 = vld [vmem:[%s6 + $0x8] sm:$0xff]
      %v2736 = vld [vmem:[%s6 + $0x10] sm:$0xff]
      %v2737 = vld [vmem:[%s6 + $0x18] sm:$0xff]
      %v2738 = vld [vmem:[%s6 + $0x20] sm:$0xff]
      %v2739 = vld [vmem:[%s6 + $0x28] sm:$0xff]
      %v2740 = vld [vmem:[%s6 + $0x30] sm:$0xff]
      %v2741 = vld [vmem:[%s6 + $0x38] sm:$0xff]
      %v2742 = vld [vmem:[%s6 + $0x40] sm:$0xff]
      %v2743 = vld [vmem:[%s6 + $0x48] sm:$0xff]
      %v2744 = vld [vmem:[%s6 + $0x50] sm:$0xff]
      %v2745 = vld [vmem:[%s6 + $0x58] sm:$0xff]
      %v2746 = vld [vmem:[%s6 + $0x60] sm:$0xff]
      %v2747 = vld [vmem:[%s6 + $0x68] sm:$0xff]
      %v2748 = vld [vmem:[%s6 + $0x70] sm:$0xff]
      %v2749 = vld [vmem:[%s6 + $0x78] sm:$0xff]
      %2766 = vrot.lane.b32.xlu0 %v2556, 127
      %v2767 = vpop.permute.xlu0 %2766
      %2768 = vrot.lane.b32.xlu0 %v2561, 127
      %v2769 = vpop.permute.xlu0 %2768
      %2770 = vrot.lane.b32.xlu0 %v2566, 127
      %v2771 = vpop.permute.xlu0 %2770
      %2772 = vrot.lane.b32.xlu0 %v2571, 127
      %v2773 = vpop.permute.xlu0 %2772
      %2774 = vrot.lane.b32.xlu0 %v2576, 127
      %v2775 = vpop.permute.xlu0 %2774
      %2776 = vrot.lane.b32.xlu0 %v2581, 127
      %v2777 = vpop.permute.xlu0 %2776
      %2778 = vrot.lane.b32.xlu0 %v2586, 127
      %v2779 = vpop.permute.xlu0 %2778
      %2780 = vrot.lane.b32.xlu0 %v2591, 127
      %v2781 = vpop.permute.xlu0 %2780
      %2782 = vrot.lane.b32.xlu0 %v2664, 127
      %v2783 = vpop.permute.xlu0 %2782
      %2784 = vrot.lane.b32.xlu0 %v2669, 127
      %v2785 = vpop.permute.xlu0 %2784
      %2786 = vrot.lane.b32.xlu0 %v2674, 127
      %v2787 = vpop.permute.xlu0 %2786
      %2788 = vrot.lane.b32.xlu0 %v2679, 127
      %v2789 = vpop.permute.xlu0 %2788
      %2790 = vrot.lane.b32.xlu0 %v2684, 127
      %v2791 = vpop.permute.xlu0 %2790
      %2792 = vrot.lane.b32.xlu0 %v2689, 127
      %v2793 = vpop.permute.xlu0 %2792
      %2794 = vrot.lane.b32.xlu0 %v2694, 127
      %v2795 = vpop.permute.xlu0 %2794
      %2796 = vrot.lane.b32.xlu0 %v2699, 127
      %v2797 = vpop.permute.xlu0 %2796
      %2814 = vrot.lane.b32.xlu0 %v2556, 126
      %v2815 = vpop.permute.xlu0 %2814
      %2816 = vrot.lane.b32.xlu0 %v2561, 126
      %v2817 = vpop.permute.xlu0 %2816
      %2818 = vrot.lane.b32.xlu0 %v2566, 126
      %v2819 = vpop.permute.xlu0 %2818
      %2820 = vrot.lane.b32.xlu0 %v2571, 126
      %v2821 = vpop.permute.xlu0 %2820
      %2822 = vrot.lane.b32.xlu0 %v2576, 126
      %v2823 = vpop.permute.xlu0 %2822
      %2824 = vrot.lane.b32.xlu0 %v2581, 126
      %v2825 = vpop.permute.xlu0 %2824
      %2826 = vrot.lane.b32.xlu0 %v2586, 126
      %v2827 = vpop.permute.xlu0 %2826
      %2828 = vrot.lane.b32.xlu0 %v2591, 126
      %v2829 = vpop.permute.xlu0 %2828
      %2830 = vrot.lane.b32.xlu0 %v2664, 126
      %v2831 = vpop.permute.xlu0 %2830
      %2832 = vrot.lane.b32.xlu0 %v2669, 126
      %v2833 = vpop.permute.xlu0 %2832
      %2834 = vrot.lane.b32.xlu0 %v2674, 126
      %v2835 = vpop.permute.xlu0 %2834
      %2836 = vrot.lane.b32.xlu0 %v2679, 126
      %v2837 = vpop.permute.xlu0 %2836
      %2838 = vrot.lane.b32.xlu0 %v2684, 126
      %v2839 = vpop.permute.xlu0 %2838
      %2840 = vrot.lane.b32.xlu0 %v2689, 126
      %v2841 = vpop.permute.xlu0 %2840
      %2842 = vrot.lane.b32.xlu0 %v2694, 126
      %v2843 = vpop.permute.xlu0 %2842
      %2844 = vrot.lane.b32.xlu0 %v2699, 126
      %v2845 = vpop.permute.xlu0 %2844
      %2862 = vrot.lane.b32.xlu0 %v2556, 125
      %v2863 = vpop.permute.xlu0 %2862
      %2864 = vrot.lane.b32.xlu0 %v2561, 125
      %v2865 = vpop.permute.xlu0 %2864
      %2866 = vrot.lane.b32.xlu0 %v2566, 125
      %v2867 = vpop.permute.xlu0 %2866
      %2868 = vrot.lane.b32.xlu0 %v2571, 125
      %v2869 = vpop.permute.xlu0 %2868
      %2870 = vrot.lane.b32.xlu0 %v2576, 125
      %v2871 = vpop.permute.xlu0 %2870
      %2872 = vrot.lane.b32.xlu0 %v2581, 125
      %v2873 = vpop.permute.xlu0 %2872
      %2874 = vrot.lane.b32.xlu0 %v2586, 125
      %v2875 = vpop.permute.xlu0 %2874
      %2876 = vrot.lane.b32.xlu0 %v2591, 125
      %v2877 = vpop.permute.xlu0 %2876
      %2878 = vrot.lane.b32.xlu0 %v2664, 125
      %v2879 = vpop.permute.xlu0 %2878
      %2880 = vrot.lane.b32.xlu0 %v2669, 125
      %v2881 = vpop.permute.xlu0 %2880
      %2882 = vrot.lane.b32.xlu0 %v2674, 125
      %v2883 = vpop.permute.xlu0 %2882
      %2884 = vrot.lane.b32.xlu0 %v2679, 125
      %v2885 = vpop.permute.xlu0 %2884
      %2886 = vrot.lane.b32.xlu0 %v2684, 125
      %v2887 = vpop.permute.xlu0 %2886
      %2888 = vrot.lane.b32.xlu0 %v2689, 125
      %v2889 = vpop.permute.xlu0 %2888
      %2890 = vrot.lane.b32.xlu0 %v2694, 125
      %v2891 = vpop.permute.xlu0 %2890
      %2892 = vrot.lane.b32.xlu0 %v2699, 125
      %v2893 = vpop.permute.xlu0 %2892
      %v2910 = vpack.c.bf16 %v2561, %v2556
      %v2911 = vpack.c.bf16 %v2571, %v2566
      %v2912 = vpack.c.bf16 %v2581, %v2576
      %v2913 = vpack.c.bf16 %v2591, %v2586
      %v2914 = vpack.c.bf16 %v2669, %v2664
      %v2915 = vpack.c.bf16 %v2679, %v2674
      %v2916 = vpack.c.bf16 %v2689, %v2684
      %v2917 = vpack.c.bf16 %v2699, %v2694
      %v2918 = vpack.c.bf16 %v2769, %v2767
      %v2919 = vpack.c.bf16 %v2773, %v2771
      %v2920 = vpack.c.bf16 %v2777, %v2775
      %v2921 = vpack.c.bf16 %v2781, %v2779
      %v2922 = vpack.c.bf16 %v2785, %v2783
      %v2923 = vpack.c.bf16 %v2789, %v2787
      %v2924 = vpack.c.bf16 %v2793, %v2791
      %v2925 = vpack.c.bf16 %v2797, %v2795
      %v2926 = vpack.c.bf16 %v2817, %v2815
      %v2927 = vpack.c.bf16 %v2821, %v2819
      %v2928 = vpack.c.bf16 %v2825, %v2823
      %v2929 = vpack.c.bf16 %v2829, %v2827
      %v2930 = vpack.c.bf16 %v2833, %v2831
      %v2931 = vpack.c.bf16 %v2837, %v2835
      %v2932 = vpack.c.bf16 %v2841, %v2839
      %v2933 = vpack.c.bf16 %v2845, %v2843
      %v2934 = vpack.c.bf16 %v2865, %v2863
      %v2935 = vpack.c.bf16 %v2869, %v2867
      %v2936 = vpack.c.bf16 %v2873, %v2871
      %v2937 = vpack.c.bf16 %v2877, %v2875
      %v2938 = vpack.c.bf16 %v2881, %v2879
      %v2939 = vpack.c.bf16 %v2885, %v2883
      %v2940 = vpack.c.bf16 %v2889, %v2887
      %v2941 = vpack.c.bf16 %v2893, %v2891
      %2943 = vset.pattern.permute.xlu0 0
      %2944 = vperm.xlu0 %2943, %v2734
      %v2945 = vpop.permute.xlu0 %2944
      %2948 = vset.pattern.permute.xlu0 0
      %2949 = vperm.xlu0 %2948, %v2735
      %v2950 = vpop.permute.xlu0 %2949
      %2953 = vset.pattern.permute.xlu0 0
      %2954 = vperm.xlu0 %2953, %v2736
      %v2955 = vpop.permute.xlu0 %2954
      %2958 = vset.pattern.permute.xlu0 0
      %2959 = vperm.xlu0 %2958, %v2737
      %v2960 = vpop.permute.xlu0 %2959
      %2963 = vset.pattern.permute.xlu0 0
      %2964 = vperm.xlu0 %2963, %v2738
      %v2965 = vpop.permute.xlu0 %2964
      %2968 = vset.pattern.permute.xlu0 0
      %2969 = vperm.xlu0 %2968, %v2739
      %v2970 = vpop.permute.xlu0 %2969
      %2973 = vset.pattern.permute.xlu0 0
      %2974 = vperm.xlu0 %2973, %v2740
      %v2975 = vpop.permute.xlu0 %2974
      %2978 = vset.pattern.permute.xlu0 0
      %2979 = vperm.xlu0 %2978, %v2741
      %v2980 = vpop.permute.xlu0 %2979
      %2983 = vset.pattern.permute.xlu0 0
      %2984 = vperm.xlu0 %2983, %v2742
      %v2985 = vpop.permute.xlu0 %2984
      %2988 = vset.pattern.permute.xlu0 0
      %2989 = vperm.xlu0 %2988, %v2743
      %v2990 = vpop.permute.xlu0 %2989
      %2993 = vset.pattern.permute.xlu0 0
      %2994 = vperm.xlu0 %2993, %v2744
      %v2995 = vpop.permute.xlu0 %2994
      %2998 = vset.pattern.permute.xlu0 0
      %2999 = vperm.xlu0 %2998, %v2745
      %v3000 = vpop.permute.xlu0 %2999
      %3003 = vset.pattern.permute.xlu0 0
      %3004 = vperm.xlu0 %3003, %v2746
      %v3005 = vpop.permute.xlu0 %3004
      %3008 = vset.pattern.permute.xlu0 0
      %3009 = vperm.xlu0 %3008, %v2747
      %v3010 = vpop.permute.xlu0 %3009
      %3013 = vset.pattern.permute.xlu0 0
      %3014 = vperm.xlu0 %3013, %v2748
      %v3015 = vpop.permute.xlu0 %3014
      %3018 = vset.pattern.permute.xlu0 0
      %3019 = vperm.xlu0 %3018, %v2749
      %v3020 = vpop.permute.xlu0 %3019
      %v3054 = vunpack.c.l.b16 %v2702
      %v3055 = vunpack.c.h.b16 %v2702
      %v3056 = vunpack.c.l.b16 %v2703
      %v3057 = vunpack.c.h.b16 %v2703
      %v3058 = vunpack.c.l.b16 %v2704
      %v3059 = vunpack.c.h.b16 %v2704
      %v3060 = vunpack.c.l.b16 %v2705
      %v3061 = vunpack.c.h.b16 %v2705
      %v3062 = vunpack.c.l.b16 %v2706
      %v3063 = vunpack.c.h.b16 %v2706
      %v3064 = vunpack.c.l.b16 %v2707
      %v3065 = vunpack.c.h.b16 %v2707
      %v3066 = vunpack.c.l.b16 %v2708
      %v3067 = vunpack.c.h.b16 %v2708
      %v3068 = vunpack.c.l.b16 %v2709
      %v3069 = vunpack.c.h.b16 %v2709
      %v3070 = vunpack.c.l.b16 %v2710
      %v3071 = vunpack.c.h.b16 %v2710
      %v3072 = vunpack.c.l.b16 %v2711
      %v3073 = vunpack.c.h.b16 %v2711
      %v3074 = vunpack.c.l.b16 %v2712
      %v3075 = vunpack.c.h.b16 %v2712
      %v3076 = vunpack.c.l.b16 %v2713
      %v3077 = vunpack.c.h.b16 %v2713
      %v3078 = vunpack.c.l.b16 %v2714
      %v3079 = vunpack.c.h.b16 %v2714
      %v3080 = vunpack.c.l.b16 %v2715
      %v3081 = vunpack.c.h.b16 %v2715
      %v3082 = vunpack.c.l.b16 %v2716
      %v3083 = vunpack.c.h.b16 %v2716
      %v3084 = vunpack.c.l.b16 %v2717
      %v3085 = vunpack.c.h.b16 %v2717
      %v3086 = vunpack.c.l.b16 %v2718
      %v3087 = vunpack.c.h.b16 %v2718
      %v3088 = vunpack.c.l.b16 %v2719
      %v3089 = vunpack.c.h.b16 %v2719
      %v3090 = vunpack.c.l.b16 %v2720
      %v3091 = vunpack.c.h.b16 %v2720
      %v3092 = vunpack.c.l.b16 %v2721
      %v3093 = vunpack.c.h.b16 %v2721
      %v3094 = vunpack.c.l.b16 %v2722
      %v3095 = vunpack.c.h.b16 %v2722
      %v3096 = vunpack.c.l.b16 %v2723
      %v3097 = vunpack.c.h.b16 %v2723
      %v3098 = vunpack.c.l.b16 %v2724
      %v3099 = vunpack.c.h.b16 %v2724
      %v3100 = vunpack.c.l.b16 %v2725
      %v3101 = vunpack.c.h.b16 %v2725
      %v3102 = vunpack.c.l.b16 %v2726
      %v3103 = vunpack.c.h.b16 %v2726
      %v3104 = vunpack.c.l.b16 %v2727
      %v3105 = vunpack.c.h.b16 %v2727
      %v3106 = vunpack.c.l.b16 %v2728
      %v3107 = vunpack.c.h.b16 %v2728
      %v3108 = vunpack.c.l.b16 %v2729
      %v3109 = vunpack.c.h.b16 %v2729
      %v3110 = vunpack.c.l.b16 %v2730
      %v3111 = vunpack.c.h.b16 %v2730
      %v3112 = vunpack.c.l.b16 %v2731
      %v3113 = vunpack.c.h.b16 %v2731
      %v3114 = vunpack.c.l.b16 %v2732
      %v3115 = vunpack.c.h.b16 %v2732
      %v3116 = vunpack.c.l.b16 %v2733
      %v3117 = vunpack.c.h.b16 %v2733
      %v3118 = vpack.c.b16 %v3058, %v3054
      %v3119 = vpack.c.b16 %v3059, %v3055
      %v3120 = vpack.c.b16 %v3060, %v3056
      %v3121 = vpack.c.b16 %v3061, %v3057
      %v3122 = vpack.c.b16 %v3066, %v3062
      %v3123 = vpack.c.b16 %v3067, %v3063
      %v3124 = vpack.c.b16 %v3068, %v3064
      %v3125 = vpack.c.b16 %v3069, %v3065
      %v3126 = vpack.c.b16 %v3074, %v3070
      %v3127 = vpack.c.b16 %v3075, %v3071
      %v3128 = vpack.c.b16 %v3076, %v3072
      %v3129 = vpack.c.b16 %v3077, %v3073
      %v3130 = vpack.c.b16 %v3082, %v3078
      %v3131 = vpack.c.b16 %v3083, %v3079
      %v3132 = vpack.c.b16 %v3084, %v3080
      %v3133 = vpack.c.b16 %v3085, %v3081
      %v3134 = vpack.c.b16 %v3090, %v3086
      %v3135 = vpack.c.b16 %v3091, %v3087
      %v3136 = vpack.c.b16 %v3092, %v3088
      %v3137 = vpack.c.b16 %v3093, %v3089
      %v3138 = vpack.c.b16 %v3098, %v3094
      %v3139 = vpack.c.b16 %v3099, %v3095
      %v3140 = vpack.c.b16 %v3100, %v3096
      %v3141 = vpack.c.b16 %v3101, %v3097
      %v3142 = vpack.c.b16 %v3106, %v3102
      %v3143 = vpack.c.b16 %v3107, %v3103
      %v3144 = vpack.c.b16 %v3108, %v3104
      %v3145 = vpack.c.b16 %v3109, %v3105
      %v3146 = vpack.c.b16 %v3114, %v3110
      %v3147 = vpack.c.b16 %v3115, %v3111
      %v3148 = vpack.c.b16 %v3116, %v3112
      %v3149 = vpack.c.b16 %v3117, %v3113
      %3182 = vmatprep.subr.bf16.mxu0 0
      %3183 = vmatpush1.bf16.msra.mxu0 %v2917
      %3184 = vmatprep.subr.bf16.mxu0 0
      %3185 = vmatpush1.bf16.msra.mxu0 %v2916
      %3186 = vmatprep.subr.bf16.mxu0 0
      %3187 = vmatpush1.bf16.msra.mxu0 %v2915
      %3188 = vmatprep.subr.bf16.mxu0 0
      %3189 = vmatpush1.bf16.msra.mxu0 %v2914
      %3190 = vmatprep.subr.bf16.mxu0 0
      %3191 = vmatpush1.bf16.msra.mxu0 %v2913
      %3192 = vmatprep.subr.bf16.mxu0 0
      %3193 = vmatpush1.bf16.msra.mxu0 %v2912
      %3194 = vmatprep.subr.bf16.mxu0 0
      %3195 = vmatpush1.bf16.msra.mxu0 %v2911
      %3196 = vmatprep.subr.bf16.mxu0 0
      %3197 = vmatpush1.bf16.msra.mxu0 %v2910
      %3198 = vmatprep.subr.bf16.mxu0 0
      %3199 = vmatpush2.bf16.msra.mxu0 %v2925
      %3200 = vmatprep.subr.bf16.mxu0 0
      %3201 = vmatpush2.bf16.msra.mxu0 %v2924
      %3202 = vmatprep.subr.bf16.mxu0 0
      %3203 = vmatpush2.bf16.msra.mxu0 %v2923
      %3204 = vmatprep.subr.bf16.mxu0 0
      %3205 = vmatpush2.bf16.msra.mxu0 %v2922
      %3206 = vmatprep.subr.bf16.mxu0 0
      %3207 = vmatpush2.bf16.msra.mxu0 %v2921
      %3208 = vmatprep.subr.bf16.mxu0 0
      %3209 = vmatpush2.bf16.msra.mxu0 %v2920
      %3210 = vmatprep.subr.bf16.mxu0 0
      %3211 = vmatpush2.bf16.msra.mxu0 %v2919
      %3212 = vmatprep.subr.bf16.mxu0 0
      %3213 = vmatpush2.bf16.msra.mxu0 %v2918
      %3214 = vmatprep.mubr.bf16.mxu0 %v3119
      %3215 = vmatmul.mubr.bf16.gmra.mxu0 %v3118
      %v3216 = vpop.f32.mrf.mxu0
      %v3217 = vadd.f32 %v2945, %v3216
      %v3218 = vpop.f32.mrf.mxu0
      %v3219 = vpop.f32.mrf.mxu0
      %v3220 = vadd.f32 %v2950, %v3219
      %v3221 = vpop.f32.mrf.mxu0
      %3222 = vmatprep.mubr.bf16.mxu0 %v3123
      %3223 = vmatmul.mubr.bf16.gmra.mxu0 %v3122
      %v3224 = vpop.f32.mrf.mxu0
      %v3225 = vadd.f32 %v2955, %v3224
      %v3226 = vpop.f32.mrf.mxu0
      %v3227 = vpop.f32.mrf.mxu0
      %v3228 = vadd.f32 %v2960, %v3227
      %v3229 = vpop.f32.mrf.mxu0
      %3230 = vmatprep.mubr.bf16.mxu0 %v3127
      %3231 = vmatmul.mubr.bf16.gmra.mxu0 %v3126
      %v3232 = vpop.f32.mrf.mxu0
      %v3233 = vadd.f32 %v2965, %v3232
      %v3234 = vpop.f32.mrf.mxu0
      %v3235 = vpop.f32.mrf.mxu0
      %v3236 = vadd.f32 %v2970, %v3235
      %v3237 = vpop.f32.mrf.mxu0
      %3238 = vmatprep.mubr.bf16.mxu0 %v3131
      %3239 = vmatmul.mubr.bf16.gmra.mxu0 %v3130
      %v3240 = vpop.f32.mrf.mxu0
      %v3241 = vadd.f32 %v2975, %v3240
      %v3242 = vpop.f32.mrf.mxu0
      %v3243 = vpop.f32.mrf.mxu0
      %v3244 = vadd.f32 %v2980, %v3243
      %v3245 = vpop.f32.mrf.mxu0
      %3246 = vmatprep.mubr.bf16.mxu0 %v3135
      %3247 = vmatmul.mubr.bf16.gmra.mxu0 %v3134
      %v3248 = vpop.f32.mrf.mxu0
      %v3249 = vadd.f32 %v2985, %v3248
      %v3250 = vpop.f32.mrf.mxu0
      %v3251 = vpop.f32.mrf.mxu0
      %v3252 = vadd.f32 %v2990, %v3251
      %v3253 = vpop.f32.mrf.mxu0
      %3254 = vmatprep.mubr.bf16.mxu0 %v3139
      %3255 = vmatmul.mubr.bf16.gmra.mxu0 %v3138
      %v3256 = vpop.f32.mrf.mxu0
      %v3257 = vadd.f32 %v2995, %v3256
      %v3258 = vpop.f32.mrf.mxu0
      %v3259 = vpop.f32.mrf.mxu0
      %v3260 = vadd.f32 %v3000, %v3259
      %v3261 = vpop.f32.mrf.mxu0
      %3262 = vmatprep.mubr.bf16.mxu0 %v3143
      %3263 = vmatmul.mubr.bf16.gmra.mxu0 %v3142
      %v3264 = vpop.f32.mrf.mxu0
      %v3265 = vadd.f32 %v3005, %v3264
      %v3266 = vpop.f32.mrf.mxu0
      %v3267 = vpop.f32.mrf.mxu0
      %v3268 = vadd.f32 %v3010, %v3267
      %v3269 = vpop.f32.mrf.mxu0
      %3270 = vmatprep.mubr.bf16.mxu0 %v3147
      %3271 = vmatmul.mubr.bf16.gmra.mxu0 %v3146
      %v3272 = vpop.f32.mrf.mxu0
      %v3273 = vadd.f32 %v3015, %v3272
      %v3274 = vpop.f32.mrf.mxu0
      %v3275 = vpop.f32.mrf.mxu0
      %v3276 = vadd.f32 %v3020, %v3275
      %v3277 = vpop.f32.mrf.mxu0
      %3278 = vdwg.mxu0
      %3279 = vmatprep.subr.bf16.mxu0 0
      %3280 = vmatpush1.bf16.msra.mxu0 %v2933
      %3281 = vmatprep.subr.bf16.mxu0 0
      %3282 = vmatpush1.bf16.msra.mxu0 %v2932
      %3283 = vmatprep.subr.bf16.mxu0 0
      %3284 = vmatpush1.bf16.msra.mxu0 %v2931
      %3285 = vmatprep.subr.bf16.mxu0 0
      %3286 = vmatpush1.bf16.msra.mxu0 %v2930
      %3287 = vmatprep.subr.bf16.mxu0 0
      %3288 = vmatpush1.bf16.msra.mxu0 %v2929
      %3289 = vmatprep.subr.bf16.mxu0 0
      %3290 = vmatpush1.bf16.msra.mxu0 %v2928
      %3291 = vmatprep.subr.bf16.mxu0 0
      %3292 = vmatpush1.bf16.msra.mxu0 %v2927
      %3293 = vmatprep.subr.bf16.mxu0 0
      %3294 = vmatpush1.bf16.msra.mxu0 %v2926
      %3295 = vmatprep.subr.bf16.mxu0 0
      %3296 = vmatpush2.bf16.msra.mxu0 %v2941
      %3297 = vmatprep.subr.bf16.mxu0 0
      %3298 = vmatpush2.bf16.msra.mxu0 %v2940
      %3299 = vmatprep.subr.bf16.mxu0 0
      %3300 = vmatpush2.bf16.msra.mxu0 %v2939
      %3301 = vmatprep.subr.bf16.mxu0 0
      %3302 = vmatpush2.bf16.msra.mxu0 %v2938
      %3303 = vmatprep.subr.bf16.mxu0 0
      %3304 = vmatpush2.bf16.msra.mxu0 %v2937
      %3305 = vmatprep.subr.bf16.mxu0 0
      %3306 = vmatpush2.bf16.msra.mxu0 %v2936
      %3307 = vmatprep.subr.bf16.mxu0 0
      %3308 = vmatpush2.bf16.msra.mxu0 %v2935
      %3309 = vmatprep.subr.bf16.mxu0 0
      %3310 = vmatpush2.bf16.msra.mxu0 %v2934
      %3311 = vmatprep.mubr.bf16.mxu0 %v3121
      %3312 = vmatmul.mubr.bf16.gmra.mxu0 %v3120
      %v3313 = vpop.f32.mrf.mxu0
      %v3314 = vadd.f32 %v3217, %v3313
      %v3315 = vpop.f32.mrf.mxu0
      %v3316 = vpop.f32.mrf.mxu0
      %v3317 = vadd.f32 %v3220, %v3316
      %v3318 = vpop.f32.mrf.mxu0
      %3319 = vmatprep.mubr.bf16.mxu0 %v3125
      %3320 = vmatmul.mubr.bf16.gmra.mxu0 %v3124
      %v3321 = vpop.f32.mrf.mxu0
      %v3322 = vadd.f32 %v3225, %v3321
      %v3323 = vpop.f32.mrf.mxu0
      %v3324 = vpop.f32.mrf.mxu0
      %v3325 = vadd.f32 %v3228, %v3324
      %v3326 = vpop.f32.mrf.mxu0
      %3327 = vmatprep.mubr.bf16.mxu0 %v3129
      %3328 = vmatmul.mubr.bf16.gmra.mxu0 %v3128
      %v3329 = vpop.f32.mrf.mxu0
      %v3330 = vadd.f32 %v3233, %v3329
      %v3331 = vpop.f32.mrf.mxu0
      %v3332 = vpop.f32.mrf.mxu0
      %v3333 = vadd.f32 %v3236, %v3332
      %v3334 = vpop.f32.mrf.mxu0
      %3335 = vmatprep.mubr.bf16.mxu0 %v3133
      %3336 = vmatmul.mubr.bf16.gmra.mxu0 %v3132
      %v3337 = vpop.f32.mrf.mxu0
      %v3338 = vadd.f32 %v3241, %v3337
      %v3339 = vpop.f32.mrf.mxu0
      %v3340 = vpop.f32.mrf.mxu0
      %v3341 = vadd.f32 %v3244, %v3340
      %v3342 = vpop.f32.mrf.mxu0
      %3343 = vmatprep.mubr.bf16.mxu0 %v3137
      %3344 = vmatmul.mubr.bf16.gmra.mxu0 %v3136
      %v3345 = vpop.f32.mrf.mxu0
      %v3346 = vadd.f32 %v3249, %v3345
      %v3347 = vpop.f32.mrf.mxu0
      %v3348 = vpop.f32.mrf.mxu0
      %v3349 = vadd.f32 %v3252, %v3348
      %v3350 = vpop.f32.mrf.mxu0
      %3351 = vmatprep.mubr.bf16.mxu0 %v3141
      %3352 = vmatmul.mubr.bf16.gmra.mxu0 %v3140
      %v3353 = vpop.f32.mrf.mxu0
      %v3354 = vadd.f32 %v3257, %v3353
      %v3355 = vpop.f32.mrf.mxu0
      %v3356 = vpop.f32.mrf.mxu0
      %v3357 = vadd.f32 %v3260, %v3356
      %v3358 = vpop.f32.mrf.mxu0
      %3359 = vmatprep.mubr.bf16.mxu0 %v3145
      %3360 = vmatmul.mubr.bf16.gmra.mxu0 %v3144
      %v3361 = vpop.f32.mrf.mxu0
      %v3362 = vadd.f32 %v3265, %v3361
      %v3363 = vpop.f32.mrf.mxu0
      %v3364 = vpop.f32.mrf.mxu0
      %v3365 = vadd.f32 %v3268, %v3364
      %v3366 = vpop.f32.mrf.mxu0
      %3367 = vmatprep.mubr.bf16.mxu0 %v3149
      %3368 = vmatmul.mubr.bf16.gmra.mxu0 %v3148
      %v3369 = vpop.f32.mrf.mxu0
      %v3370 = vadd.f32 %v3273, %v3369
      %v3371 = vpop.f32.mrf.mxu0
      %v3372 = vpop.f32.mrf.mxu0
      %v3373 = vadd.f32 %v3276, %v3372
      %v3374 = vpop.f32.mrf.mxu0
      %3375 = vdwg.mxu0
      %v3376 = vpack.c.bf16 %v3317, %v3314
      %v3377 = vpack.c.bf16 %v3325, %v3322
      %v3378 = vpack.c.bf16 %v3333, %v3330
      %v3379 = vpack.c.bf16 %v3341, %v3338
      %v3380 = vpack.c.bf16 %v3349, %v3346
      %v3381 = vpack.c.bf16 %v3357, %v3354
      %v3382 = vpack.c.bf16 %v3365, %v3362
      %v3383 = vpack.c.bf16 %v3373, %v3370
      %v3384 = vld [vmem:[%s8] sm:$0xff]
      %v3385 = vld [vmem:[%s8 + $0x8] sm:$0xff]
      %v3386 = vld [vmem:[%s8 + $0x10] sm:$0xff]
      %v3387 = vld [vmem:[%s8 + $0x18] sm:$0xff]
      %v3388 = vld [vmem:[%s8 + $0x20] sm:$0xff]
      %v3389 = vld [vmem:[%s8 + $0x28] sm:$0xff]
      %v3390 = vld [vmem:[%s8 + $0x30] sm:$0xff]
      %v3391 = vld [vmem:[%s8 + $0x38] sm:$0xff]
      %v3392 = vld [vmem:[%s8 + $0x40] sm:$0xff]
      %v3393 = vld [vmem:[%s8 + $0x48] sm:$0xff]
      %v3394 = vld [vmem:[%s8 + $0x50] sm:$0xff]
      %v3395 = vld [vmem:[%s8 + $0x58] sm:$0xff]
      %v3396 = vld [vmem:[%s8 + $0x60] sm:$0xff]
      %v3397 = vld [vmem:[%s8 + $0x68] sm:$0xff]
      %v3398 = vld [vmem:[%s8 + $0x70] sm:$0xff]
      %v3399 = vld [vmem:[%s8 + $0x78] sm:$0xff]
      %v3400 = vld [vmem:[%s7] sm:$0xf]
      %v3401 = vld [vmem:[%s7 + $0x4] sm:$0xf]
      %v3402 = vld [vmem:[%s7 + $0x8] sm:$0xf]
      %v3403 = vld [vmem:[%s7 + $0xc] sm:$0xf]
      %v3404 = vld [vmem:[%s7 + $0x10] sm:$0xf]
      %v3405 = vld [vmem:[%s7 + $0x14] sm:$0xf]
      %v3406 = vld [vmem:[%s7 + $0x18] sm:$0xf]
      %v3407 = vld [vmem:[%s7 + $0x1c] sm:$0xf]
      %v3408 = vld [vmem:[%s7 + $0x20] sm:$0xf]
      %v3409 = vld [vmem:[%s7 + $0x24] sm:$0xf]
      %v3410 = vld [vmem:[%s7 + $0x28] sm:$0xf]
      %v3411 = vld [vmem:[%s7 + $0x2c] sm:$0xf]
      %v3412 = vld [vmem:[%s7 + $0x30] sm:$0xf]
      %v3413 = vld [vmem:[%s7 + $0x34] sm:$0xf]
      %v3414 = vld [vmem:[%s7 + $0x38] sm:$0xf]
      %v3415 = vld [vmem:[%s7 + $0x3c] sm:$0xf]
      %v3432 = vunpack.c.l.b16 %v3400
      %v3433 = vunpack.c.l.b16 %v3401
      %v3434 = vunpack.c.l.b16 %v3402
      %v3435 = vunpack.c.l.b16 %v3403
      %v3436 = vunpack.c.l.b16 %v3404
      %v3437 = vunpack.c.l.b16 %v3405
      %v3438 = vunpack.c.l.b16 %v3406
      %v3439 = vunpack.c.l.b16 %v3407
      %v3440 = vunpack.c.l.b16 %v3408
      %v3441 = vunpack.c.l.b16 %v3409
      %v3442 = vunpack.c.l.b16 %v3410
      %v3443 = vunpack.c.l.b16 %v3411
      %v3444 = vunpack.c.l.b16 %v3412
      %v3445 = vunpack.c.l.b16 %v3413
      %v3446 = vunpack.c.l.b16 %v3414
      %v3447 = vunpack.c.l.b16 %v3415
      %v3448 = vpack.c.b16 %v3433, %v3432
      %v3449 = vpack.c.b16 %v3435, %v3434
      %v3450 = vpack.c.b16 %v3437, %v3436
      %v3451 = vpack.c.b16 %v3439, %v3438
      %v3452 = vpack.c.b16 %v3441, %v3440
      %v3453 = vpack.c.b16 %v3443, %v3442
      %v3454 = vpack.c.b16 %v3445, %v3444
      %v3455 = vpack.c.b16 %v3447, %v3446
      %3464 = vmatprep.subr.bf16.mxu0 0
      %3465 = vmatpush1.bf16.msra.mxu0 %v3383
      %3466 = vmatprep.subr.bf16.mxu0 0
      %3467 = vmatpush1.bf16.msra.mxu0 %v3382
      %3468 = vmatprep.subr.bf16.mxu0 0
      %3469 = vmatpush1.bf16.msra.mxu0 %v3381
      %3470 = vmatprep.subr.bf16.mxu0 0
      %3471 = vmatpush1.bf16.msra.mxu0 %v3380
      %3472 = vmatprep.subr.bf16.mxu0 0
      %3473 = vmatpush1.bf16.msra.mxu0 %v3379
      %3474 = vmatprep.subr.bf16.mxu0 0
      %3475 = vmatpush1.bf16.msra.mxu0 %v3378
      %3476 = vmatprep.subr.bf16.mxu0 0
      %3477 = vmatpush1.bf16.msra.mxu0 %v3377
      %3478 = vmatprep.subr.bf16.mxu0 0
      %3479 = vmatpush1.bf16.msra.mxu0 %v3376
      %3480 = vmatprep.subr.bf16.mxu0 0
      %3481 = vmatpush2.bf16.msra.mxu0 0
      %3482 = vmatprep.subr.bf16.mxu0 0
      %3483 = vmatpush2.bf16.msra.mxu0 0
      %3484 = vmatprep.subr.bf16.mxu0 0
      %3485 = vmatpush2.bf16.msra.mxu0 0
      %3486 = vmatprep.subr.bf16.mxu0 0
      %3487 = vmatpush2.bf16.msra.mxu0 0
      %3488 = vmatprep.subr.bf16.mxu0 0
      %3489 = vmatpush2.bf16.msra.mxu0 0
      %3490 = vmatprep.subr.bf16.mxu0 0
      %3491 = vmatpush2.bf16.msra.mxu0 0
      %3492 = vmatprep.subr.bf16.mxu0 0
      %3493 = vmatpush2.bf16.msra.mxu0 0
      %3494 = vmatprep.subr.bf16.mxu0 0
      %3495 = vmatpush2.bf16.msra.mxu0 0
      %3496 = vmatprep.mubr.bf16.mxu0 0
      %3497 = vmatmul.mubr.bf16.gmra.mxu0 %v3448
      %v3498 = vpop.f32.mrf.mxu0
      %v3499 = vadd.f32 0.0, %v3498
      %v3500 = vpop.f32.mrf.mxu0
      %v3501 = vpop.f32.mrf.mxu0
      %v3502 = vadd.f32 0.0, %v3501
      %v3503 = vpop.f32.mrf.mxu0
      %3504 = vmatprep.mubr.bf16.mxu0 0
      %3505 = vmatmul.mubr.bf16.gmra.mxu0 %v3449
      %v3506 = vpop.f32.mrf.mxu0
      %v3507 = vadd.f32 0.0, %v3506
      %v3508 = vpop.f32.mrf.mxu0
      %v3509 = vpop.f32.mrf.mxu0
      %v3510 = vadd.f32 0.0, %v3509
      %v3511 = vpop.f32.mrf.mxu0
      %3512 = vmatprep.mubr.bf16.mxu0 0
      %3513 = vmatmul.mubr.bf16.gmra.mxu0 %v3450
      %v3514 = vpop.f32.mrf.mxu0
      %v3515 = vadd.f32 0.0, %v3514
      %v3516 = vpop.f32.mrf.mxu0
      %v3517 = vpop.f32.mrf.mxu0
      %v3518 = vadd.f32 0.0, %v3517
      %v3519 = vpop.f32.mrf.mxu0
      %3520 = vmatprep.mubr.bf16.mxu0 0
      %3521 = vmatmul.mubr.bf16.gmra.mxu0 %v3451
      %v3522 = vpop.f32.mrf.mxu0
      %v3523 = vadd.f32 0.0, %v3522
      %v3524 = vpop.f32.mrf.mxu0
      %v3525 = vpop.f32.mrf.mxu0
      %v3526 = vadd.f32 0.0, %v3525
      %v3527 = vpop.f32.mrf.mxu0
      %3528 = vmatprep.mubr.bf16.mxu0 0
      %3529 = vmatmul.mubr.bf16.gmra.mxu0 %v3452
      %v3530 = vpop.f32.mrf.mxu0
      %v3531 = vadd.f32 0.0, %v3530
      %v3532 = vpop.f32.mrf.mxu0
      %v3533 = vpop.f32.mrf.mxu0
      %v3534 = vadd.f32 0.0, %v3533
      %v3535 = vpop.f32.mrf.mxu0
      %3536 = vmatprep.mubr.bf16.mxu0 0
      %3537 = vmatmul.mubr.bf16.gmra.mxu0 %v3453
      %v3538 = vpop.f32.mrf.mxu0
      %v3539 = vadd.f32 0.0, %v3538
      %v3540 = vpop.f32.mrf.mxu0
      %v3541 = vpop.f32.mrf.mxu0
      %v3542 = vadd.f32 0.0, %v3541
      %v3543 = vpop.f32.mrf.mxu0
      %3544 = vmatprep.mubr.bf16.mxu0 0
      %3545 = vmatmul.mubr.bf16.gmra.mxu0 %v3454
      %v3546 = vpop.f32.mrf.mxu0
      %v3547 = vadd.f32 0.0, %v3546
      %v3548 = vpop.f32.mrf.mxu0
      %v3549 = vpop.f32.mrf.mxu0
      %v3550 = vadd.f32 0.0, %v3549
      %v3551 = vpop.f32.mrf.mxu0
      %3552 = vmatprep.mubr.bf16.mxu0 0
      %3553 = vmatmul.mubr.bf16.gmra.mxu0 %v3455
      %v3554 = vpop.f32.mrf.mxu0
      %v3555 = vadd.f32 0.0, %v3554
      %v3556 = vpop.f32.mrf.mxu0
      %v3557 = vpop.f32.mrf.mxu0
      %v3558 = vadd.f32 0.0, %v3557
      %v3559 = vpop.f32.mrf.mxu0
      %3560 = vdwg.mxu0
      %v3561 = vadd.f32 %v3384, %v3499
      %v3562 = vadd.f32 %v3385, %v3502
      %v3563 = vadd.f32 %v3386, %v3507
      %v3564 = vadd.f32 %v3387, %v3510
      %v3565 = vadd.f32 %v3388, %v3515
      %v3566 = vadd.f32 %v3389, %v3518
      %v3567 = vadd.f32 %v3390, %v3523
      %v3568 = vadd.f32 %v3391, %v3526
      %v3569 = vadd.f32 %v3392, %v3531
      %v3570 = vadd.f32 %v3393, %v3534
      %v3571 = vadd.f32 %v3394, %v3539
      %v3572 = vadd.f32 %v3395, %v3542
      %v3573 = vadd.f32 %v3396, %v3547
      %v3574 = vadd.f32 %v3397, %v3550
      %v3575 = vadd.f32 %v3398, %v3555
      %v3576 = vadd.f32 %v3399, %v3558
      %s3577 = scalar_lea.vmem %s7, 64
      %v3578 = vld [vmem:[%s3577] sm:$0xf]
      %v3579 = vld [vmem:[%s3577 + $0x4] sm:$0xf]
      %v3580 = vld [vmem:[%s3577 + $0x8] sm:$0xf]
      %v3581 = vld [vmem:[%s3577 + $0xc] sm:$0xf]
      %v3582 = vld [vmem:[%s3577 + $0x10] sm:$0xf]
      %v3583 = vld [vmem:[%s3577 + $0x14] sm:$0xf]
      %v3584 = vld [vmem:[%s3577 + $0x18] sm:$0xf]
      %v3585 = vld [vmem:[%s3577 + $0x1c] sm:$0xf]
      %v3586 = vld [vmem:[%s3577 + $0x20] sm:$0xf]
      %v3587 = vld [vmem:[%s3577 + $0x24] sm:$0xf]
      %v3588 = vld [vmem:[%s3577 + $0x28] sm:$0xf]
      %v3589 = vld [vmem:[%s3577 + $0x2c] sm:$0xf]
      %v3590 = vld [vmem:[%s3577 + $0x30] sm:$0xf]
      %v3591 = vld [vmem:[%s3577 + $0x34] sm:$0xf]
      %v3592 = vld [vmem:[%s3577 + $0x38] sm:$0xf]
      %v3593 = vld [vmem:[%s3577 + $0x3c] sm:$0xf]
      %v3610 = vunpack.c.l.b16 %v3578
      %v3611 = vunpack.c.l.b16 %v3579
      %v3612 = vunpack.c.l.b16 %v3580
      %v3613 = vunpack.c.l.b16 %v3581
      %v3614 = vunpack.c.l.b16 %v3582
      %v3615 = vunpack.c.l.b16 %v3583
      %v3616 = vunpack.c.l.b16 %v3584
      %v3617 = vunpack.c.l.b16 %v3585
      %v3618 = vunpack.c.l.b16 %v3586
      %v3619 = vunpack.c.l.b16 %v3587
      %v3620 = vunpack.c.l.b16 %v3588
      %v3621 = vunpack.c.l.b16 %v3589
      %v3622 = vunpack.c.l.b16 %v3590
      %v3623 = vunpack.c.l.b16 %v3591
      %v3624 = vunpack.c.l.b16 %v3592
      %v3625 = vunpack.c.l.b16 %v3593
      %v3626 = vpack.c.b16 %v3611, %v3610
      %v3627 = vpack.c.b16 %v3613, %v3612
      %v3628 = vpack.c.b16 %v3615, %v3614
      %v3629 = vpack.c.b16 %v3617, %v3616
      %v3630 = vpack.c.b16 %v3619, %v3618
      %v3631 = vpack.c.b16 %v3621, %v3620
      %v3632 = vpack.c.b16 %v3623, %v3622
      %v3633 = vpack.c.b16 %v3625, %v3624
      %3650 = vrot.lane.b32.xlu0 %v3376, 127
      %v3651 = vpop.permute.xlu0 %3650
      %3652 = vrot.lane.b32.xlu0 %v3377, 127
      %v3653 = vpop.permute.xlu0 %3652
      %3654 = vrot.lane.b32.xlu0 %v3378, 127
      %v3655 = vpop.permute.xlu0 %3654
      %3656 = vrot.lane.b32.xlu0 %v3379, 127
      %v3657 = vpop.permute.xlu0 %3656
      %3658 = vrot.lane.b32.xlu0 %v3380, 127
      %v3659 = vpop.permute.xlu0 %3658
      %3660 = vrot.lane.b32.xlu0 %v3381, 127
      %v3661 = vpop.permute.xlu0 %3660
      %3662 = vrot.lane.b32.xlu0 %v3382, 127
      %v3663 = vpop.permute.xlu0 %3662
      %3664 = vrot.lane.b32.xlu0 %v3383, 127
      %v3665 = vpop.permute.xlu0 %3664
      %3674 = vmatprep.subr.bf16.mxu0 0
      %3675 = vmatpush1.bf16.msra.mxu0 %v3665
      %3676 = vmatprep.subr.bf16.mxu0 0
      %3677 = vmatpush1.bf16.msra.mxu0 %v3663
      %3678 = vmatprep.subr.bf16.mxu0 0
      %3679 = vmatpush1.bf16.msra.mxu0 %v3661
      %3680 = vmatprep.subr.bf16.mxu0 0
      %3681 = vmatpush1.bf16.msra.mxu0 %v3659
      %3682 = vmatprep.subr.bf16.mxu0 0
      %3683 = vmatpush1.bf16.msra.mxu0 %v3657
      %3684 = vmatprep.subr.bf16.mxu0 0
      %3685 = vmatpush1.bf16.msra.mxu0 %v3655
      %3686 = vmatprep.subr.bf16.mxu0 0
      %3687 = vmatpush1.bf16.msra.mxu0 %v3653
      %3688 = vmatprep.subr.bf16.mxu0 0
      %3689 = vmatpush1.bf16.msra.mxu0 %v3651
      %3690 = vmatprep.subr.bf16.mxu0 0
      %3691 = vmatpush2.bf16.msra.mxu0 0
      %3692 = vmatprep.subr.bf16.mxu0 0
      %3693 = vmatpush2.bf16.msra.mxu0 0
      %3694 = vmatprep.subr.bf16.mxu0 0
      %3695 = vmatpush2.bf16.msra.mxu0 0
      %3696 = vmatprep.subr.bf16.mxu0 0
      %3697 = vmatpush2.bf16.msra.mxu0 0
      %3698 = vmatprep.subr.bf16.mxu0 0
      %3699 = vmatpush2.bf16.msra.mxu0 0
      %3700 = vmatprep.subr.bf16.mxu0 0
      %3701 = vmatpush2.bf16.msra.mxu0 0
      %3702 = vmatprep.subr.bf16.mxu0 0
      %3703 = vmatpush2.bf16.msra.mxu0 0
      %3704 = vmatprep.subr.bf16.mxu0 0
      %3705 = vmatpush2.bf16.msra.mxu0 0
      %3706 = vmatprep.mubr.bf16.mxu0 0
      %3707 = vmatmul.mubr.bf16.gmra.mxu0 %v3626
      %v3708 = vpop.f32.mrf.mxu0
      %v3709 = vadd.f32 0.0, %v3708
      %v3710 = vpop.f32.mrf.mxu0
      %v3711 = vpop.f32.mrf.mxu0
      %v3712 = vadd.f32 0.0, %v3711
      %v3713 = vpop.f32.mrf.mxu0
      %3714 = vmatprep.mubr.bf16.mxu0 0
      %3715 = vmatmul.mubr.bf16.gmra.mxu0 %v3627
      %v3716 = vpop.f32.mrf.mxu0
      %v3717 = vadd.f32 0.0, %v3716
      %v3718 = vpop.f32.mrf.mxu0
      %v3719 = vpop.f32.mrf.mxu0
      %v3720 = vadd.f32 0.0, %v3719
      %v3721 = vpop.f32.mrf.mxu0
      %3722 = vmatprep.mubr.bf16.mxu0 0
      %3723 = vmatmul.mubr.bf16.gmra.mxu0 %v3628
      %v3724 = vpop.f32.mrf.mxu0
      %v3725 = vadd.f32 0.0, %v3724
      %v3726 = vpop.f32.mrf.mxu0
      %v3727 = vpop.f32.mrf.mxu0
      %v3728 = vadd.f32 0.0, %v3727
      %v3729 = vpop.f32.mrf.mxu0
      %3730 = vmatprep.mubr.bf16.mxu0 0
      %3731 = vmatmul.mubr.bf16.gmra.mxu0 %v3629
      %v3732 = vpop.f32.mrf.mxu0
      %v3733 = vadd.f32 0.0, %v3732
      %v3734 = vpop.f32.mrf.mxu0
      %v3735 = vpop.f32.mrf.mxu0
      %v3736 = vadd.f32 0.0, %v3735
      %v3737 = vpop.f32.mrf.mxu0
      %3738 = vmatprep.mubr.bf16.mxu0 0
      %3739 = vmatmul.mubr.bf16.gmra.mxu0 %v3630
      %v3740 = vpop.f32.mrf.mxu0
      %v3741 = vadd.f32 0.0, %v3740
      %v3742 = vpop.f32.mrf.mxu0
      %v3743 = vpop.f32.mrf.mxu0
      %v3744 = vadd.f32 0.0, %v3743
      %v3745 = vpop.f32.mrf.mxu0
      %3746 = vmatprep.mubr.bf16.mxu0 0
      %3747 = vmatmul.mubr.bf16.gmra.mxu0 %v3631
      %v3748 = vpop.f32.mrf.mxu0
      %v3749 = vadd.f32 0.0, %v3748
      %v3750 = vpop.f32.mrf.mxu0
      %v3751 = vpop.f32.mrf.mxu0
      %v3752 = vadd.f32 0.0, %v3751
      %v3753 = vpop.f32.mrf.mxu0
      %3754 = vmatprep.mubr.bf16.mxu0 0
      %3755 = vmatmul.mubr.bf16.gmra.mxu0 %v3632
      %v3756 = vpop.f32.mrf.mxu0
      %v3757 = vadd.f32 0.0, %v3756
      %v3758 = vpop.f32.mrf.mxu0
      %v3759 = vpop.f32.mrf.mxu0
      %v3760 = vadd.f32 0.0, %v3759
      %v3761 = vpop.f32.mrf.mxu0
      %3762 = vmatprep.mubr.bf16.mxu0 0
      %3763 = vmatmul.mubr.bf16.gmra.mxu0 %v3633
      %v3764 = vpop.f32.mrf.mxu0
      %v3765 = vadd.f32 0.0, %v3764
      %v3766 = vpop.f32.mrf.mxu0
      %v3767 = vpop.f32.mrf.mxu0
      %v3768 = vadd.f32 0.0, %v3767
      %v3769 = vpop.f32.mrf.mxu0
      %3770 = vdwg.mxu0
      %v3771 = vadd.f32 %v3561, %v3709
      %v3772 = vadd.f32 %v3562, %v3712
      %v3773 = vadd.f32 %v3563, %v3717
      %v3774 = vadd.f32 %v3564, %v3720
      %v3775 = vadd.f32 %v3565, %v3725
      %v3776 = vadd.f32 %v3566, %v3728
      %v3777 = vadd.f32 %v3567, %v3733
      %v3778 = vadd.f32 %v3568, %v3736
      %v3779 = vadd.f32 %v3569, %v3741
      %v3780 = vadd.f32 %v3570, %v3744
      %v3781 = vadd.f32 %v3571, %v3749
      %v3782 = vadd.f32 %v3572, %v3752
      %v3783 = vadd.f32 %v3573, %v3757
      %v3784 = vadd.f32 %v3574, %v3760
      %v3785 = vadd.f32 %v3575, %v3765
      %v3786 = vadd.f32 %v3576, %v3768
      %s3787 = scalar_lea.vmem %s7, 128
      %v3788 = vld [vmem:[%s3787] sm:$0xf]
      %v3789 = vld [vmem:[%s3787 + $0x4] sm:$0xf]
      %v3790 = vld [vmem:[%s3787 + $0x8] sm:$0xf]
      %v3791 = vld [vmem:[%s3787 + $0xc] sm:$0xf]
      %v3792 = vld [vmem:[%s3787 + $0x10] sm:$0xf]
      %v3793 = vld [vmem:[%s3787 + $0x14] sm:$0xf]
      %v3794 = vld [vmem:[%s3787 + $0x18] sm:$0xf]
      %v3795 = vld [vmem:[%s3787 + $0x1c] sm:$0xf]
      %v3796 = vld [vmem:[%s3787 + $0x20] sm:$0xf]
      %v3797 = vld [vmem:[%s3787 + $0x24] sm:$0xf]
      %v3798 = vld [vmem:[%s3787 + $0x28] sm:$0xf]
      %v3799 = vld [vmem:[%s3787 + $0x2c] sm:$0xf]
      %v3800 = vld [vmem:[%s3787 + $0x30] sm:$0xf]
      %v3801 = vld [vmem:[%s3787 + $0x34] sm:$0xf]
      %v3802 = vld [vmem:[%s3787 + $0x38] sm:$0xf]
      %v3803 = vld [vmem:[%s3787 + $0x3c] sm:$0xf]
      %v3820 = vunpack.c.l.b16 %v3788
      %v3821 = vunpack.c.l.b16 %v3789
      %v3822 = vunpack.c.l.b16 %v3790
      %v3823 = vunpack.c.l.b16 %v3791
      %v3824 = vunpack.c.l.b16 %v3792
      %v3825 = vunpack.c.l.b16 %v3793
      %v3826 = vunpack.c.l.b16 %v3794
      %v3827 = vunpack.c.l.b16 %v3795
      %v3828 = vunpack.c.l.b16 %v3796
      %v3829 = vunpack.c.l.b16 %v3797
      %v3830 = vunpack.c.l.b16 %v3798
      %v3831 = vunpack.c.l.b16 %v3799
      %v3832 = vunpack.c.l.b16 %v3800
      %v3833 = vunpack.c.l.b16 %v3801
      %v3834 = vunpack.c.l.b16 %v3802
      %v3835 = vunpack.c.l.b16 %v3803
      %v3836 = vpack.c.b16 %v3821, %v3820
      %v3837 = vpack.c.b16 %v3823, %v3822
      %v3838 = vpack.c.b16 %v3825, %v3824
      %v3839 = vpack.c.b16 %v3827, %v3826
      %v3840 = vpack.c.b16 %v3829, %v3828
      %v3841 = vpack.c.b16 %v3831, %v3830
      %v3842 = vpack.c.b16 %v3833, %v3832
      %v3843 = vpack.c.b16 %v3835, %v3834
      %3852 = vrot.lane.b32.xlu0 %v3376, 126
      %v3853 = vpop.permute.xlu0 %3852
      %3854 = vrot.lane.b32.xlu0 %v3377, 126
      %v3855 = vpop.permute.xlu0 %3854
      %3856 = vrot.lane.b32.xlu0 %v3378, 126
      %v3857 = vpop.permute.xlu0 %3856
      %3858 = vrot.lane.b32.xlu0 %v3379, 126
      %v3859 = vpop.permute.xlu0 %3858
      %3860 = vrot.lane.b32.xlu0 %v3380, 126
      %v3861 = vpop.permute.xlu0 %3860
      %3862 = vrot.lane.b32.xlu0 %v3381, 126
      %v3863 = vpop.permute.xlu0 %3862
      %3864 = vrot.lane.b32.xlu0 %v3382, 126
      %v3865 = vpop.permute.xlu0 %3864
      %3866 = vrot.lane.b32.xlu0 %v3383, 126
      %v3867 = vpop.permute.xlu0 %3866
      %3876 = vmatprep.subr.bf16.mxu0 0
      %3877 = vmatpush1.bf16.msra.mxu0 %v3867
      %3878 = vmatprep.subr.bf16.mxu0 0
      %3879 = vmatpush1.bf16.msra.mxu0 %v3865
      %3880 = vmatprep.subr.bf16.mxu0 0
      %3881 = vmatpush1.bf16.msra.mxu0 %v3863
      %3882 = vmatprep.subr.bf16.mxu0 0
      %3883 = vmatpush1.bf16.msra.mxu0 %v3861
      %3884 = vmatprep.subr.bf16.mxu0 0
      %3885 = vmatpush1.bf16.msra.mxu0 %v3859
      %3886 = vmatprep.subr.bf16.mxu0 0
      %3887 = vmatpush1.bf16.msra.mxu0 %v3857
      %3888 = vmatprep.subr.bf16.mxu0 0
      %3889 = vmatpush1.bf16.msra.mxu0 %v3855
      %3890 = vmatprep.subr.bf16.mxu0 0
      %3891 = vmatpush1.bf16.msra.mxu0 %v3853
      %3892 = vmatprep.subr.bf16.mxu0 0
      %3893 = vmatpush2.bf16.msra.mxu0 0
      %3894 = vmatprep.subr.bf16.mxu0 0
      %3895 = vmatpush2.bf16.msra.mxu0 0
      %3896 = vmatprep.subr.bf16.mxu0 0
      %3897 = vmatpush2.bf16.msra.mxu0 0
      %3898 = vmatprep.subr.bf16.mxu0 0
      %3899 = vmatpush2.bf16.msra.mxu0 0
      %3900 = vmatprep.subr.bf16.mxu0 0
      %3901 = vmatpush2.bf16.msra.mxu0 0
      %3902 = vmatprep.subr.bf16.mxu0 0
      %3903 = vmatpush2.bf16.msra.mxu0 0
      %3904 = vmatprep.subr.bf16.mxu0 0
      %3905 = vmatpush2.bf16.msra.mxu0 0
      %3906 = vmatprep.subr.bf16.mxu0 0
      %3907 = vmatpush2.bf16.msra.mxu0 0
      %3908 = vmatprep.mubr.bf16.mxu0 0
      %3909 = vmatmul.mubr.bf16.gmra.mxu0 %v3836
      %v3910 = vpop.f32.mrf.mxu0
      %v3911 = vadd.f32 0.0, %v3910
      %v3912 = vpop.f32.mrf.mxu0
      %v3913 = vpop.f32.mrf.mxu0
      %v3914 = vadd.f32 0.0, %v3913
      %v3915 = vpop.f32.mrf.mxu0
      %3916 = vmatprep.mubr.bf16.mxu0 0
      %3917 = vmatmul.mubr.bf16.gmra.mxu0 %v3837
      %v3918 = vpop.f32.mrf.mxu0
      %v3919 = vadd.f32 0.0, %v3918
      %v3920 = vpop.f32.mrf.mxu0
      %v3921 = vpop.f32.mrf.mxu0
      %v3922 = vadd.f32 0.0, %v3921
      %v3923 = vpop.f32.mrf.mxu0
      %3924 = vmatprep.mubr.bf16.mxu0 0
      %3925 = vmatmul.mubr.bf16.gmra.mxu0 %v3838
      %v3926 = vpop.f32.mrf.mxu0
      %v3927 = vadd.f32 0.0, %v3926
      %v3928 = vpop.f32.mrf.mxu0
      %v3929 = vpop.f32.mrf.mxu0
      %v3930 = vadd.f32 0.0, %v3929
      %v3931 = vpop.f32.mrf.mxu0
      %3932 = vmatprep.mubr.bf16.mxu0 0
      %3933 = vmatmul.mubr.bf16.gmra.mxu0 %v3839
      %v3934 = vpop.f32.mrf.mxu0
      %v3935 = vadd.f32 0.0, %v3934
      %v3936 = vpop.f32.mrf.mxu0
      %v3937 = vpop.f32.mrf.mxu0
      %v3938 = vadd.f32 0.0, %v3937
      %v3939 = vpop.f32.mrf.mxu0
      %3940 = vmatprep.mubr.bf16.mxu0 0
      %3941 = vmatmul.mubr.bf16.gmra.mxu0 %v3840
      %v3942 = vpop.f32.mrf.mxu0
      %v3943 = vadd.f32 0.0, %v3942
      %v3944 = vpop.f32.mrf.mxu0
      %v3945 = vpop.f32.mrf.mxu0
      %v3946 = vadd.f32 0.0, %v3945
      %v3947 = vpop.f32.mrf.mxu0
      %3948 = vmatprep.mubr.bf16.mxu0 0
      %3949 = vmatmul.mubr.bf16.gmra.mxu0 %v3841
      %v3950 = vpop.f32.mrf.mxu0
      %v3951 = vadd.f32 0.0, %v3950
      %v3952 = vpop.f32.mrf.mxu0
      %v3953 = vpop.f32.mrf.mxu0
      %v3954 = vadd.f32 0.0, %v3953
      %v3955 = vpop.f32.mrf.mxu0
      %3956 = vmatprep.mubr.bf16.mxu0 0
      %3957 = vmatmul.mubr.bf16.gmra.mxu0 %v3842
      %v3958 = vpop.f32.mrf.mxu0
      %v3959 = vadd.f32 0.0, %v3958
      %v3960 = vpop.f32.mrf.mxu0
      %v3961 = vpop.f32.mrf.mxu0
      %v3962 = vadd.f32 0.0, %v3961
      %v3963 = vpop.f32.mrf.mxu0
      %3964 = vmatprep.mubr.bf16.mxu0 0
      %3965 = vmatmul.mubr.bf16.gmra.mxu0 %v3843
      %v3966 = vpop.f32.mrf.mxu0
      %v3967 = vadd.f32 0.0, %v3966
      %v3968 = vpop.f32.mrf.mxu0
      %v3969 = vpop.f32.mrf.mxu0
      %v3970 = vadd.f32 0.0, %v3969
      %v3971 = vpop.f32.mrf.mxu0
      %3972 = vdwg.mxu0
      %v3973 = vadd.f32 %v3771, %v3911
      %v3974 = vadd.f32 %v3772, %v3914
      %v3975 = vadd.f32 %v3773, %v3919
      %v3976 = vadd.f32 %v3774, %v3922
      %v3977 = vadd.f32 %v3775, %v3927
      %v3978 = vadd.f32 %v3776, %v3930
      %v3979 = vadd.f32 %v3777, %v3935
      %v3980 = vadd.f32 %v3778, %v3938
      %v3981 = vadd.f32 %v3779, %v3943
      %v3982 = vadd.f32 %v3780, %v3946
      %v3983 = vadd.f32 %v3781, %v3951
      %v3984 = vadd.f32 %v3782, %v3954
      %v3985 = vadd.f32 %v3783, %v3959
      %v3986 = vadd.f32 %v3784, %v3962
      %v3987 = vadd.f32 %v3785, %v3967
      %v3988 = vadd.f32 %v3786, %v3970
      %s3989 = scalar_lea.vmem %s7, 192
      %v3990 = vld [vmem:[%s3989] sm:$0xf]
      %v3991 = vld [vmem:[%s3989 + $0x4] sm:$0xf]
      %v3992 = vld [vmem:[%s3989 + $0x8] sm:$0xf]
      %v3993 = vld [vmem:[%s3989 + $0xc] sm:$0xf]
      %v3994 = vld [vmem:[%s3989 + $0x10] sm:$0xf]
      %v3995 = vld [vmem:[%s3989 + $0x14] sm:$0xf]
      %v3996 = vld [vmem:[%s3989 + $0x18] sm:$0xf]
      %v3997 = vld [vmem:[%s3989 + $0x1c] sm:$0xf]
      %v3998 = vld [vmem:[%s3989 + $0x20] sm:$0xf]
      %v3999 = vld [vmem:[%s3989 + $0x24] sm:$0xf]
      %v4000 = vld [vmem:[%s3989 + $0x28] sm:$0xf]
      %v4001 = vld [vmem:[%s3989 + $0x2c] sm:$0xf]
      %v4002 = vld [vmem:[%s3989 + $0x30] sm:$0xf]
      %v4003 = vld [vmem:[%s3989 + $0x34] sm:$0xf]
      %v4004 = vld [vmem:[%s3989 + $0x38] sm:$0xf]
      %v4005 = vld [vmem:[%s3989 + $0x3c] sm:$0xf]
      %v4022 = vunpack.c.l.b16 %v3990
      %v4023 = vunpack.c.l.b16 %v3991
      %v4024 = vunpack.c.l.b16 %v3992
      %v4025 = vunpack.c.l.b16 %v3993
      %v4026 = vunpack.c.l.b16 %v3994
      %v4027 = vunpack.c.l.b16 %v3995
      %v4028 = vunpack.c.l.b16 %v3996
      %v4029 = vunpack.c.l.b16 %v3997
      %v4030 = vunpack.c.l.b16 %v3998
      %v4031 = vunpack.c.l.b16 %v3999
      %v4032 = vunpack.c.l.b16 %v4000
      %v4033 = vunpack.c.l.b16 %v4001
      %v4034 = vunpack.c.l.b16 %v4002
      %v4035 = vunpack.c.l.b16 %v4003
      %v4036 = vunpack.c.l.b16 %v4004
      %v4037 = vunpack.c.l.b16 %v4005
      %v4038 = vpack.c.b16 %v4023, %v4022
      %v4039 = vpack.c.b16 %v4025, %v4024
      %v4040 = vpack.c.b16 %v4027, %v4026
      %v4041 = vpack.c.b16 %v4029, %v4028
      %v4042 = vpack.c.b16 %v4031, %v4030
      %v4043 = vpack.c.b16 %v4033, %v4032
      %v4044 = vpack.c.b16 %v4035, %v4034
      %v4045 = vpack.c.b16 %v4037, %v4036
      %4054 = vrot.lane.b32.xlu0 %v3376, 125
      %v4055 = vpop.permute.xlu0 %4054
      %4056 = vrot.lane.b32.xlu0 %v3377, 125
      %v4057 = vpop.permute.xlu0 %4056
      %4058 = vrot.lane.b32.xlu0 %v3378, 125
      %v4059 = vpop.permute.xlu0 %4058
      %4060 = vrot.lane.b32.xlu0 %v3379, 125
      %v4061 = vpop.permute.xlu0 %4060
      %4062 = vrot.lane.b32.xlu0 %v3380, 125
      %v4063 = vpop.permute.xlu0 %4062
      %4064 = vrot.lane.b32.xlu0 %v3381, 125
      %v4065 = vpop.permute.xlu0 %4064
      %4066 = vrot.lane.b32.xlu0 %v3382, 125
      %v4067 = vpop.permute.xlu0 %4066
      %4068 = vrot.lane.b32.xlu0 %v3383, 125
      %v4069 = vpop.permute.xlu0 %4068
      %4078 = vmatprep.subr.bf16.mxu0 0
      %4079 = vmatpush1.bf16.msra.mxu0 %v4069
      %4080 = vmatprep.subr.bf16.mxu0 0
      %4081 = vmatpush1.bf16.msra.mxu0 %v4067
      %4082 = vmatprep.subr.bf16.mxu0 0
      %4083 = vmatpush1.bf16.msra.mxu0 %v4065
      %4084 = vmatprep.subr.bf16.mxu0 0
      %4085 = vmatpush1.bf16.msra.mxu0 %v4063
      %4086 = vmatprep.subr.bf16.mxu0 0
      %4087 = vmatpush1.bf16.msra.mxu0 %v4061
      %4088 = vmatprep.subr.bf16.mxu0 0
      %4089 = vmatpush1.bf16.msra.mxu0 %v4059
      %4090 = vmatprep.subr.bf16.mxu0 0
      %4091 = vmatpush1.bf16.msra.mxu0 %v4057
      %4092 = vmatprep.subr.bf16.mxu0 0
      %4093 = vmatpush1.bf16.msra.mxu0 %v4055
      %4094 = vmatprep.subr.bf16.mxu0 0
      %4095 = vmatpush2.bf16.msra.mxu0 0
      %4096 = vmatprep.subr.bf16.mxu0 0
      %4097 = vmatpush2.bf16.msra.mxu0 0
      %4098 = vmatprep.subr.bf16.mxu0 0
      %4099 = vmatpush2.bf16.msra.mxu0 0
      %4100 = vmatprep.subr.bf16.mxu0 0
      %4101 = vmatpush2.bf16.msra.mxu0 0
      %4102 = vmatprep.subr.bf16.mxu0 0
      %4103 = vmatpush2.bf16.msra.mxu0 0
      %4104 = vmatprep.subr.bf16.mxu0 0
      %4105 = vmatpush2.bf16.msra.mxu0 0
      %4106 = vmatprep.subr.bf16.mxu0 0
      %4107 = vmatpush2.bf16.msra.mxu0 0
      %4108 = vmatprep.subr.bf16.mxu0 0
      %4109 = vmatpush2.bf16.msra.mxu0 0
      %4110 = vmatprep.mubr.bf16.mxu0 0
      %4111 = vmatmul.mubr.bf16.gmra.mxu0 %v4038
      %v4112 = vpop.f32.mrf.mxu0
      %v4113 = vadd.f32 0.0, %v4112
      %v4114 = vpop.f32.mrf.mxu0
      %v4115 = vpop.f32.mrf.mxu0
      %v4116 = vadd.f32 0.0, %v4115
      %v4117 = vpop.f32.mrf.mxu0
      %4118 = vmatprep.mubr.bf16.mxu0 0
      %4119 = vmatmul.mubr.bf16.gmra.mxu0 %v4039
      %v4120 = vpop.f32.mrf.mxu0
      %v4121 = vadd.f32 0.0, %v4120
      %v4122 = vpop.f32.mrf.mxu0
      %v4123 = vpop.f32.mrf.mxu0
      %v4124 = vadd.f32 0.0, %v4123
      %v4125 = vpop.f32.mrf.mxu0
      %4126 = vmatprep.mubr.bf16.mxu0 0
      %4127 = vmatmul.mubr.bf16.gmra.mxu0 %v4040
      %v4128 = vpop.f32.mrf.mxu0
      %v4129 = vadd.f32 0.0, %v4128
      %v4130 = vpop.f32.mrf.mxu0
      %v4131 = vpop.f32.mrf.mxu0
      %v4132 = vadd.f32 0.0, %v4131
      %v4133 = vpop.f32.mrf.mxu0
      %4134 = vmatprep.mubr.bf16.mxu0 0
      %4135 = vmatmul.mubr.bf16.gmra.mxu0 %v4041
      %v4136 = vpop.f32.mrf.mxu0
      %v4137 = vadd.f32 0.0, %v4136
      %v4138 = vpop.f32.mrf.mxu0
      %v4139 = vpop.f32.mrf.mxu0
      %v4140 = vadd.f32 0.0, %v4139
      %v4141 = vpop.f32.mrf.mxu0
      %4142 = vmatprep.mubr.bf16.mxu0 0
      %4143 = vmatmul.mubr.bf16.gmra.mxu0 %v4042
      %v4144 = vpop.f32.mrf.mxu0
      %v4145 = vadd.f32 0.0, %v4144
      %v4146 = vpop.f32.mrf.mxu0
      %v4147 = vpop.f32.mrf.mxu0
      %v4148 = vadd.f32 0.0, %v4147
      %v4149 = vpop.f32.mrf.mxu0
      %4150 = vmatprep.mubr.bf16.mxu0 0
      %4151 = vmatmul.mubr.bf16.gmra.mxu0 %v4043
      %v4152 = vpop.f32.mrf.mxu0
      %v4153 = vadd.f32 0.0, %v4152
      %v4154 = vpop.f32.mrf.mxu0
      %v4155 = vpop.f32.mrf.mxu0
      %v4156 = vadd.f32 0.0, %v4155
      %v4157 = vpop.f32.mrf.mxu0
      %4158 = vmatprep.mubr.bf16.mxu0 0
      %4159 = vmatmul.mubr.bf16.gmra.mxu0 %v4044
      %v4160 = vpop.f32.mrf.mxu0
      %v4161 = vadd.f32 0.0, %v4160
      %v4162 = vpop.f32.mrf.mxu0
      %v4163 = vpop.f32.mrf.mxu0
      %v4164 = vadd.f32 0.0, %v4163
      %v4165 = vpop.f32.mrf.mxu0
      %4166 = vmatprep.mubr.bf16.mxu0 0
      %4167 = vmatmul.mubr.bf16.gmra.mxu0 %v4045
      %v4168 = vpop.f32.mrf.mxu0
      %v4169 = vadd.f32 0.0, %v4168
      %v4170 = vpop.f32.mrf.mxu0
      %v4171 = vpop.f32.mrf.mxu0
      %v4172 = vadd.f32 0.0, %v4171
      %v4173 = vpop.f32.mrf.mxu0
      %4174 = vdwg.mxu0
      %v4175 = vadd.f32 %v3973, %v4113
      %v4176 = vadd.f32 %v3974, %v4116
      %v4177 = vadd.f32 %v3975, %v4121
      %v4178 = vadd.f32 %v3976, %v4124
      %v4179 = vadd.f32 %v3977, %v4129
      %v4180 = vadd.f32 %v3978, %v4132
      %v4181 = vadd.f32 %v3979, %v4137
      %v4182 = vadd.f32 %v3980, %v4140
      %v4183 = vadd.f32 %v3981, %v4145
      %v4184 = vadd.f32 %v3982, %v4148
      %v4185 = vadd.f32 %v3983, %v4153
      %v4186 = vadd.f32 %v3984, %v4156
      %v4187 = vadd.f32 %v3985, %v4161
      %v4188 = vadd.f32 %v3986, %v4164
      %v4189 = vadd.f32 %v3987, %v4169
      %v4190 = vadd.f32 %v3988, %v4172
      %s4191 = scalar_lea.vmem %s7, 256
      %v4192 = vld [vmem:[%s4191] sm:$0xf]
      %v4193 = vld [vmem:[%s4191 + $0x4] sm:$0xf]
      %v4194 = vld [vmem:[%s4191 + $0x8] sm:$0xf]
      %v4195 = vld [vmem:[%s4191 + $0xc] sm:$0xf]
      %v4196 = vld [vmem:[%s4191 + $0x10] sm:$0xf]
      %v4197 = vld [vmem:[%s4191 + $0x14] sm:$0xf]
      %v4198 = vld [vmem:[%s4191 + $0x18] sm:$0xf]
      %v4199 = vld [vmem:[%s4191 + $0x1c] sm:$0xf]
      %v4200 = vld [vmem:[%s4191 + $0x20] sm:$0xf]
      %v4201 = vld [vmem:[%s4191 + $0x24] sm:$0xf]
      %v4202 = vld [vmem:[%s4191 + $0x28] sm:$0xf]
      %v4203 = vld [vmem:[%s4191 + $0x2c] sm:$0xf]
      %v4204 = vld [vmem:[%s4191 + $0x30] sm:$0xf]
      %v4205 = vld [vmem:[%s4191 + $0x34] sm:$0xf]
      %v4206 = vld [vmem:[%s4191 + $0x38] sm:$0xf]
      %v4207 = vld [vmem:[%s4191 + $0x3c] sm:$0xf]
      %v4224 = vunpack.c.l.b16 %v4192
      %v4225 = vunpack.c.l.b16 %v4193
      %v4226 = vunpack.c.l.b16 %v4194
      %v4227 = vunpack.c.l.b16 %v4195
      %v4228 = vunpack.c.l.b16 %v4196
      %v4229 = vunpack.c.l.b16 %v4197
      %v4230 = vunpack.c.l.b16 %v4198
      %v4231 = vunpack.c.l.b16 %v4199
      %v4232 = vunpack.c.l.b16 %v4200
      %v4233 = vunpack.c.l.b16 %v4201
      %v4234 = vunpack.c.l.b16 %v4202
      %v4235 = vunpack.c.l.b16 %v4203
      %v4236 = vunpack.c.l.b16 %v4204
      %v4237 = vunpack.c.l.b16 %v4205
      %v4238 = vunpack.c.l.b16 %v4206
      %v4239 = vunpack.c.l.b16 %v4207
      %v4240 = vpack.c.b16 %v4225, %v4224
      %v4241 = vpack.c.b16 %v4227, %v4226
      %v4242 = vpack.c.b16 %v4229, %v4228
      %v4243 = vpack.c.b16 %v4231, %v4230
      %v4244 = vpack.c.b16 %v4233, %v4232
      %v4245 = vpack.c.b16 %v4235, %v4234
      %v4246 = vpack.c.b16 %v4237, %v4236
      %v4247 = vpack.c.b16 %v4239, %v4238
      %4256 = vrot.lane.b32.xlu0 %v3376, 124
      %v4257 = vpop.permute.xlu0 %4256
      %4258 = vrot.lane.b32.xlu0 %v3377, 124
      %v4259 = vpop.permute.xlu0 %4258
      %4260 = vrot.lane.b32.xlu0 %v3378, 124
      %v4261 = vpop.permute.xlu0 %4260
      %4262 = vrot.lane.b32.xlu0 %v3379, 124
      %v4263 = vpop.permute.xlu0 %4262
      %4264 = vrot.lane.b32.xlu0 %v3380, 124
      %v4265 = vpop.permute.xlu0 %4264
      %4266 = vrot.lane.b32.xlu0 %v3381, 124
      %v4267 = vpop.permute.xlu0 %4266
      %4268 = vrot.lane.b32.xlu0 %v3382, 124
      %v4269 = vpop.permute.xlu0 %4268
      %4270 = vrot.lane.b32.xlu0 %v3383, 124
      %v4271 = vpop.permute.xlu0 %4270
      %4280 = vmatprep.subr.bf16.mxu0 0
      %4281 = vmatpush1.bf16.msra.mxu0 %v4271
      %4282 = vmatprep.subr.bf16.mxu0 0
      %4283 = vmatpush1.bf16.msra.mxu0 %v4269
      %4284 = vmatprep.subr.bf16.mxu0 0
      %4285 = vmatpush1.bf16.msra.mxu0 %v4267
      %4286 = vmatprep.subr.bf16.mxu0 0
      %4287 = vmatpush1.bf16.msra.mxu0 %v4265
      %4288 = vmatprep.subr.bf16.mxu0 0
      %4289 = vmatpush1.bf16.msra.mxu0 %v4263
      %4290 = vmatprep.subr.bf16.mxu0 0
      %4291 = vmatpush1.bf16.msra.mxu0 %v4261
      %4292 = vmatprep.subr.bf16.mxu0 0
      %4293 = vmatpush1.bf16.msra.mxu0 %v4259
      %4294 = vmatprep.subr.bf16.mxu0 0
      %4295 = vmatpush1.bf16.msra.mxu0 %v4257
      %4296 = vmatprep.subr.bf16.mxu0 0
      %4297 = vmatpush2.bf16.msra.mxu0 0
      %4298 = vmatprep.subr.bf16.mxu0 0
      %4299 = vmatpush2.bf16.msra.mxu0 0
      %4300 = vmatprep.subr.bf16.mxu0 0
      %4301 = vmatpush2.bf16.msra.mxu0 0
      %4302 = vmatprep.subr.bf16.mxu0 0
      %4303 = vmatpush2.bf16.msra.mxu0 0
      %4304 = vmatprep.subr.bf16.mxu0 0
      %4305 = vmatpush2.bf16.msra.mxu0 0
      %4306 = vmatprep.subr.bf16.mxu0 0
      %4307 = vmatpush2.bf16.msra.mxu0 0
      %4308 = vmatprep.subr.bf16.mxu0 0
      %4309 = vmatpush2.bf16.msra.mxu0 0
      %4310 = vmatprep.subr.bf16.mxu0 0
      %4311 = vmatpush2.bf16.msra.mxu0 0
      %4312 = vmatprep.mubr.bf16.mxu0 0
      %4313 = vmatmul.mubr.bf16.gmra.mxu0 %v4240
      %v4314 = vpop.f32.mrf.mxu0
      %v4315 = vadd.f32 0.0, %v4314
      %v4316 = vpop.f32.mrf.mxu0
      %v4317 = vpop.f32.mrf.mxu0
      %v4318 = vadd.f32 0.0, %v4317
      %v4319 = vpop.f32.mrf.mxu0
      %4320 = vmatprep.mubr.bf16.mxu0 0
      %4321 = vmatmul.mubr.bf16.gmra.mxu0 %v4241
      %v4322 = vpop.f32.mrf.mxu0
      %v4323 = vadd.f32 0.0, %v4322
      %v4324 = vpop.f32.mrf.mxu0
      %v4325 = vpop.f32.mrf.mxu0
      %v4326 = vadd.f32 0.0, %v4325
      %v4327 = vpop.f32.mrf.mxu0
      %4328 = vmatprep.mubr.bf16.mxu0 0
      %4329 = vmatmul.mubr.bf16.gmra.mxu0 %v4242
      %v4330 = vpop.f32.mrf.mxu0
      %v4331 = vadd.f32 0.0, %v4330
      %v4332 = vpop.f32.mrf.mxu0
      %v4333 = vpop.f32.mrf.mxu0
      %v4334 = vadd.f32 0.0, %v4333
      %v4335 = vpop.f32.mrf.mxu0
      %4336 = vmatprep.mubr.bf16.mxu0 0
      %4337 = vmatmul.mubr.bf16.gmra.mxu0 %v4243
      %v4338 = vpop.f32.mrf.mxu0
      %v4339 = vadd.f32 0.0, %v4338
      %v4340 = vpop.f32.mrf.mxu0
      %v4341 = vpop.f32.mrf.mxu0
      %v4342 = vadd.f32 0.0, %v4341
      %v4343 = vpop.f32.mrf.mxu0
      %4344 = vmatprep.mubr.bf16.mxu0 0
      %4345 = vmatmul.mubr.bf16.gmra.mxu0 %v4244
      %v4346 = vpop.f32.mrf.mxu0
      %v4347 = vadd.f32 0.0, %v4346
      %v4348 = vpop.f32.mrf.mxu0
      %v4349 = vpop.f32.mrf.mxu0
      %v4350 = vadd.f32 0.0, %v4349
      %v4351 = vpop.f32.mrf.mxu0
      %4352 = vmatprep.mubr.bf16.mxu0 0
      %4353 = vmatmul.mubr.bf16.gmra.mxu0 %v4245
      %v4354 = vpop.f32.mrf.mxu0
      %v4355 = vadd.f32 0.0, %v4354
      %v4356 = vpop.f32.mrf.mxu0
      %v4357 = vpop.f32.mrf.mxu0
      %v4358 = vadd.f32 0.0, %v4357
      %v4359 = vpop.f32.mrf.mxu0
      %4360 = vmatprep.mubr.bf16.mxu0 0
      %4361 = vmatmul.mubr.bf16.gmra.mxu0 %v4246
      %v4362 = vpop.f32.mrf.mxu0
      %v4363 = vadd.f32 0.0, %v4362
      %v4364 = vpop.f32.mrf.mxu0
      %v4365 = vpop.f32.mrf.mxu0
      %v4366 = vadd.f32 0.0, %v4365
      %v4367 = vpop.f32.mrf.mxu0
      %4368 = vmatprep.mubr.bf16.mxu0 0
      %4369 = vmatmul.mubr.bf16.gmra.mxu0 %v4247
      %v4370 = vpop.f32.mrf.mxu0
      %v4371 = vadd.f32 0.0, %v4370
      %v4372 = vpop.f32.mrf.mxu0
      %v4373 = vpop.f32.mrf.mxu0
      %v4374 = vadd.f32 0.0, %v4373
      %v4375 = vpop.f32.mrf.mxu0
      %4376 = vdwg.mxu0
      %v4377 = vadd.f32 %v4175, %v4315
      %v4378 = vadd.f32 %v4176, %v4318
      %v4379 = vadd.f32 %v4177, %v4323
      %v4380 = vadd.f32 %v4178, %v4326
      %v4381 = vadd.f32 %v4179, %v4331
      %v4382 = vadd.f32 %v4180, %v4334
      %v4383 = vadd.f32 %v4181, %v4339
      %v4384 = vadd.f32 %v4182, %v4342
      %v4385 = vadd.f32 %v4183, %v4347
      %v4386 = vadd.f32 %v4184, %v4350
      %v4387 = vadd.f32 %v4185, %v4355
      %v4388 = vadd.f32 %v4186, %v4358
      %v4389 = vadd.f32 %v4187, %v4363
      %v4390 = vadd.f32 %v4188, %v4366
      %v4391 = vadd.f32 %v4189, %v4371
      %v4392 = vadd.f32 %v4190, %v4374
      %s4393 = scalar_lea.vmem %s7, 320
      %v4394 = vld [vmem:[%s4393] sm:$0xf]
      %v4395 = vld [vmem:[%s4393 + $0x4] sm:$0xf]
      %v4396 = vld [vmem:[%s4393 + $0x8] sm:$0xf]
      %v4397 = vld [vmem:[%s4393 + $0xc] sm:$0xf]
      %v4398 = vld [vmem:[%s4393 + $0x10] sm:$0xf]
      %v4399 = vld [vmem:[%s4393 + $0x14] sm:$0xf]
      %v4400 = vld [vmem:[%s4393 + $0x18] sm:$0xf]
      %v4401 = vld [vmem:[%s4393 + $0x1c] sm:$0xf]
      %v4402 = vld [vmem:[%s4393 + $0x20] sm:$0xf]
      %v4403 = vld [vmem:[%s4393 + $0x24] sm:$0xf]
      %v4404 = vld [vmem:[%s4393 + $0x28] sm:$0xf]
      %v4405 = vld [vmem:[%s4393 + $0x2c] sm:$0xf]
      %v4406 = vld [vmem:[%s4393 + $0x30] sm:$0xf]
      %v4407 = vld [vmem:[%s4393 + $0x34] sm:$0xf]
      %v4408 = vld [vmem:[%s4393 + $0x38] sm:$0xf]
      %v4409 = vld [vmem:[%s4393 + $0x3c] sm:$0xf]
      %v4426 = vunpack.c.l.b16 %v4394
      %v4427 = vunpack.c.l.b16 %v4395
      %v4428 = vunpack.c.l.b16 %v4396
      %v4429 = vunpack.c.l.b16 %v4397
      %v4430 = vunpack.c.l.b16 %v4398
      %v4431 = vunpack.c.l.b16 %v4399
      %v4432 = vunpack.c.l.b16 %v4400
      %v4433 = vunpack.c.l.b16 %v4401
      %v4434 = vunpack.c.l.b16 %v4402
      %v4435 = vunpack.c.l.b16 %v4403
      %v4436 = vunpack.c.l.b16 %v4404
      %v4437 = vunpack.c.l.b16 %v4405
      %v4438 = vunpack.c.l.b16 %v4406
      %v4439 = vunpack.c.l.b16 %v4407
      %v4440 = vunpack.c.l.b16 %v4408
      %v4441 = vunpack.c.l.b16 %v4409
      %v4442 = vpack.c.b16 %v4427, %v4426
      %v4443 = vpack.c.b16 %v4429, %v4428
      %v4444 = vpack.c.b16 %v4431, %v4430
      %v4445 = vpack.c.b16 %v4433, %v4432
      %v4446 = vpack.c.b16 %v4435, %v4434
      %v4447 = vpack.c.b16 %v4437, %v4436
      %v4448 = vpack.c.b16 %v4439, %v4438
      %v4449 = vpack.c.b16 %v4441, %v4440
      %4458 = vrot.lane.b32.xlu0 %v3376, 123
      %v4459 = vpop.permute.xlu0 %4458
      %4460 = vrot.lane.b32.xlu0 %v3377, 123
      %v4461 = vpop.permute.xlu0 %4460
      %4462 = vrot.lane.b32.xlu0 %v3378, 123
      %v4463 = vpop.permute.xlu0 %4462
      %4464 = vrot.lane.b32.xlu0 %v3379, 123
      %v4465 = vpop.permute.xlu0 %4464
      %4466 = vrot.lane.b32.xlu0 %v3380, 123
      %v4467 = vpop.permute.xlu0 %4466
      %4468 = vrot.lane.b32.xlu0 %v3381, 123
      %v4469 = vpop.permute.xlu0 %4468
      %4470 = vrot.lane.b32.xlu0 %v3382, 123
      %v4471 = vpop.permute.xlu0 %4470
      %4472 = vrot.lane.b32.xlu0 %v3383, 123
      %v4473 = vpop.permute.xlu0 %4472
      %4482 = vmatprep.subr.bf16.mxu0 0
      %4483 = vmatpush1.bf16.msra.mxu0 %v4473
      %4484 = vmatprep.subr.bf16.mxu0 0
      %4485 = vmatpush1.bf16.msra.mxu0 %v4471
      %4486 = vmatprep.subr.bf16.mxu0 0
      %4487 = vmatpush1.bf16.msra.mxu0 %v4469
      %4488 = vmatprep.subr.bf16.mxu0 0
      %4489 = vmatpush1.bf16.msra.mxu0 %v4467
      %4490 = vmatprep.subr.bf16.mxu0 0
      %4491 = vmatpush1.bf16.msra.mxu0 %v4465
      %4492 = vmatprep.subr.bf16.mxu0 0
      %4493 = vmatpush1.bf16.msra.mxu0 %v4463
      %4494 = vmatprep.subr.bf16.mxu0 0
      %4495 = vmatpush1.bf16.msra.mxu0 %v4461
      %4496 = vmatprep.subr.bf16.mxu0 0
      %4497 = vmatpush1.bf16.msra.mxu0 %v4459
      %4498 = vmatprep.subr.bf16.mxu0 0
      %4499 = vmatpush2.bf16.msra.mxu0 0
      %4500 = vmatprep.subr.bf16.mxu0 0
      %4501 = vmatpush2.bf16.msra.mxu0 0
      %4502 = vmatprep.subr.bf16.mxu0 0
      %4503 = vmatpush2.bf16.msra.mxu0 0
      %4504 = vmatprep.subr.bf16.mxu0 0
      %4505 = vmatpush2.bf16.msra.mxu0 0
      %4506 = vmatprep.subr.bf16.mxu0 0
      %4507 = vmatpush2.bf16.msra.mxu0 0
      %4508 = vmatprep.subr.bf16.mxu0 0
      %4509 = vmatpush2.bf16.msra.mxu0 0
      %4510 = vmatprep.subr.bf16.mxu0 0
      %4511 = vmatpush2.bf16.msra.mxu0 0
      %4512 = vmatprep.subr.bf16.mxu0 0
      %4513 = vmatpush2.bf16.msra.mxu0 0
      %4514 = vmatprep.mubr.bf16.mxu0 0
      %4515 = vmatmul.mubr.bf16.gmra.mxu0 %v4442
      %v4516 = vpop.f32.mrf.mxu0
      %v4517 = vadd.f32 0.0, %v4516
      %v4518 = vpop.f32.mrf.mxu0
      %v4519 = vpop.f32.mrf.mxu0
      %v4520 = vadd.f32 0.0, %v4519
      %v4521 = vpop.f32.mrf.mxu0
      %4522 = vmatprep.mubr.bf16.mxu0 0
      %4523 = vmatmul.mubr.bf16.gmra.mxu0 %v4443
      %v4524 = vpop.f32.mrf.mxu0
      %v4525 = vadd.f32 0.0, %v4524
      %v4526 = vpop.f32.mrf.mxu0
      %v4527 = vpop.f32.mrf.mxu0
      %v4528 = vadd.f32 0.0, %v4527
      %v4529 = vpop.f32.mrf.mxu0
      %4530 = vmatprep.mubr.bf16.mxu0 0
      %4531 = vmatmul.mubr.bf16.gmra.mxu0 %v4444
      %v4532 = vpop.f32.mrf.mxu0
      %v4533 = vadd.f32 0.0, %v4532
      %v4534 = vpop.f32.mrf.mxu0
      %v4535 = vpop.f32.mrf.mxu0
      %v4536 = vadd.f32 0.0, %v4535
      %v4537 = vpop.f32.mrf.mxu0
      %4538 = vmatprep.mubr.bf16.mxu0 0
      %4539 = vmatmul.mubr.bf16.gmra.mxu0 %v4445
      %v4540 = vpop.f32.mrf.mxu0
      %v4541 = vadd.f32 0.0, %v4540
      %v4542 = vpop.f32.mrf.mxu0
      %v4543 = vpop.f32.mrf.mxu0
      %v4544 = vadd.f32 0.0, %v4543
      %v4545 = vpop.f32.mrf.mxu0
      %4546 = vmatprep.mubr.bf16.mxu0 0
      %4547 = vmatmul.mubr.bf16.gmra.mxu0 %v4446
      %v4548 = vpop.f32.mrf.mxu0
      %v4549 = vadd.f32 0.0, %v4548
      %v4550 = vpop.f32.mrf.mxu0
      %v4551 = vpop.f32.mrf.mxu0
      %v4552 = vadd.f32 0.0, %v4551
      %v4553 = vpop.f32.mrf.mxu0
      %4554 = vmatprep.mubr.bf16.mxu0 0
      %4555 = vmatmul.mubr.bf16.gmra.mxu0 %v4447
      %v4556 = vpop.f32.mrf.mxu0
      %v4557 = vadd.f32 0.0, %v4556
      %v4558 = vpop.f32.mrf.mxu0
      %v4559 = vpop.f32.mrf.mxu0
      %v4560 = vadd.f32 0.0, %v4559
      %v4561 = vpop.f32.mrf.mxu0
      %4562 = vmatprep.mubr.bf16.mxu0 0
      %4563 = vmatmul.mubr.bf16.gmra.mxu0 %v4448
      %v4564 = vpop.f32.mrf.mxu0
      %v4565 = vadd.f32 0.0, %v4564
      %v4566 = vpop.f32.mrf.mxu0
      %v4567 = vpop.f32.mrf.mxu0
      %v4568 = vadd.f32 0.0, %v4567
      %v4569 = vpop.f32.mrf.mxu0
      %4570 = vmatprep.mubr.bf16.mxu0 0
      %4571 = vmatmul.mubr.bf16.gmra.mxu0 %v4449
      %v4572 = vpop.f32.mrf.mxu0
      %v4573 = vadd.f32 0.0, %v4572
      %v4574 = vpop.f32.mrf.mxu0
      %v4575 = vpop.f32.mrf.mxu0
      %v4576 = vadd.f32 0.0, %v4575
      %v4577 = vpop.f32.mrf.mxu0
      %4578 = vdwg.mxu0
      %v4579 = vadd.f32 %v4377, %v4517
      %v4580 = vadd.f32 %v4378, %v4520
      %v4581 = vadd.f32 %v4379, %v4525
      %v4582 = vadd.f32 %v4380, %v4528
      %v4583 = vadd.f32 %v4381, %v4533
      %v4584 = vadd.f32 %v4382, %v4536
      %v4585 = vadd.f32 %v4383, %v4541
      %v4586 = vadd.f32 %v4384, %v4544
      %v4587 = vadd.f32 %v4385, %v4549
      %v4588 = vadd.f32 %v4386, %v4552
      %v4589 = vadd.f32 %v4387, %v4557
      %v4590 = vadd.f32 %v4388, %v4560
      %v4591 = vadd.f32 %v4389, %v4565
      %v4592 = vadd.f32 %v4390, %v4568
      %v4593 = vadd.f32 %v4391, %v4573
      %v4594 = vadd.f32 %v4392, %v4576
      %s4595 = scalar_lea.vmem %s7, 384
      %v4596 = vld [vmem:[%s4595] sm:$0xf]
      %v4597 = vld [vmem:[%s4595 + $0x4] sm:$0xf]
      %v4598 = vld [vmem:[%s4595 + $0x8] sm:$0xf]
      %v4599 = vld [vmem:[%s4595 + $0xc] sm:$0xf]
      %v4600 = vld [vmem:[%s4595 + $0x10] sm:$0xf]
      %v4601 = vld [vmem:[%s4595 + $0x14] sm:$0xf]
      %v4602 = vld [vmem:[%s4595 + $0x18] sm:$0xf]
      %v4603 = vld [vmem:[%s4595 + $0x1c] sm:$0xf]
      %v4604 = vld [vmem:[%s4595 + $0x20] sm:$0xf]
      %v4605 = vld [vmem:[%s4595 + $0x24] sm:$0xf]
      %v4606 = vld [vmem:[%s4595 + $0x28] sm:$0xf]
      %v4607 = vld [vmem:[%s4595 + $0x2c] sm:$0xf]
      %v4608 = vld [vmem:[%s4595 + $0x30] sm:$0xf]
      %v4609 = vld [vmem:[%s4595 + $0x34] sm:$0xf]
      %v4610 = vld [vmem:[%s4595 + $0x38] sm:$0xf]
      %v4611 = vld [vmem:[%s4595 + $0x3c] sm:$0xf]
      %v4628 = vunpack.c.l.b16 %v4596
      %v4629 = vunpack.c.l.b16 %v4597
      %v4630 = vunpack.c.l.b16 %v4598
      %v4631 = vunpack.c.l.b16 %v4599
      %v4632 = vunpack.c.l.b16 %v4600
      %v4633 = vunpack.c.l.b16 %v4601
      %v4634 = vunpack.c.l.b16 %v4602
      %v4635 = vunpack.c.l.b16 %v4603
      %v4636 = vunpack.c.l.b16 %v4604
      %v4637 = vunpack.c.l.b16 %v4605
      %v4638 = vunpack.c.l.b16 %v4606
      %v4639 = vunpack.c.l.b16 %v4607
      %v4640 = vunpack.c.l.b16 %v4608
      %v4641 = vunpack.c.l.b16 %v4609
      %v4642 = vunpack.c.l.b16 %v4610
      %v4643 = vunpack.c.l.b16 %v4611
      %v4644 = vpack.c.b16 %v4629, %v4628
      %v4645 = vpack.c.b16 %v4631, %v4630
      %v4646 = vpack.c.b16 %v4633, %v4632
      %v4647 = vpack.c.b16 %v4635, %v4634
      %v4648 = vpack.c.b16 %v4637, %v4636
      %v4649 = vpack.c.b16 %v4639, %v4638
      %v4650 = vpack.c.b16 %v4641, %v4640
      %v4651 = vpack.c.b16 %v4643, %v4642
      %4660 = vrot.lane.b32.xlu0 %v3376, 122
      %v4661 = vpop.permute.xlu0 %4660
      %4662 = vrot.lane.b32.xlu0 %v3377, 122
      %v4663 = vpop.permute.xlu0 %4662
      %4664 = vrot.lane.b32.xlu0 %v3378, 122
      %v4665 = vpop.permute.xlu0 %4664
      %4666 = vrot.lane.b32.xlu0 %v3379, 122
      %v4667 = vpop.permute.xlu0 %4666
      %4668 = vrot.lane.b32.xlu0 %v3380, 122
      %v4669 = vpop.permute.xlu0 %4668
      %4670 = vrot.lane.b32.xlu0 %v3381, 122
      %v4671 = vpop.permute.xlu0 %4670
      %4672 = vrot.lane.b32.xlu0 %v3382, 122
      %v4673 = vpop.permute.xlu0 %4672
      %4674 = vrot.lane.b32.xlu0 %v3383, 122
      %v4675 = vpop.permute.xlu0 %4674
      %4684 = vmatprep.subr.bf16.mxu0 0
      %4685 = vmatpush1.bf16.msra.mxu0 %v4675
      %4686 = vmatprep.subr.bf16.mxu0 0
      %4687 = vmatpush1.bf16.msra.mxu0 %v4673
      %4688 = vmatprep.subr.bf16.mxu0 0
      %4689 = vmatpush1.bf16.msra.mxu0 %v4671
      %4690 = vmatprep.subr.bf16.mxu0 0
      %4691 = vmatpush1.bf16.msra.mxu0 %v4669
      %4692 = vmatprep.subr.bf16.mxu0 0
      %4693 = vmatpush1.bf16.msra.mxu0 %v4667
      %4694 = vmatprep.subr.bf16.mxu0 0
      %4695 = vmatpush1.bf16.msra.mxu0 %v4665
      %4696 = vmatprep.subr.bf16.mxu0 0
      %4697 = vmatpush1.bf16.msra.mxu0 %v4663
      %4698 = vmatprep.subr.bf16.mxu0 0
      %4699 = vmatpush1.bf16.msra.mxu0 %v4661
      %4700 = vmatprep.subr.bf16.mxu0 0
      %4701 = vmatpush2.bf16.msra.mxu0 0
      %4702 = vmatprep.subr.bf16.mxu0 0
      %4703 = vmatpush2.bf16.msra.mxu0 0
      %4704 = vmatprep.subr.bf16.mxu0 0
      %4705 = vmatpush2.bf16.msra.mxu0 0
      %4706 = vmatprep.subr.bf16.mxu0 0
      %4707 = vmatpush2.bf16.msra.mxu0 0
      %4708 = vmatprep.subr.bf16.mxu0 0
      %4709 = vmatpush2.bf16.msra.mxu0 0
      %4710 = vmatprep.subr.bf16.mxu0 0
      %4711 = vmatpush2.bf16.msra.mxu0 0
      %4712 = vmatprep.subr.bf16.mxu0 0
      %4713 = vmatpush2.bf16.msra.mxu0 0
      %4714 = vmatprep.subr.bf16.mxu0 0
      %4715 = vmatpush2.bf16.msra.mxu0 0
      %4716 = vmatprep.mubr.bf16.mxu0 0
      %4717 = vmatmul.mubr.bf16.gmra.mxu0 %v4644
      %v4718 = vpop.f32.mrf.mxu0
      %v4719 = vadd.f32 0.0, %v4718
      %v4720 = vpop.f32.mrf.mxu0
      %v4721 = vpop.f32.mrf.mxu0
      %v4722 = vadd.f32 0.0, %v4721
      %v4723 = vpop.f32.mrf.mxu0
      %4724 = vmatprep.mubr.bf16.mxu0 0
      %4725 = vmatmul.mubr.bf16.gmra.mxu0 %v4645
      %v4726 = vpop.f32.mrf.mxu0
      %v4727 = vadd.f32 0.0, %v4726
      %v4728 = vpop.f32.mrf.mxu0
      %v4729 = vpop.f32.mrf.mxu0
      %v4730 = vadd.f32 0.0, %v4729
      %v4731 = vpop.f32.mrf.mxu0
      %4732 = vmatprep.mubr.bf16.mxu0 0
      %4733 = vmatmul.mubr.bf16.gmra.mxu0 %v4646
      %v4734 = vpop.f32.mrf.mxu0
      %v4735 = vadd.f32 0.0, %v4734
      %v4736 = vpop.f32.mrf.mxu0
      %v4737 = vpop.f32.mrf.mxu0
      %v4738 = vadd.f32 0.0, %v4737
      %v4739 = vpop.f32.mrf.mxu0
      %4740 = vmatprep.mubr.bf16.mxu0 0
      %4741 = vmatmul.mubr.bf16.gmra.mxu0 %v4647
      %v4742 = vpop.f32.mrf.mxu0
      %v4743 = vadd.f32 0.0, %v4742
      %v4744 = vpop.f32.mrf.mxu0
      %v4745 = vpop.f32.mrf.mxu0
      %v4746 = vadd.f32 0.0, %v4745
      %v4747 = vpop.f32.mrf.mxu0
      %4748 = vmatprep.mubr.bf16.mxu0 0
      %4749 = vmatmul.mubr.bf16.gmra.mxu0 %v4648
      %v4750 = vpop.f32.mrf.mxu0
      %v4751 = vadd.f32 0.0, %v4750
      %v4752 = vpop.f32.mrf.mxu0
      %v4753 = vpop.f32.mrf.mxu0
      %v4754 = vadd.f32 0.0, %v4753
      %v4755 = vpop.f32.mrf.mxu0
      %4756 = vmatprep.mubr.bf16.mxu0 0
      %4757 = vmatmul.mubr.bf16.gmra.mxu0 %v4649
      %v4758 = vpop.f32.mrf.mxu0
      %v4759 = vadd.f32 0.0, %v4758
      %v4760 = vpop.f32.mrf.mxu0
      %v4761 = vpop.f32.mrf.mxu0
      %v4762 = vadd.f32 0.0, %v4761
      %v4763 = vpop.f32.mrf.mxu0
      %4764 = vmatprep.mubr.bf16.mxu0 0
      %4765 = vmatmul.mubr.bf16.gmra.mxu0 %v4650
      %v4766 = vpop.f32.mrf.mxu0
      %v4767 = vadd.f32 0.0, %v4766
      %v4768 = vpop.f32.mrf.mxu0
      %v4769 = vpop.f32.mrf.mxu0
      %v4770 = vadd.f32 0.0, %v4769
      %v4771 = vpop.f32.mrf.mxu0
      %4772 = vmatprep.mubr.bf16.mxu0 0
      %4773 = vmatmul.mubr.bf16.gmra.mxu0 %v4651
      %v4774 = vpop.f32.mrf.mxu0
      %v4775 = vadd.f32 0.0, %v4774
      %v4776 = vpop.f32.mrf.mxu0
      %v4777 = vpop.f32.mrf.mxu0
      %v4778 = vadd.f32 0.0, %v4777
      %v4779 = vpop.f32.mrf.mxu0
      %4780 = vdwg.mxu0
      %v4781 = vadd.f32 %v4579, %v4719
      %v4782 = vadd.f32 %v4580, %v4722
      %v4783 = vadd.f32 %v4581, %v4727
      %v4784 = vadd.f32 %v4582, %v4730
      %v4785 = vadd.f32 %v4583, %v4735
      %v4786 = vadd.f32 %v4584, %v4738
      %v4787 = vadd.f32 %v4585, %v4743
      %v4788 = vadd.f32 %v4586, %v4746
      %v4789 = vadd.f32 %v4587, %v4751
      %v4790 = vadd.f32 %v4588, %v4754
      %v4791 = vadd.f32 %v4589, %v4759
      %v4792 = vadd.f32 %v4590, %v4762
      %v4793 = vadd.f32 %v4591, %v4767
      %v4794 = vadd.f32 %v4592, %v4770
      %v4795 = vadd.f32 %v4593, %v4775
      %v4796 = vadd.f32 %v4594, %v4778
      %s4797 = scalar_lea.vmem %s7, 448
      %v4798 = vld [vmem:[%s4797] sm:$0xf]
      %v4799 = vld [vmem:[%s4797 + $0x4] sm:$0xf]
      %v4800 = vld [vmem:[%s4797 + $0x8] sm:$0xf]
      %v4801 = vld [vmem:[%s4797 + $0xc] sm:$0xf]
      %v4802 = vld [vmem:[%s4797 + $0x10] sm:$0xf]
      %v4803 = vld [vmem:[%s4797 + $0x14] sm:$0xf]
      %v4804 = vld [vmem:[%s4797 + $0x18] sm:$0xf]
      %v4805 = vld [vmem:[%s4797 + $0x1c] sm:$0xf]
      %v4806 = vld [vmem:[%s4797 + $0x20] sm:$0xf]
      %v4807 = vld [vmem:[%s4797 + $0x24] sm:$0xf]
      %v4808 = vld [vmem:[%s4797 + $0x28] sm:$0xf]
      %v4809 = vld [vmem:[%s4797 + $0x2c] sm:$0xf]
      %v4810 = vld [vmem:[%s4797 + $0x30] sm:$0xf]
      %v4811 = vld [vmem:[%s4797 + $0x34] sm:$0xf]
      %v4812 = vld [vmem:[%s4797 + $0x38] sm:$0xf]
      %v4813 = vld [vmem:[%s4797 + $0x3c] sm:$0xf]
      %v4830 = vunpack.c.l.b16 %v4798
      %v4831 = vunpack.c.l.b16 %v4799
      %v4832 = vunpack.c.l.b16 %v4800
      %v4833 = vunpack.c.l.b16 %v4801
      %v4834 = vunpack.c.l.b16 %v4802
      %v4835 = vunpack.c.l.b16 %v4803
      %v4836 = vunpack.c.l.b16 %v4804
      %v4837 = vunpack.c.l.b16 %v4805
      %v4838 = vunpack.c.l.b16 %v4806
      %v4839 = vunpack.c.l.b16 %v4807
      %v4840 = vunpack.c.l.b16 %v4808
      %v4841 = vunpack.c.l.b16 %v4809
      %v4842 = vunpack.c.l.b16 %v4810
      %v4843 = vunpack.c.l.b16 %v4811
      %v4844 = vunpack.c.l.b16 %v4812
      %v4845 = vunpack.c.l.b16 %v4813
      %v4846 = vpack.c.b16 %v4831, %v4830
      %v4847 = vpack.c.b16 %v4833, %v4832
      %v4848 = vpack.c.b16 %v4835, %v4834
      %v4849 = vpack.c.b16 %v4837, %v4836
      %v4850 = vpack.c.b16 %v4839, %v4838
      %v4851 = vpack.c.b16 %v4841, %v4840
      %v4852 = vpack.c.b16 %v4843, %v4842
      %v4853 = vpack.c.b16 %v4845, %v4844
      %4862 = vrot.lane.b32.xlu0 %v3376, 121
      %v4863 = vpop.permute.xlu0 %4862
      %4864 = vrot.lane.b32.xlu0 %v3377, 121
      %v4865 = vpop.permute.xlu0 %4864
      %4866 = vrot.lane.b32.xlu0 %v3378, 121
      %v4867 = vpop.permute.xlu0 %4866
      %4868 = vrot.lane.b32.xlu0 %v3379, 121
      %v4869 = vpop.permute.xlu0 %4868
      %4870 = vrot.lane.b32.xlu0 %v3380, 121
      %v4871 = vpop.permute.xlu0 %4870
      %4872 = vrot.lane.b32.xlu0 %v3381, 121
      %v4873 = vpop.permute.xlu0 %4872
      %4874 = vrot.lane.b32.xlu0 %v3382, 121
      %v4875 = vpop.permute.xlu0 %4874
      %4876 = vrot.lane.b32.xlu0 %v3383, 121
      %v4877 = vpop.permute.xlu0 %4876
      %4886 = vmatprep.subr.bf16.mxu0 0
      %4887 = vmatpush1.bf16.msra.mxu0 %v4877
      %4888 = vmatprep.subr.bf16.mxu0 0
      %4889 = vmatpush1.bf16.msra.mxu0 %v4875
      %4890 = vmatprep.subr.bf16.mxu0 0
      %4891 = vmatpush1.bf16.msra.mxu0 %v4873
      %4892 = vmatprep.subr.bf16.mxu0 0
      %4893 = vmatpush1.bf16.msra.mxu0 %v4871
      %4894 = vmatprep.subr.bf16.mxu0 0
      %4895 = vmatpush1.bf16.msra.mxu0 %v4869
      %4896 = vmatprep.subr.bf16.mxu0 0
      %4897 = vmatpush1.bf16.msra.mxu0 %v4867
      %4898 = vmatprep.subr.bf16.mxu0 0
      %4899 = vmatpush1.bf16.msra.mxu0 %v4865
      %4900 = vmatprep.subr.bf16.mxu0 0
      %4901 = vmatpush1.bf16.msra.mxu0 %v4863
      %4902 = vmatprep.subr.bf16.mxu0 0
      %4903 = vmatpush2.bf16.msra.mxu0 0
      %4904 = vmatprep.subr.bf16.mxu0 0
      %4905 = vmatpush2.bf16.msra.mxu0 0
      %4906 = vmatprep.subr.bf16.mxu0 0
      %4907 = vmatpush2.bf16.msra.mxu0 0
      %4908 = vmatprep.subr.bf16.mxu0 0
      %4909 = vmatpush2.bf16.msra.mxu0 0
      %4910 = vmatprep.subr.bf16.mxu0 0
      %4911 = vmatpush2.bf16.msra.mxu0 0
      %4912 = vmatprep.subr.bf16.mxu0 0
      %4913 = vmatpush2.bf16.msra.mxu0 0
      %4914 = vmatprep.subr.bf16.mxu0 0
      %4915 = vmatpush2.bf16.msra.mxu0 0
      %4916 = vmatprep.subr.bf16.mxu0 0
      %4917 = vmatpush2.bf16.msra.mxu0 0
      %4918 = vmatprep.mubr.bf16.mxu0 0
      %4919 = vmatmul.mubr.bf16.gmra.mxu0 %v4846
      %v4920 = vpop.f32.mrf.mxu0
      %v4921 = vadd.f32 0.0, %v4920
      %v4922 = vpop.f32.mrf.mxu0
      %v4923 = vpop.f32.mrf.mxu0
      %v4924 = vadd.f32 0.0, %v4923
      %v4925 = vpop.f32.mrf.mxu0
      %4926 = vmatprep.mubr.bf16.mxu0 0
      %4927 = vmatmul.mubr.bf16.gmra.mxu0 %v4847
      %v4928 = vpop.f32.mrf.mxu0
      %v4929 = vadd.f32 0.0, %v4928
      %v4930 = vpop.f32.mrf.mxu0
      %v4931 = vpop.f32.mrf.mxu0
      %v4932 = vadd.f32 0.0, %v4931
      %v4933 = vpop.f32.mrf.mxu0
      %4934 = vmatprep.mubr.bf16.mxu0 0
      %4935 = vmatmul.mubr.bf16.gmra.mxu0 %v4848
      %v4936 = vpop.f32.mrf.mxu0
      %v4937 = vadd.f32 0.0, %v4936
      %v4938 = vpop.f32.mrf.mxu0
      %v4939 = vpop.f32.mrf.mxu0
      %v4940 = vadd.f32 0.0, %v4939
      %v4941 = vpop.f32.mrf.mxu0
      %4942 = vmatprep.mubr.bf16.mxu0 0
      %4943 = vmatmul.mubr.bf16.gmra.mxu0 %v4849
      %v4944 = vpop.f32.mrf.mxu0
      %v4945 = vadd.f32 0.0, %v4944
      %v4946 = vpop.f32.mrf.mxu0
      %v4947 = vpop.f32.mrf.mxu0
      %v4948 = vadd.f32 0.0, %v4947
      %v4949 = vpop.f32.mrf.mxu0
      %4950 = vmatprep.mubr.bf16.mxu0 0
      %4951 = vmatmul.mubr.bf16.gmra.mxu0 %v4850
      %v4952 = vpop.f32.mrf.mxu0
      %v4953 = vadd.f32 0.0, %v4952
      %v4954 = vpop.f32.mrf.mxu0
      %v4955 = vpop.f32.mrf.mxu0
      %v4956 = vadd.f32 0.0, %v4955
      %v4957 = vpop.f32.mrf.mxu0
      %4958 = vmatprep.mubr.bf16.mxu0 0
      %4959 = vmatmul.mubr.bf16.gmra.mxu0 %v4851
      %v4960 = vpop.f32.mrf.mxu0
      %v4961 = vadd.f32 0.0, %v4960
      %v4962 = vpop.f32.mrf.mxu0
      %v4963 = vpop.f32.mrf.mxu0
      %v4964 = vadd.f32 0.0, %v4963
      %v4965 = vpop.f32.mrf.mxu0
      %4966 = vmatprep.mubr.bf16.mxu0 0
      %4967 = vmatmul.mubr.bf16.gmra.mxu0 %v4852
      %v4968 = vpop.f32.mrf.mxu0
      %v4969 = vadd.f32 0.0, %v4968
      %v4970 = vpop.f32.mrf.mxu0
      %v4971 = vpop.f32.mrf.mxu0
      %v4972 = vadd.f32 0.0, %v4971
      %v4973 = vpop.f32.mrf.mxu0
      %4974 = vmatprep.mubr.bf16.mxu0 0
      %4975 = vmatmul.mubr.bf16.gmra.mxu0 %v4853
      %v4976 = vpop.f32.mrf.mxu0
      %v4977 = vadd.f32 0.0, %v4976
      %v4978 = vpop.f32.mrf.mxu0
      %v4979 = vpop.f32.mrf.mxu0
      %v4980 = vadd.f32 0.0, %v4979
      %v4981 = vpop.f32.mrf.mxu0
      %4982 = vdwg.mxu0
      %v4983 = vadd.f32 %v4781, %v4921
      %v4984 = vadd.f32 %v4782, %v4924
      %v4985 = vadd.f32 %v4783, %v4929
      %v4986 = vadd.f32 %v4784, %v4932
      %v4987 = vadd.f32 %v4785, %v4937
      %v4988 = vadd.f32 %v4786, %v4940
      %v4989 = vadd.f32 %v4787, %v4945
      %v4990 = vadd.f32 %v4788, %v4948
      %v4991 = vadd.f32 %v4789, %v4953
      %v4992 = vadd.f32 %v4790, %v4956
      %v4993 = vadd.f32 %v4791, %v4961
      %v4994 = vadd.f32 %v4792, %v4964
      %v4995 = vadd.f32 %v4793, %v4969
      %v4996 = vadd.f32 %v4794, %v4972
      %v4997 = vadd.f32 %v4795, %v4977
      %v4998 = vadd.f32 %v4796, %v4980
      %v4999 = vld [vmem:[%s9] sm:$0xf]
      %v5000 = vld [vmem:[%s9 + $0x4] sm:$0xf]
      %v5001 = vld [vmem:[%s9 + $0x8] sm:$0xf]
      %v5002 = vld [vmem:[%s9 + $0xc] sm:$0xf]
      %v5003 = vld [vmem:[%s9 + $0x10] sm:$0xf]
      %v5004 = vld [vmem:[%s9 + $0x14] sm:$0xf]
      %v5005 = vld [vmem:[%s9 + $0x18] sm:$0xf]
      %v5006 = vld [vmem:[%s9 + $0x1c] sm:$0xf]
      %v5007 = vpack.c.bf16 %v4984, %v4983
      %v5008 = vpack.c.bf16 %v4986, %v4985
      %v5009 = vpack.c.bf16 %v4988, %v4987
      %v5010 = vpack.c.bf16 %v4990, %v4989
      %v5011 = vpack.c.bf16 %v4992, %v4991
      %v5012 = vpack.c.bf16 %v4994, %v4993
      %v5013 = vpack.c.bf16 %v4996, %v4995
      %v5014 = vpack.c.bf16 %v4998, %v4997
      %v5015 = vld [vmem:[%s10] sm:$0xff]
      %v5016 = vld [vmem:[%s10 + $0x8] sm:$0xff]
      %v5017 = vld [vmem:[%s10 + $0x10] sm:$0xff]
      %v5018 = vld [vmem:[%s10 + $0x18] sm:$0xff]
      %v5019 = vld [vmem:[%s10 + $0x20] sm:$0xff]
      %v5020 = vld [vmem:[%s10 + $0x28] sm:$0xff]
      %v5021 = vld [vmem:[%s10 + $0x30] sm:$0xff]
      %v5022 = vld [vmem:[%s10 + $0x38] sm:$0xff]
      %v5031 = vunpack.c.l.b16 %v4999
      %v5032 = vunpack.c.l.b16 %v5000
      %v5033 = vunpack.c.l.b16 %v5001
      %v5034 = vunpack.c.l.b16 %v5002
      %v5035 = vunpack.c.l.b16 %v5003
      %v5036 = vunpack.c.l.b16 %v5004
      %v5037 = vunpack.c.l.b16 %v5005
      %v5038 = vunpack.c.l.b16 %v5006
      %v5039 = vpack.c.b16 %v5032, %v5031
      %v5040 = vpack.c.b16 %v5034, %v5033
      %v5041 = vpack.c.b16 %v5036, %v5035
      %v5042 = vpack.c.b16 %v5038, %v5037
      %5047 = vmatprep.subr.bf16.mxu0 0
      %5048 = vmatpush1.bf16.msra.mxu0 %v5014
      %5049 = vmatprep.subr.bf16.mxu0 0
      %5050 = vmatpush1.bf16.msra.mxu0 %v5013
      %5051 = vmatprep.subr.bf16.mxu0 0
      %5052 = vmatpush1.bf16.msra.mxu0 %v5012
      %5053 = vmatprep.subr.bf16.mxu0 0
      %5054 = vmatpush1.bf16.msra.mxu0 %v5011
      %5055 = vmatprep.subr.bf16.mxu0 0
      %5056 = vmatpush1.bf16.msra.mxu0 %v5010
      %5057 = vmatprep.subr.bf16.mxu0 0
      %5058 = vmatpush1.bf16.msra.mxu0 %v5009
      %5059 = vmatprep.subr.bf16.mxu0 0
      %5060 = vmatpush1.bf16.msra.mxu0 %v5008
      %5061 = vmatprep.subr.bf16.mxu0 0
      %5062 = vmatpush1.bf16.msra.mxu0 %v5007
      %5063 = vmatprep.subr.bf16.mxu0 0
      %5064 = vmatpush2.bf16.msra.mxu0 0
      %5065 = vmatprep.subr.bf16.mxu0 0
      %5066 = vmatpush2.bf16.msra.mxu0 0
      %5067 = vmatprep.subr.bf16.mxu0 0
      %5068 = vmatpush2.bf16.msra.mxu0 0
      %5069 = vmatprep.subr.bf16.mxu0 0
      %5070 = vmatpush2.bf16.msra.mxu0 0
      %5071 = vmatprep.subr.bf16.mxu0 0
      %5072 = vmatpush2.bf16.msra.mxu0 0
      %5073 = vmatprep.subr.bf16.mxu0 0
      %5074 = vmatpush2.bf16.msra.mxu0 0
      %5075 = vmatprep.subr.bf16.mxu0 0
      %5076 = vmatpush2.bf16.msra.mxu0 0
      %5077 = vmatprep.subr.bf16.mxu0 0
      %5078 = vmatpush2.bf16.msra.mxu0 0
      %5079 = vmatprep.mubr.bf16.mxu0 0
      %5080 = vmatmul.mubr.bf16.gmra.mxu0 %v5039
      %v5081 = vpop.f32.mrf.mxu0
      %v5082 = vadd.f32 %v5015, %v5081
      %v5083 = vpop.f32.mrf.mxu0
      %v5084 = vpop.f32.mrf.mxu0
      %v5085 = vadd.f32 %v5016, %v5084
      %v5086 = vpop.f32.mrf.mxu0
      %5087 = vmatprep.mubr.bf16.mxu0 0
      %5088 = vmatmul.mubr.bf16.gmra.mxu0 %v5040
      %v5089 = vpop.f32.mrf.mxu0
      %v5090 = vadd.f32 %v5017, %v5089
      %v5091 = vpop.f32.mrf.mxu0
      %v5092 = vpop.f32.mrf.mxu0
      %v5093 = vadd.f32 %v5018, %v5092
      %v5094 = vpop.f32.mrf.mxu0
      %5095 = vmatprep.mubr.bf16.mxu0 0
      %5096 = vmatmul.mubr.bf16.gmra.mxu0 %v5041
      %v5097 = vpop.f32.mrf.mxu0
      %v5098 = vadd.f32 %v5019, %v5097
      %v5099 = vpop.f32.mrf.mxu0
      %v5100 = vpop.f32.mrf.mxu0
      %v5101 = vadd.f32 %v5020, %v5100
      %v5102 = vpop.f32.mrf.mxu0
      %5103 = vmatprep.mubr.bf16.mxu0 0
      %5104 = vmatmul.mubr.bf16.gmra.mxu0 %v5042
      %v5105 = vpop.f32.mrf.mxu0
      %v5106 = vadd.f32 %v5021, %v5105
      %v5107 = vpop.f32.mrf.mxu0
      %v5108 = vpop.f32.mrf.mxu0
      %v5109 = vadd.f32 %v5022, %v5108
      %v5110 = vpop.f32.mrf.mxu0
      %5111 = vdwg.mxu0
      %vm5112 = vcmask 7168
      %v5113 = vsel %vm5112, %v5082, -inf
      %v5114 = vsel %vm5112, %v5085, -inf
      %v5115 = vsel %vm5112, %v5090, -inf
      %v5116 = vsel %vm5112, %v5093, -inf
      %v5117 = vsel %vm5112, %v5098, -inf
      %v5118 = vmax.f32 %v5113, %v5117
      %v5119 = vsel %vm5112, %v5101, -inf
      %v5120 = vmax.f32 %v5114, %v5119
      %v5121 = vsel %vm5112, %v5106, -inf
      %v5122 = vmax.f32 %v5115, %v5121
      %v5123 = vsel %vm5112, %v5109, -inf
      %v5124 = vmax.f32 %v5116, %v5123
      %v5125 = vmax.f32 %v5118, %v5120
      %v5126 = vmax.f32 %v5122, %v5124
      %v5127 = vmax.f32 %v5125, %v5126
      %v5128 = vrot.slane %v5127, 4
      %v5129 = vmax.f32 %v5127, %v5128
      %v5130 = vrot.slane %v5129, 2
      %v5131 = vmax.f32 %v5129, %v5130
      %v5132 = vrot.slane %v5131, 1
      %v5133 = vmax.f32 %v5131, %v5132
      %v5134 = vsub.f32 %v5082, %v5133
      %v5135 = vsub.f32 %v5085, %v5133
      %v5136 = vsub.f32 %v5090, %v5133
      %v5137 = vsub.f32 %v5093, %v5133
      %v5138 = vsub.f32 %v5098, %v5133
      %v5139 = vsub.f32 %v5101, %v5133
      %v5140 = vsub.f32 %v5106, %v5133
      %v5141 = vsub.f32 %v5109, %v5133
      %v5142 = vmul.f32 %v5134, 1.442695
      %v5143 = vpow.pop %v5142
      %v5144 = vmul.f32 %v5135, 1.442695
      %v5145 = vpow.pop %v5144
      %v5146 = vmul.f32 %v5136, 1.442695
      %v5147 = vpow.pop %v5146
      %v5148 = vmul.f32 %v5137, 1.442695
      %v5149 = vpow.pop %v5148
      %v5150 = vmul.f32 %v5138, 1.442695
      %v5151 = vpow.pop %v5150
      %v5152 = vmul.f32 %v5139, 1.442695
      %v5153 = vpow.pop %v5152
      %v5154 = vmul.f32 %v5140, 1.442695
      %v5155 = vpow.pop %v5154
      %v5156 = vmul.f32 %v5141, 1.442695
      %v5157 = vpow.pop %v5156
      %v5158 = vsel %vm5112, %v5143, 0.0
      %v5159 = vsel %vm5112, %v5145, 0.0
      %v5160 = vadd.f32 %v5158, %v5159
      %v5161 = vsel %vm5112, %v5147, 0.0
      %v5162 = vadd.f32 %v5160, %v5161
      %v5163 = vsel %vm5112, %v5149, 0.0
      %v5164 = vadd.f32 %v5162, %v5163
      %v5165 = vsel %vm5112, %v5151, 0.0
      %v5166 = vadd.f32 %v5164, %v5165
      %v5167 = vsel %vm5112, %v5153, 0.0
      %v5168 = vadd.f32 %v5166, %v5167
      %v5169 = vsel %vm5112, %v5155, 0.0
      %v5170 = vadd.f32 %v5168, %v5169
      %v5171 = vsel %vm5112, %v5157, 0.0
      %v5172 = vadd.f32 %v5170, %v5171
      %v5173 = vrot.slane %v5172, 4
      %v5174 = vadd.f32 %v5172, %v5173
      %v5175 = vrot.slane %v5174, 2
      %v5176 = vadd.f32 %v5174, %v5175
      %v5177 = vrot.slane %v5176, 1
      %v5178 = vadd.f32 %v5176, %v5177
      %v5179 = vrcp.pop %v5178
      %v5180 = vmul.f32 %v5143, %v5179
      %v5181 = vmul.f32 %v5145, %v5179
      %v5182 = vmul.f32 %v5147, %v5179
      %v5183 = vmul.f32 %v5149, %v5179
      %v5184 = vmul.f32 %v5151, %v5179
      %v5185 = vmul.f32 %v5153, %v5179
      %v5186 = vmul.f32 %v5155, %v5179
      %v5187 = vmul.f32 %v5157, %v5179
      %5188 = vst.msk [vmem:[%s386] sm:$0xff] %vm5112, %v5180
      %5189 = vst.msk [vmem:[%s386 + $0x8] sm:$0xff] %vm5112, %v5181
      %5190 = vst.msk [vmem:[%s386 + $0x10] sm:$0xff] %vm5112, %v5182
      %5191 = vst.msk [vmem:[%s386 + $0x18] sm:$0xff] %vm5112, %v5183
      %5192 = vst.msk [vmem:[%s386 + $0x20] sm:$0xff] %vm5112, %v5184
      %5193 = vst.msk [vmem:[%s386 + $0x28] sm:$0xff] %vm5112, %v5185
      %5194 = vst.msk [vmem:[%s386 + $0x30] sm:$0xff] %vm5112, %v5186
      %5195 = vst.msk [vmem:[%s386 + $0x38] sm:$0xff] %vm5112, %v5187
      %p5196 = scmp.lt.s32.totalorder %s22, 1
      %s5197 = scalar_select %p5196, %s22, 1
      %s5198 = smul.addr %s5197, 8
      %s5199 = smul.addr %s5198, 8
      %s5200 = scalar_lea.vmem %s11, %s5199
      // Predicated region
      $region65: #{cnn1d_forward.3} parent=63 // pred_check
        %p5201 = pneg %p276
      $region66: #{cnn1d_forward.3} parent=63 // pred_check_branch
        %5203 = sbr.rel (%p5201) target = $region68
      $region67: #{cnn1d_forward.3} parent=63 // pred_region
        _
      $region68: #{cnn1d_forward.3} parent=63 // pred_fallthru
        _
    $region64: #{cnn1d_forward.3} parent=5 // pred_fallthru
      _
    %p5204 = scmp.le.s32.totalorder 2, %s17
    // Predicated region
    $region69: #{cnn1d_forward.3} parent=5 // pred_check
      %p5205 = pneg %p5204
    $region70: #{cnn1d_forward.3} parent=5 // pred_check_branch
      %5207 = sbr.rel (%p5205) target = $region72
    $region71: #{cnn1d_forward.3} parent=5 // pred_region
      %s5208 = ssub.s32 %s17, 2
      // Predicated region
      $region73: #{cnn1d_forward.3} parent=71 // pred_check
        %p5209 = pneg %p282
      $region74: #{cnn1d_forward.3} parent=71 // pred_check_branch
        %5211 = sbr.rel (%p5209) target = $region76
      $region75: #{cnn1d_forward.3} parent=71 // pred_region
        %p5212 = scmp.lt.s32.totalorder %s23, 1
        %s5213 = scalar_select %p5212, %s23, 1
        %s5214 = smul.addr %s5213, 8
        %s5215 = smul.addr %s5214, 8
        %s5216 = scalar_lea.vmem %s11, %s5215
      $region76: #{cnn1d_forward.3} parent=71 // pred_fallthru
        _
    $region72: #{cnn1d_forward.3} parent=5 // pred_fallthru
      _
  $region6: #{cnn1d_forward.3} parent=0 // loop_footer
    %s21 = sadd.s32 1, %s17
  $region7: #{cnn1d_forward.3} parent=0 // loop_footer_branch
    %16 = sbr.rel target = $region3
  $region8: #{cnn1d_forward.3} parent=0 // loop_exit
    _

</llo_original>
